<compile_context>
chip_gen: v7x
topology: tpu7x:2x2x1
jax: 0.10.0
libtpu: 0.0.40
codegen_flags: <defaults>
</compile_context>

<pallas_src>
import jax
import jax.numpy as jnp
import numpy as np
from jax.experimental import pallas as pl
from jax.experimental.pallas import tpu as pltpu


_NEG_INF = float("-inf")


def _shift_rows(a, d):
    """out[i] = a[i + d], -inf where i + d is out of range (axis 0, untiled)."""
    if d == 0:
        return a
    H = a.shape[0]
    pad = jnp.full((abs(d),) + a.shape[1:], _NEG_INF, a.dtype)
    if d > 0:
        return jnp.concatenate([a[d:], pad], axis=0)
    return jnp.concatenate([pad, a[:H + d]], axis=0)


def _shift_cols(a, d):
    """out[:, j] = a[:, j + d], -inf out of range.

    Sublane roll on the XLU + iota boundary mask (no padded VMEM scratch).
    """
    if d == 0:
        return a
    W = a.shape[1]
    rolled = pltpu.roll(a, shift=(-d) % W, axis=1)
    j = jax.lax.broadcasted_iota(jnp.int32, a.shape, 1)
    valid = jnp.logical_and(j + d >= 0, j + d <= W - 1)
    return jnp.where(valid, rolled, _NEG_INF)


def _maxpool5(a):
    """5x5 max pool, stride 1, pad 2 (PyTorch -inf padding), separable."""
    m = a
    for d in (-2, -1, 1, 2):          # pool along H
        m = jnp.maximum(m, _shift_rows(a, d))
    out = m
    for d in (-2, -1, 1, 2):          # pool along W
        out = jnp.maximum(out, _shift_cols(m, d))
    return out


def sppf_kernel(x_ref, w1_ref, b1_ref, w2_ref, b2_ref, o_ref):
    # x_ref : (1, H, W, C1)  one NHWC image
    # w1_ref: (C1, C_)       1x1 conv1 weight (BN scale pre-folded)
    # b1_ref: (1, C_)        folded BN bias for conv1
    # w2_ref: (4, C_, C2)    1x1 conv2 weight split per concat branch [y,p0,p1,p2]
    # b2_ref: (1, C2)        folded BN bias for conv2
    # o_ref : (1, H, W, C2)
    _, H, W, C1 = x_ref.shape
    C_ = w1_ref.shape[1]
    C2 = w2_ref.shape[2]

    x = x_ref[0].reshape(H * W, C1)

    # ---- conv1: 1x1 conv == channel matmul (MXU) + bias + SiLU ----
    y = jnp.dot(x, w1_ref[...], preferred_element_type=jnp.float32)
    y = y + b1_ref[...]
    y = y * jax.nn.sigmoid(y)                       # SiLU (EUP)
    y = y.reshape(H, W, C_)

    # ---- SPPF: three stacked 5x5/s1/p2 max pools, all in registers ----
    p0 = _maxpool5(y)
    p1 = _maxpool5(p0)
    p2 = _maxpool5(p1)

    # ---- conv2 on cat([y, p0, p1, p2], C): 4 accumulated matmuls + bias + SiLU ----
    z = jnp.dot(y.reshape(H * W, C_), w2_ref[0], preferred_element_type=jnp.float32)
    z = z + jnp.dot(p0.reshape(H * W, C_), w2_ref[1], preferred_element_type=jnp.float32)
    z = z + jnp.dot(p1.reshape(H * W, C_), w2_ref[2], preferred_element_type=jnp.float32)
    z = z + jnp.dot(p2.reshape(H * W, C_), w2_ref[3], preferred_element_type=jnp.float32)
    z = z + b2_ref[...]
    z = z * jax.nn.sigmoid(z)                       # SiLU (EUP)
    o_ref[0] = z.reshape(H, W, C2).astype(o_ref.dtype)


def sppf_pallas(x_nhwc, w1, b1, w2_blocks, b2):
    """x_nhwc: (N,H,W,C1); w1: (C1,C_); b1: (1,C_); w2_blocks: (4,C_,C2); b2: (1,C2)."""
    N, H, W, C1 = x_nhwc.shape
    C_ = w1.shape[1]
    C2 = w2_blocks.shape[2]

    itemsize = jnp.dtype(x_nhwc.dtype).itemsize
    flops = 2 * N * H * W * (C1 * C_ + 4 * C_ * C2)
    transcendentals = N * H * W * (C_ + C2)          # sigmoid per SiLU output
    bytes_accessed = int(
        (x_nhwc.size + N * H * W * C2 + w1.size + w2_blocks.size
         + b1.size + b2.size) * itemsize)

    return pl.pallas_call(
        sppf_kernel,
        out_shape=jax.ShapeDtypeStruct((N, H, W, C2), x_nhwc.dtype),
        grid_spec=pltpu.PrefetchScalarGridSpec(
            num_scalar_prefetch=0,
            grid=(N,),
            in_specs=[
                pl.BlockSpec((1, H, W, C1), lambda n: (n, 0, 0, 0)),
                pl.BlockSpec((C1, C_), lambda n: (0, 0)),
                pl.BlockSpec((1, C_), lambda n: (0, 0)),
                pl.BlockSpec((4, C_, C2), lambda n: (0, 0, 0)),
                pl.BlockSpec((1, C2), lambda n: (0, 0)),
            ],
            out_specs=pl.BlockSpec((1, H, W, C2), lambda n: (n, 0, 0, 0)),
        ),
        compiler_params=pltpu.CompilerParams(
            dimension_semantics=("parallel",),
            vmem_limit_bytes=32 * 1024 * 1024),
        cost_estimate=pl.CostEstimate(
            flops=int(flops), transcendentals=int(transcendentals),
            bytes_accessed=bytes_accessed),
    )(x_nhwc, w1, b1, w2_blocks, b2)


def _fold_bn_into_conv(w_io, gamma, beta, mean, var, eps=1e-5):
    """Fold inference-mode BN into a 1x1 conv weight given in (Cin, Cout) form."""
    scale = gamma / jnp.sqrt(var + eps)
    return w_io * scale[None, :], (beta - mean * scale)[None, :]


def _ref_sppf(x_nhwc, w1, g1, be1, m1, v1, w2, g2, be2, m2, v2, eps=1e-5):
    """Pure-JAX SPPF reference (mirrors the PyTorch module in NHWC)."""
    def conv_bn_silu(x, w_io, g, b, m, v):
        y = jnp.einsum("nhwc,cd->nhwd", x, w_io)
        y = (y - m) / jnp.sqrt(v + eps) * g + b
        return y * jax.nn.sigmoid(y)

    def pool(x):
        return jax.lax.reduce_window(
            x, -jnp.inf, jax.lax.max,
            window_dimensions=(1, 5, 5, 1), window_strides=(1, 1, 1, 1),
            padding=((0, 0), (2, 2), (2, 2), (0, 0)))

    y = conv_bn_silu(x_nhwc, w1, g1, be1, m1, v1)
    p0 = pool(y)
    p1 = pool(p0)
    p2 = pool(p1)
    cat = jnp.concatenate([y, p0, p1, p2], axis=-1)
    return conv_bn_silu(cat, w2, g2, be2, m2, v2)


if __name__ == "__main__":
    # SPPF(c1=4, c2=4, k=5)  ->  c_ = c1 // 2 = 2, conv2 input channels = 4*c_ = 8
    N, C1, H, W = 2, 4, 16, 16
    C2 = 4
    C_ = C1 // 2

    key = jax.random.PRNGKey(0)
    kx, kw1, kw2 = jax.random.split(key, 3)

    # PyTorch input is NCHW; kernel works in NHWC (channels -> lanes).
    x_nchw = jax.random.normal(kx, (N, C1, H, W), jnp.float32)
    x_nhwc = jnp.transpose(x_nchw, (0, 2, 3, 1))

    # raw 1x1 conv weights in (Cin, Cout) form (PyTorch (Cout, Cin, 1, 1) collapsed)
    w1_io = jax.random.normal(kw1, (C1, C_), jnp.float32) * 0.3
    w2_io = jax.random.normal(kw2, (4 * C_, C2), jnp.float32) * 0.3

    # deterministic BatchNorm params (inference mode, running stats)
    g1 = 1.0 + 0.10 * jnp.arange(C_, dtype=jnp.float32)
    be1 = 0.01 * jnp.arange(C_, dtype=jnp.float32)
    m1 = 0.05 * jnp.arange(C_, dtype=jnp.float32)
    v1 = 1.0 + 0.02 * jnp.arange(C_, dtype=jnp.float32)
    g2 = 1.0 + 0.05 * jnp.arange(C2, dtype=jnp.float32)
    be2 = -0.02 * jnp.arange(C2, dtype=jnp.float32)
    m2 = 0.03 * jnp.arange(C2, dtype=jnp.float32)
    v2 = 1.0 + 0.01 * jnp.arange(C2, dtype=jnp.float32)

    # fold BN scale into the conv weights on the host; split conv2 per branch
    w1_f, b1 = _fold_bn_into_conv(w1_io, g1, be1, m1, v1)
    w2_f, b2 = _fold_bn_into_conv(w2_io, g2, be2, m2, v2)
    w2_blocks = w2_f.reshape(4, C_, C2)   # order matches cat([y, p0, p1, p2])

    out = sppf_pallas(x_nhwc, w1_f, b1, w2_blocks, b2)
    out = jax.block_until_ready(out)

    ref = _ref_sppf(x_nhwc, w1_io, g1, be1, m1, v1, w2_io, g2, be2, m2, v2)
    np.testing.assert_allclose(np.asarray(out), np.asarray(ref),
                               rtol=1e-4, atol=1e-4)
    print("KERNEL_OK")
</pallas_src>

<mosaic_0001>
module attributes {stable_mosaic.version = 11 : i64} {
  func.func @sppf_kernel(%arg0: i32, %arg1: memref<1x16x16x4xf32, #tpu.memory_space<vmem>>, %arg2: memref<4x2xf32, #tpu.memory_space<vmem>>, %arg3: memref<1x2xf32, #tpu.memory_space<vmem>>, %arg4: memref<4x2x4xf32, #tpu.memory_space<vmem>>, %arg5: memref<1x4xf32, #tpu.memory_space<vmem>>, %arg6: memref<1x16x16x4xf32, #tpu.memory_space<vmem>>) attributes {dimension_semantics = [#tpu.dimension_semantics<parallel>], iteration_bounds = array<i64: 2>, scalar_prefetch = 0 : i64, scratch_operands = 0 : i64, tpu.core_type = #tpu.core_type<tc>, window_params = [{transform_indices = @transform_0, window_bounds = array<i64: 1, 16, 16, 4>}, {pipeline_mode = #tpu.pipeline_mode<synchronous>, transform_indices = @transform_1, window_bounds = array<i64: 4, 2>}, {pipeline_mode = #tpu.pipeline_mode<synchronous>, transform_indices = @transform_2, window_bounds = array<i64: 1, 2>}, {pipeline_mode = #tpu.pipeline_mode<synchronous>, transform_indices = @transform_3, window_bounds = array<i64: 4, 2, 4>}, {pipeline_mode = #tpu.pipeline_mode<synchronous>, transform_indices = @transform_4, window_bounds = array<i64: 1, 4>}, {transform_indices = @transform_5, window_bounds = array<i64: 1, 16, 16, 4>}]} {
    %c0 = arith.constant 0 : index
    %c0_0 = arith.constant 0 : index
    %c0_1 = arith.constant 0 : index
    %c0_2 = arith.constant 0 : index
    %0 = vector.load %arg1[%c0, %c0_0, %c0_1, %c0_2] : memref<1x16x16x4xf32, #tpu.memory_space<vmem>>, vector<1x16x16x4xf32>
    %1 = vector.shape_cast %0 : vector<1x16x16x4xf32> to vector<16x16x4xf32>
    %2 = vector.shape_cast %1 : vector<16x16x4xf32> to vector<256x4xf32>
    %c0_3 = arith.constant 0 : index
    %c0_4 = arith.constant 0 : index
    %3 = vector.load %arg2[%c0_3, %c0_4] : memref<4x2xf32, #tpu.memory_space<vmem>>, vector<4x2xf32>
    %cst = arith.constant dense<0.000000e+00> : vector<256x2xf32>
    %4 = tpu.matmul %2, %3, %cst {dimension_numbers = #tpu.dot_dimension_numbers<[1], [0], [0], [1], [0, 0, 1, 1], [], []>} : vector<256x4xf32>, vector<4x2xf32>, vector<256x2xf32> -> vector<256x2xf32>
    %c0_5 = arith.constant 0 : index
    %c0_6 = arith.constant 0 : index
    %5 = vector.load %arg3[%c0_5, %c0_6] : memref<1x2xf32, #tpu.memory_space<vmem>>, vector<1x2xf32>
    %6 = vector.broadcast %5 : vector<1x2xf32> to vector<256x2xf32>
    %7 = arith.addf %4, %6 : vector<256x2xf32>
    %8 = arith.negf %7 : vector<256x2xf32>
    %9 = math.exp %8 : vector<256x2xf32>
    %cst_7 = arith.constant 1.000000e+00 : f32
    %10 = vector.broadcast %cst_7 : f32 to vector<256x2xf32>
    %11 = arith.addf %10, %9 : vector<256x2xf32>
    %12 = arith.divf %10, %11 : vector<256x2xf32>
    %13 = arith.mulf %7, %12 : vector<256x2xf32>
    %14 = vector.shape_cast %13 : vector<256x2xf32> to vector<16x16x2xf32>
    %cst_8 = arith.constant 0xFF800000 : f32
    %15 = vector.broadcast %cst_8 : f32 to vector<2x16x2xf32>
    %16 = vector.extract_strided_slice %14 {offsets = [0, 0, 0], sizes = [14, 16, 2], strides = [1, 1, 1]} : vector<16x16x2xf32> to vector<14x16x2xf32>
    %17 = tpu.concatenate %15, %16 in 0 : vector<2x16x2xf32>, vector<14x16x2xf32> -> vector<16x16x2xf32>
    %18 = arith.maximumf %14, %17 : vector<16x16x2xf32>
    %cst_9 = arith.constant 0xFF800000 : f32
    %19 = vector.broadcast %cst_9 : f32 to vector<1x16x2xf32>
    %20 = vector.extract_strided_slice %14 {offsets = [0, 0, 0], sizes = [15, 16, 2], strides = [1, 1, 1]} : vector<16x16x2xf32> to vector<15x16x2xf32>
    %21 = tpu.concatenate %19, %20 in 0 : vector<1x16x2xf32>, vector<15x16x2xf32> -> vector<16x16x2xf32>
    %22 = arith.maximumf %18, %21 : vector<16x16x2xf32>
    %cst_10 = arith.constant 0xFF800000 : f32
    %23 = vector.broadcast %cst_10 : f32 to vector<1x16x2xf32>
    %24 = vector.extract_strided_slice %14 {offsets = [1, 0, 0], sizes = [15, 16, 2], strides = [1, 1, 1]} : vector<16x16x2xf32> to vector<15x16x2xf32>
    %25 = tpu.concatenate %24, %23 in 0 : vector<15x16x2xf32>, vector<1x16x2xf32> -> vector<16x16x2xf32>
    %26 = arith.maximumf %22, %25 : vector<16x16x2xf32>
    %cst_11 = arith.constant 0xFF800000 : f32
    %27 = vector.broadcast %cst_11 : f32 to vector<2x16x2xf32>
    %28 = vector.extract_strided_slice %14 {offsets = [2, 0, 0], sizes = [14, 16, 2], strides = [1, 1, 1]} : vector<16x16x2xf32> to vector<14x16x2xf32>
    %29 = tpu.concatenate %28, %27 in 0 : vector<14x16x2xf32>, vector<2x16x2xf32> -> vector<16x16x2xf32>
    %30 = arith.maximumf %26, %29 : vector<16x16x2xf32>
    %c2_i32 = arith.constant 2 : i32
    %31 = tpu.dynamic_rotate %30 by %c2_i32 dim 1 : vector<16x16x2xf32>, i32 -> vector<16x16x2xf32>
    %32 = tpu.iota {dimensions = array<i32: 1>} : vector<16x16x2xi32>
    %c-2_i32 = arith.constant -2 : i32
    %33 = vector.broadcast %c-2_i32 : i32 to vector<16x16x2xi32>
    %34 = arith.addi %32, %33 : vector<16x16x2xi32>
    %c0_i32 = arith.constant 0 : i32
    %35 = vector.broadcast %c0_i32 : i32 to vector<16x16x2xi32>
    %36 = arith.cmpi sge, %34, %35 : vector<16x16x2xi32>
    %c-2_i32_12 = arith.constant -2 : i32
    %37 = vector.broadcast %c-2_i32_12 : i32 to vector<16x16x2xi32>
    %38 = arith.addi %32, %37 : vector<16x16x2xi32>
    %c15_i32 = arith.constant 15 : i32
    %39 = vector.broadcast %c15_i32 : i32 to vector<16x16x2xi32>
    %40 = arith.cmpi sle, %38, %39 : vector<16x16x2xi32>
    %41 = arith.andi %36, %40 : vector<16x16x2xi1>
    %cst_13 = arith.constant 0xFF800000 : f32
    %42 = vector.broadcast %cst_13 : f32 to vector<16x16x2xf32>
    %43 = arith.select %41, %31, %42 : vector<16x16x2xi1>, vector<16x16x2xf32>
    %44 = arith.maximumf %30, %43 : vector<16x16x2xf32>
    %c1_i32 = arith.constant 1 : i32
    %45 = tpu.dynamic_rotate %30 by %c1_i32 dim 1 : vector<16x16x2xf32>, i32 -> vector<16x16x2xf32>
    %46 = tpu.iota {dimensions = array<i32: 1>} : vector<16x16x2xi32>
    %c-1_i32 = arith.constant -1 : i32
    %47 = vector.broadcast %c-1_i32 : i32 to vector<16x16x2xi32>
    %48 = arith.addi %46, %47 : vector<16x16x2xi32>
    %c0_i32_14 = arith.constant 0 : i32
    %49 = vector.broadcast %c0_i32_14 : i32 to vector<16x16x2xi32>
    %50 = arith.cmpi sge, %48, %49 : vector<16x16x2xi32>
    %c-1_i32_15 = arith.constant -1 : i32
    %51 = vector.broadcast %c-1_i32_15 : i32 to vector<16x16x2xi32>
    %52 = arith.addi %46, %51 : vector<16x16x2xi32>
    %c15_i32_16 = arith.constant 15 : i32
    %53 = vector.broadcast %c15_i32_16 : i32 to vector<16x16x2xi32>
    %54 = arith.cmpi sle, %52, %53 : vector<16x16x2xi32>
    %55 = arith.andi %50, %54 : vector<16x16x2xi1>
    %cst_17 = arith.constant 0xFF800000 : f32
    %56 = vector.broadcast %cst_17 : f32 to vector<16x16x2xf32>
    %57 = arith.select %55, %45, %56 : vector<16x16x2xi1>, vector<16x16x2xf32>
    %58 = arith.maximumf %44, %57 : vector<16x16x2xf32>
    %c15_i32_18 = arith.constant 15 : i32
    %59 = tpu.dynamic_rotate %30 by %c15_i32_18 dim 1 : vector<16x16x2xf32>, i32 -> vector<16x16x2xf32>
    %60 = tpu.iota {dimensions = array<i32: 1>} : vector<16x16x2xi32>
    %c1_i32_19 = arith.constant 1 : i32
    %61 = vector.broadcast %c1_i32_19 : i32 to vector<16x16x2xi32>
    %62 = arith.addi %60, %61 : vector<16x16x2xi32>
    %c0_i32_20 = arith.constant 0 : i32
    %63 = vector.broadcast %c0_i32_20 : i32 to vector<16x16x2xi32>
    %64 = arith.cmpi sge, %62, %63 : vector<16x16x2xi32>
    %c1_i32_21 = arith.constant 1 : i32
    %65 = vector.broadcast %c1_i32_21 : i32 to vector<16x16x2xi32>
    %66 = arith.addi %60, %65 : vector<16x16x2xi32>
    %c15_i32_22 = arith.constant 15 : i32
    %67 = vector.broadcast %c15_i32_22 : i32 to vector<16x16x2xi32>
    %68 = arith.cmpi sle, %66, %67 : vector<16x16x2xi32>
    %69 = arith.andi %64, %68 : vector<16x16x2xi1>
    %cst_23 = arith.constant 0xFF800000 : f32
    %70 = vector.broadcast %cst_23 : f32 to vector<16x16x2xf32>
    %71 = arith.select %69, %59, %70 : vector<16x16x2xi1>, vector<16x16x2xf32>
    %72 = arith.maximumf %58, %71 : vector<16x16x2xf32>
    %c14_i32 = arith.constant 14 : i32
    %73 = tpu.dynamic_rotate %30 by %c14_i32 dim 1 : vector<16x16x2xf32>, i32 -> vector<16x16x2xf32>
    %74 = tpu.iota {dimensions = array<i32: 1>} : vector<16x16x2xi32>
    %c2_i32_24 = arith.constant 2 : i32
    %75 = vector.broadcast %c2_i32_24 : i32 to vector<16x16x2xi32>
    %76 = arith.addi %74, %75 : vector<16x16x2xi32>
    %c0_i32_25 = arith.constant 0 : i32
    %77 = vector.broadcast %c0_i32_25 : i32 to vector<16x16x2xi32>
    %78 = arith.cmpi sge, %76, %77 : vector<16x16x2xi32>
    %c2_i32_26 = arith.constant 2 : i32
    %79 = vector.broadcast %c2_i32_26 : i32 to vector<16x16x2xi32>
    %80 = arith.addi %74, %79 : vector<16x16x2xi32>
    %c15_i32_27 = arith.constant 15 : i32
    %81 = vector.broadcast %c15_i32_27 : i32 to vector<16x16x2xi32>
    %82 = arith.cmpi sle, %80, %81 : vector<16x16x2xi32>
    %83 = arith.andi %78, %82 : vector<16x16x2xi1>
    %cst_28 = arith.constant 0xFF800000 : f32
    %84 = vector.broadcast %cst_28 : f32 to vector<16x16x2xf32>
    %85 = arith.select %83, %73, %84 : vector<16x16x2xi1>, vector<16x16x2xf32>
    %86 = arith.maximumf %72, %85 : vector<16x16x2xf32>
    %cst_29 = arith.constant 0xFF800000 : f32
    %87 = vector.broadcast %cst_29 : f32 to vector<2x16x2xf32>
    %88 = vector.extract_strided_slice %86 {offsets = [0, 0, 0], sizes = [14, 16, 2], strides = [1, 1, 1]} : vector<16x16x2xf32> to vector<14x16x2xf32>
    %89 = tpu.concatenate %87, %88 in 0 : vector<2x16x2xf32>, vector<14x16x2xf32> -> vector<16x16x2xf32>
    %90 = arith.maximumf %86, %89 : vector<16x16x2xf32>
    %cst_30 = arith.constant 0xFF800000 : f32
    %91 = vector.broadcast %cst_30 : f32 to vector<1x16x2xf32>
    %92 = vector.extract_strided_slice %86 {offsets = [0, 0, 0], sizes = [15, 16, 2], strides = [1, 1, 1]} : vector<16x16x2xf32> to vector<15x16x2xf32>
    %93 = tpu.concatenate %91, %92 in 0 : vector<1x16x2xf32>, vector<15x16x2xf32> -> vector<16x16x2xf32>
    %94 = arith.maximumf %90, %93 : vector<16x16x2xf32>
    %cst_31 = arith.constant 0xFF800000 : f32
    %95 = vector.broadcast %cst_31 : f32 to vector<1x16x2xf32>
    %96 = vector.extract_strided_slice %86 {offsets = [1, 0, 0], sizes = [15, 16, 2], strides = [1, 1, 1]} : vector<16x16x2xf32> to vector<15x16x2xf32>
    %97 = tpu.concatenate %96, %95 in 0 : vector<15x16x2xf32>, vector<1x16x2xf32> -> vector<16x16x2xf32>
    %98 = arith.maximumf %94, %97 : vector<16x16x2xf32>
    %cst_32 = arith.constant 0xFF800000 : f32
    %99 = vector.broadcast %cst_32 : f32 to vector<2x16x2xf32>
    %100 = vector.extract_strided_slice %86 {offsets = [2, 0, 0], sizes = [14, 16, 2], strides = [1, 1, 1]} : vector<16x16x2xf32> to vector<14x16x2xf32>
    %101 = tpu.concatenate %100, %99 in 0 : vector<14x16x2xf32>, vector<2x16x2xf32> -> vector<16x16x2xf32>
    %102 = arith.maximumf %98, %101 : vector<16x16x2xf32>
    %c2_i32_33 = arith.constant 2 : i32
    %103 = tpu.dynamic_rotate %102 by %c2_i32_33 dim 1 : vector<16x16x2xf32>, i32 -> vector<16x16x2xf32>
    %104 = tpu.iota {dimensions = array<i32: 1>} : vector<16x16x2xi32>
    %c-2_i32_34 = arith.constant -2 : i32
    %105 = vector.broadcast %c-2_i32_34 : i32 to vector<16x16x2xi32>
    %106 = arith.addi %104, %105 : vector<16x16x2xi32>
    %c0_i32_35 = arith.constant 0 : i32
    %107 = vector.broadcast %c0_i32_35 : i32 to vector<16x16x2xi32>
    %108 = arith.cmpi sge, %106, %107 : vector<16x16x2xi32>
    %c-2_i32_36 = arith.constant -2 : i32
    %109 = vector.broadcast %c-2_i32_36 : i32 to vector<16x16x2xi32>
    %110 = arith.addi %104, %109 : vector<16x16x2xi32>
    %c15_i32_37 = arith.constant 15 : i32
    %111 = vector.broadcast %c15_i32_37 : i32 to vector<16x16x2xi32>
    %112 = arith.cmpi sle, %110, %111 : vector<16x16x2xi32>
    %113 = arith.andi %108, %112 : vector<16x16x2xi1>
    %cst_38 = arith.constant 0xFF800000 : f32
    %114 = vector.broadcast %cst_38 : f32 to vector<16x16x2xf32>
    %115 = arith.select %113, %103, %114 : vector<16x16x2xi1>, vector<16x16x2xf32>
    %116 = arith.maximumf %102, %115 : vector<16x16x2xf32>
    %c1_i32_39 = arith.constant 1 : i32
    %117 = tpu.dynamic_rotate %102 by %c1_i32_39 dim 1 : vector<16x16x2xf32>, i32 -> vector<16x16x2xf32>
    %118 = tpu.iota {dimensions = array<i32: 1>} : vector<16x16x2xi32>
    %c-1_i32_40 = arith.constant -1 : i32
    %119 = vector.broadcast %c-1_i32_40 : i32 to vector<16x16x2xi32>
    %120 = arith.addi %118, %119 : vector<16x16x2xi32>
    %c0_i32_41 = arith.constant 0 : i32
    %121 = vector.broadcast %c0_i32_41 : i32 to vector<16x16x2xi32>
    %122 = arith.cmpi sge, %120, %121 : vector<16x16x2xi32>
    %c-1_i32_42 = arith.constant -1 : i32
    %123 = vector.broadcast %c-1_i32_42 : i32 to vector<16x16x2xi32>
    %124 = arith.addi %118, %123 : vector<16x16x2xi32>
    %c15_i32_43 = arith.constant 15 : i32
    %125 = vector.broadcast %c15_i32_43 : i32 to vector<16x16x2xi32>
    %126 = arith.cmpi sle, %124, %125 : vector<16x16x2xi32>
    %127 = arith.andi %122, %126 : vector<16x16x2xi1>
    %cst_44 = arith.constant 0xFF800000 : f32
    %128 = vector.broadcast %cst_44 : f32 to vector<16x16x2xf32>
    %129 = arith.select %127, %117, %128 : vector<16x16x2xi1>, vector<16x16x2xf32>
    %130 = arith.maximumf %116, %129 : vector<16x16x2xf32>
    %c15_i32_45 = arith.constant 15 : i32
    %131 = tpu.dynamic_rotate %102 by %c15_i32_45 dim 1 : vector<16x16x2xf32>, i32 -> vector<16x16x2xf32>
    %132 = tpu.iota {dimensions = array<i32: 1>} : vector<16x16x2xi32>
    %c1_i32_46 = arith.constant 1 : i32
    %133 = vector.broadcast %c1_i32_46 : i32 to vector<16x16x2xi32>
    %134 = arith.addi %132, %133 : vector<16x16x2xi32>
    %c0_i32_47 = arith.constant 0 : i32
    %135 = vector.broadcast %c0_i32_47 : i32 to vector<16x16x2xi32>
    %136 = arith.cmpi sge, %134, %135 : vector<16x16x2xi32>
    %c1_i32_48 = arith.constant 1 : i32
    %137 = vector.broadcast %c1_i32_48 : i32 to vector<16x16x2xi32>
    %138 = arith.addi %132, %137 : vector<16x16x2xi32>
    %c15_i32_49 = arith.constant 15 : i32
    %139 = vector.broadcast %c15_i32_49 : i32 to vector<16x16x2xi32>
    %140 = arith.cmpi sle, %138, %139 : vector<16x16x2xi32>
    %141 = arith.andi %136, %140 : vector<16x16x2xi1>
    %cst_50 = arith.constant 0xFF800000 : f32
    %142 = vector.broadcast %cst_50 : f32 to vector<16x16x2xf32>
    %143 = arith.select %141, %131, %142 : vector<16x16x2xi1>, vector<16x16x2xf32>
    %144 = arith.maximumf %130, %143 : vector<16x16x2xf32>
    %c14_i32_51 = arith.constant 14 : i32
    %145 = tpu.dynamic_rotate %102 by %c14_i32_51 dim 1 : vector<16x16x2xf32>, i32 -> vector<16x16x2xf32>
    %146 = tpu.iota {dimensions = array<i32: 1>} : vector<16x16x2xi32>
    %c2_i32_52 = arith.constant 2 : i32
    %147 = vector.broadcast %c2_i32_52 : i32 to vector<16x16x2xi32>
    %148 = arith.addi %146, %147 : vector<16x16x2xi32>
    %c0_i32_53 = arith.constant 0 : i32
    %149 = vector.broadcast %c0_i32_53 : i32 to vector<16x16x2xi32>
    %150 = arith.cmpi sge, %148, %149 : vector<16x16x2xi32>
    %c2_i32_54 = arith.constant 2 : i32
    %151 = vector.broadcast %c2_i32_54 : i32 to vector<16x16x2xi32>
    %152 = arith.addi %146, %151 : vector<16x16x2xi32>
    %c15_i32_55 = arith.constant 15 : i32
    %153 = vector.broadcast %c15_i32_55 : i32 to vector<16x16x2xi32>
    %154 = arith.cmpi sle, %152, %153 : vector<16x16x2xi32>
    %155 = arith.andi %150, %154 : vector<16x16x2xi1>
    %cst_56 = arith.constant 0xFF800000 : f32
    %156 = vector.broadcast %cst_56 : f32 to vector<16x16x2xf32>
    %157 = arith.select %155, %145, %156 : vector<16x16x2xi1>, vector<16x16x2xf32>
    %158 = arith.maximumf %144, %157 : vector<16x16x2xf32>
    %cst_57 = arith.constant 0xFF800000 : f32
    %159 = vector.broadcast %cst_57 : f32 to vector<2x16x2xf32>
    %160 = vector.extract_strided_slice %158 {offsets = [0, 0, 0], sizes = [14, 16, 2], strides = [1, 1, 1]} : vector<16x16x2xf32> to vector<14x16x2xf32>
    %161 = tpu.concatenate %159, %160 in 0 : vector<2x16x2xf32>, vector<14x16x2xf32> -> vector<16x16x2xf32>
    %162 = arith.maximumf %158, %161 : vector<16x16x2xf32>
    %cst_58 = arith.constant 0xFF800000 : f32
    %163 = vector.broadcast %cst_58 : f32 to vector<1x16x2xf32>
    %164 = vector.extract_strided_slice %158 {offsets = [0, 0, 0], sizes = [15, 16, 2], strides = [1, 1, 1]} : vector<16x16x2xf32> to vector<15x16x2xf32>
    %165 = tpu.concatenate %163, %164 in 0 : vector<1x16x2xf32>, vector<15x16x2xf32> -> vector<16x16x2xf32>
    %166 = arith.maximumf %162, %165 : vector<16x16x2xf32>
    %cst_59 = arith.constant 0xFF800000 : f32
    %167 = vector.broadcast %cst_59 : f32 to vector<1x16x2xf32>
    %168 = vector.extract_strided_slice %158 {offsets = [1, 0, 0], sizes = [15, 16, 2], strides = [1, 1, 1]} : vector<16x16x2xf32> to vector<15x16x2xf32>
    %169 = tpu.concatenate %168, %167 in 0 : vector<15x16x2xf32>, vector<1x16x2xf32> -> vector<16x16x2xf32>
    %170 = arith.maximumf %166, %169 : vector<16x16x2xf32>
    %cst_60 = arith.constant 0xFF800000 : f32
    %171 = vector.broadcast %cst_60 : f32 to vector<2x16x2xf32>
    %172 = vector.extract_strided_slice %158 {offsets = [2, 0, 0], sizes = [14, 16, 2], strides = [1, 1, 1]} : vector<16x16x2xf32> to vector<14x16x2xf32>
    %173 = tpu.concatenate %172, %171 in 0 : vector<14x16x2xf32>, vector<2x16x2xf32> -> vector<16x16x2xf32>
    %174 = arith.maximumf %170, %173 : vector<16x16x2xf32>
    %c2_i32_61 = arith.constant 2 : i32
    %175 = tpu.dynamic_rotate %174 by %c2_i32_61 dim 1 : vector<16x16x2xf32>, i32 -> vector<16x16x2xf32>
    %176 = tpu.iota {dimensions = array<i32: 1>} : vector<16x16x2xi32>
    %c-2_i32_62 = arith.constant -2 : i32
    %177 = vector.broadcast %c-2_i32_62 : i32 to vector<16x16x2xi32>
    %178 = arith.addi %176, %177 : vector<16x16x2xi32>
    %c0_i32_63 = arith.constant 0 : i32
    %179 = vector.broadcast %c0_i32_63 : i32 to vector<16x16x2xi32>
    %180 = arith.cmpi sge, %178, %179 : vector<16x16x2xi32>
    %c-2_i32_64 = arith.constant -2 : i32
    %181 = vector.broadcast %c-2_i32_64 : i32 to vector<16x16x2xi32>
    %182 = arith.addi %176, %181 : vector<16x16x2xi32>
    %c15_i32_65 = arith.constant 15 : i32
    %183 = vector.broadcast %c15_i32_65 : i32 to vector<16x16x2xi32>
    %184 = arith.cmpi sle, %182, %183 : vector<16x16x2xi32>
    %185 = arith.andi %180, %184 : vector<16x16x2xi1>
    %cst_66 = arith.constant 0xFF800000 : f32
    %186 = vector.broadcast %cst_66 : f32 to vector<16x16x2xf32>
    %187 = arith.select %185, %175, %186 : vector<16x16x2xi1>, vector<16x16x2xf32>
    %188 = arith.maximumf %174, %187 : vector<16x16x2xf32>
    %c1_i32_67 = arith.constant 1 : i32
    %189 = tpu.dynamic_rotate %174 by %c1_i32_67 dim 1 : vector<16x16x2xf32>, i32 -> vector<16x16x2xf32>
    %190 = tpu.iota {dimensions = array<i32: 1>} : vector<16x16x2xi32>
    %c-1_i32_68 = arith.constant -1 : i32
    %191 = vector.broadcast %c-1_i32_68 : i32 to vector<16x16x2xi32>
    %192 = arith.addi %190, %191 : vector<16x16x2xi32>
    %c0_i32_69 = arith.constant 0 : i32
    %193 = vector.broadcast %c0_i32_69 : i32 to vector<16x16x2xi32>
    %194 = arith.cmpi sge, %192, %193 : vector<16x16x2xi32>
    %c-1_i32_70 = arith.constant -1 : i32
    %195 = vector.broadcast %c-1_i32_70 : i32 to vector<16x16x2xi32>
    %196 = arith.addi %190, %195 : vector<16x16x2xi32>
    %c15_i32_71 = arith.constant 15 : i32
    %197 = vector.broadcast %c15_i32_71 : i32 to vector<16x16x2xi32>
    %198 = arith.cmpi sle, %196, %197 : vector<16x16x2xi32>
    %199 = arith.andi %194, %198 : vector<16x16x2xi1>
    %cst_72 = arith.constant 0xFF800000 : f32
    %200 = vector.broadcast %cst_72 : f32 to vector<16x16x2xf32>
    %201 = arith.select %199, %189, %200 : vector<16x16x2xi1>, vector<16x16x2xf32>
    %202 = arith.maximumf %188, %201 : vector<16x16x2xf32>
    %c15_i32_73 = arith.constant 15 : i32
    %203 = tpu.dynamic_rotate %174 by %c15_i32_73 dim 1 : vector<16x16x2xf32>, i32 -> vector<16x16x2xf32>
    %204 = tpu.iota {dimensions = array<i32: 1>} : vector<16x16x2xi32>
    %c1_i32_74 = arith.constant 1 : i32
    %205 = vector.broadcast %c1_i32_74 : i32 to vector<16x16x2xi32>
    %206 = arith.addi %204, %205 : vector<16x16x2xi32>
    %c0_i32_75 = arith.constant 0 : i32
    %207 = vector.broadcast %c0_i32_75 : i32 to vector<16x16x2xi32>
    %208 = arith.cmpi sge, %206, %207 : vector<16x16x2xi32>
    %c1_i32_76 = arith.constant 1 : i32
    %209 = vector.broadcast %c1_i32_76 : i32 to vector<16x16x2xi32>
    %210 = arith.addi %204, %209 : vector<16x16x2xi32>
    %c15_i32_77 = arith.constant 15 : i32
    %211 = vector.broadcast %c15_i32_77 : i32 to vector<16x16x2xi32>
    %212 = arith.cmpi sle, %210, %211 : vector<16x16x2xi32>
    %213 = arith.andi %208, %212 : vector<16x16x2xi1>
    %cst_78 = arith.constant 0xFF800000 : f32
    %214 = vector.broadcast %cst_78 : f32 to vector<16x16x2xf32>
    %215 = arith.select %213, %203, %214 : vector<16x16x2xi1>, vector<16x16x2xf32>
    %216 = arith.maximumf %202, %215 : vector<16x16x2xf32>
    %c14_i32_79 = arith.constant 14 : i32
    %217 = tpu.dynamic_rotate %174 by %c14_i32_79 dim 1 : vector<16x16x2xf32>, i32 -> vector<16x16x2xf32>
    %218 = tpu.iota {dimensions = array<i32: 1>} : vector<16x16x2xi32>
    %c2_i32_80 = arith.constant 2 : i32
    %219 = vector.broadcast %c2_i32_80 : i32 to vector<16x16x2xi32>
    %220 = arith.addi %218, %219 : vector<16x16x2xi32>
    %c0_i32_81 = arith.constant 0 : i32
    %221 = vector.broadcast %c0_i32_81 : i32 to vector<16x16x2xi32>
    %222 = arith.cmpi sge, %220, %221 : vector<16x16x2xi32>
    %c2_i32_82 = arith.constant 2 : i32
    %223 = vector.broadcast %c2_i32_82 : i32 to vector<16x16x2xi32>
    %224 = arith.addi %218, %223 : vector<16x16x2xi32>
    %c15_i32_83 = arith.constant 15 : i32
    %225 = vector.broadcast %c15_i32_83 : i32 to vector<16x16x2xi32>
    %226 = arith.cmpi sle, %224, %225 : vector<16x16x2xi32>
    %227 = arith.andi %222, %226 : vector<16x16x2xi1>
    %cst_84 = arith.constant 0xFF800000 : f32
    %228 = vector.broadcast %cst_84 : f32 to vector<16x16x2xf32>
    %229 = arith.select %227, %217, %228 : vector<16x16x2xi1>, vector<16x16x2xf32>
    %230 = arith.maximumf %216, %229 : vector<16x16x2xf32>
    %231 = vector.shape_cast %14 : vector<16x16x2xf32> to vector<256x2xf32>
    %c0_85 = arith.constant 0 : index
    %c0_86 = arith.constant 0 : index
    %c0_87 = arith.constant 0 : index
    %232 = vector.load %arg4[%c0_85, %c0_86, %c0_87] : memref<4x2x4xf32, #tpu.memory_space<vmem>>, vector<1x2x4xf32>
    %233 = vector.shape_cast %232 : vector<1x2x4xf32> to vector<2x4xf32>
    %cst_88 = arith.constant dense<0.000000e+00> : vector<256x4xf32>
    %234 = tpu.matmul %231, %233, %cst_88 {dimension_numbers = #tpu.dot_dimension_numbers<[1], [0], [0], [1], [0, 0, 1, 1], [], []>} : vector<256x2xf32>, vector<2x4xf32>, vector<256x4xf32> -> vector<256x4xf32>
    %235 = vector.shape_cast %86 : vector<16x16x2xf32> to vector<256x2xf32>
    %c1 = arith.constant 1 : index
    %c0_89 = arith.constant 0 : index
    %c0_90 = arith.constant 0 : index
    %236 = vector.load %arg4[%c1, %c0_89, %c0_90] : memref<4x2x4xf32, #tpu.memory_space<vmem>>, vector<1x2x4xf32>
    %237 = vector.shape_cast %236 : vector<1x2x4xf32> to vector<2x4xf32>
    %cst_91 = arith.constant dense<0.000000e+00> : vector<256x4xf32>
    %238 = tpu.matmul %235, %237, %cst_91 {dimension_numbers = #tpu.dot_dimension_numbers<[1], [0], [0], [1], [0, 0, 1, 1], [], []>} : vector<256x2xf32>, vector<2x4xf32>, vector<256x4xf32> -> vector<256x4xf32>
    %239 = arith.addf %234, %238 : vector<256x4xf32>
    %240 = vector.shape_cast %158 : vector<16x16x2xf32> to vector<256x2xf32>
    %c2 = arith.constant 2 : index
    %c0_92 = arith.constant 0 : index
    %c0_93 = arith.constant 0 : index
    %241 = vector.load %arg4[%c2, %c0_92, %c0_93] : memref<4x2x4xf32, #tpu.memory_space<vmem>>, vector<1x2x4xf32>
    %242 = vector.shape_cast %241 : vector<1x2x4xf32> to vector<2x4xf32>
    %cst_94 = arith.constant dense<0.000000e+00> : vector<256x4xf32>
    %243 = tpu.matmul %240, %242, %cst_94 {dimension_numbers = #tpu.dot_dimension_numbers<[1], [0], [0], [1], [0, 0, 1, 1], [], []>} : vector<256x2xf32>, vector<2x4xf32>, vector<256x4xf32> -> vector<256x4xf32>
    %244 = arith.addf %239, %243 : vector<256x4xf32>
    %245 = vector.shape_cast %230 : vector<16x16x2xf32> to vector<256x2xf32>
    %c3 = arith.constant 3 : index
    %c0_95 = arith.constant 0 : index
    %c0_96 = arith.constant 0 : index
    %246 = vector.load %arg4[%c3, %c0_95, %c0_96] : memref<4x2x4xf32, #tpu.memory_space<vmem>>, vector<1x2x4xf32>
    %247 = vector.shape_cast %246 : vector<1x2x4xf32> to vector<2x4xf32>
    %cst_97 = arith.constant dense<0.000000e+00> : vector<256x4xf32>
    %248 = tpu.matmul %245, %247, %cst_97 {dimension_numbers = #tpu.dot_dimension_numbers<[1], [0], [0], [1], [0, 0, 1, 1], [], []>} : vector<256x2xf32>, vector<2x4xf32>, vector<256x4xf32> -> vector<256x4xf32>
    %249 = arith.addf %244, %248 : vector<256x4xf32>
    %c0_98 = arith.constant 0 : index
    %c0_99 = arith.constant 0 : index
    %250 = vector.load %arg5[%c0_98, %c0_99] : memref<1x4xf32, #tpu.memory_space<vmem>>, vector<1x4xf32>
    %251 = vector.broadcast %250 : vector<1x4xf32> to vector<256x4xf32>
    %252 = arith.addf %249, %251 : vector<256x4xf32>
    %253 = arith.negf %252 : vector<256x4xf32>
    %254 = math.exp %253 : vector<256x4xf32>
    %cst_100 = arith.constant 1.000000e+00 : f32
    %255 = vector.broadcast %cst_100 : f32 to vector<256x4xf32>
    %256 = arith.addf %255, %254 : vector<256x4xf32>
    %257 = arith.divf %255, %256 : vector<256x4xf32>
    %258 = arith.mulf %252, %257 : vector<256x4xf32>
    %259 = vector.shape_cast %258 : vector<256x4xf32> to vector<16x16x4xf32>
    %c0_101 = arith.constant 0 : index
    %c0_102 = arith.constant 0 : index
    %c0_103 = arith.constant 0 : index
    %c0_104 = arith.constant 0 : index
    %260 = vector.load %arg6[%c0_101, %c0_102, %c0_103, %c0_104] : memref<1x16x16x4xf32, #tpu.memory_space<vmem>>, vector<1x16x16x4xf32>
    %261 = vector.shape_cast %260 : vector<1x16x16x4xf32> to vector<16x16x4xf32>
    %262 = vector.shape_cast %259 : vector<16x16x4xf32> to vector<1x16x16x4xf32>
    tpu.vector_store %arg6[%c0_101, %c0_102, %c0_103, %c0_104], %262 {strides = array<i32>} : memref<1x16x16x4xf32, #tpu.memory_space<vmem>>, vector<1x16x16x4xf32>,
    return
  }
  func.func @transform_0(%arg0: i32) -> (i32, i32, i32, i32) {
    %c0_i32 = arith.constant 0 : i32
    %c0_i32_0 = arith.constant 0 : i32
    %c0_i32_1 = arith.constant 0 : i32
    %c0_i32_2 = arith.constant 0 : i32
    return %arg0, %c0_i32, %c0_i32_0, %c0_i32_1 : i32, i32, i32, i32
  }
  func.func @transform_1(%arg0: i32) -> (i32, i32) {
    %c0_i32 = arith.constant 0 : i32
    %c0_i32_0 = arith.constant 0 : i32
    %c0_i32_1 = arith.constant 0 : i32
    return %c0_i32, %c0_i32_0 : i32, i32
  }
  func.func @transform_2(%arg0: i32) -> (i32, i32) {
    %c0_i32 = arith.constant 0 : i32
    %c0_i32_0 = arith.constant 0 : i32
    %c0_i32_1 = arith.constant 0 : i32
    return %c0_i32, %c0_i32_0 : i32, i32
  }
  func.func @transform_3(%arg0: i32) -> (i32, i32, i32) {
    %c0_i32 = arith.constant 0 : i32
    %c0_i32_0 = arith.constant 0 : i32
    %c0_i32_1 = arith.constant 0 : i32
    %c0_i32_2 = arith.constant 0 : i32
    return %c0_i32, %c0_i32_0, %c0_i32_1 : i32, i32, i32
  }
  func.func @transform_4(%arg0: i32) -> (i32, i32) {
    %c0_i32 = arith.constant 0 : i32
    %c0_i32_0 = arith.constant 0 : i32
    %c0_i32_1 = arith.constant 0 : i32
    return %c0_i32, %c0_i32_0 : i32, i32
  }
  func.func @transform_5(%arg0: i32) -> (i32, i32, i32, i32) {
    %c0_i32 = arith.constant 0 : i32
    %c0_i32_0 = arith.constant 0 : i32
    %c0_i32_1 = arith.constant 0 : i32
    %c0_i32_2 = arith.constant 0 : i32
    return %arg0, %c0_i32, %c0_i32_0, %c0_i32_1 : i32, i32, i32, i32
  }
}

</mosaic_0001>

<llo_original>
// kernel: tpu_custom_call.1
$region0: #{tpu_custom_call.1}
  #allocation0 [shape = 'u32[]', space=smem, size = 0x4, offset = 0x4, fixed_abs, tag = 'smem constant byte address 0x4 - core index']
  #allocation1 [shape = 'u32[144,128]{1,0:T(1,128)}', space=vmem, size = 0x12000, scoped, tag = 'internal scratch']
  %s0 = inlined_call_operand.vmem [shape: f32[2,16,16,4], index: 0, kind: input, shape index: {}]
  %s1 = inlined_call_operand.vmem [shape: f32[4,2], index: 1, kind: input, shape index: {}]
  %s2 = inlined_call_operand.vmem [shape: f32[1,2], index: 2, kind: input, shape index: {}]
  %s3 = inlined_call_operand.vmem [shape: f32[4,2,4], index: 3, kind: input, shape index: {}]
  %s4 = inlined_call_operand.vmem [shape: f32[1,4], index: 4, kind: input, shape index: {}]
  %s5 = inlined_call_operand.vmem [shape: f32[2,16,16,4], index: 5, kind: output, shape index: {}]
  %s6 = sld [smem:[#allocation0]]
  $region53: #{tpu_custom_call.1} parent=0
    _
  %s8 = ssub.s32 1, %s6
  %s9 = scalar_select 0, %s8, %s6
  loop: start=0, step=1, limit=4
  $region2: #{tpu_custom_call.1} parent=0 // loop_pre_header
    _
  $region3: #{tpu_custom_call.1} parent=0 // loop_header
    %s11 = sphi 0, %s15
    %p12 = scmp.ge.s32.totalorder %s11, 4
    %s21 = sphi 0, %s23
    %s24 = sphi 0, %s21
    %s25 = sphi 0, %s24
    %s41 = sphi 0, %s25
    %s45 = sphi 0, %s45
    %s47 = sphi 0, %s45
    %s48 = sphi 0, %s47
    %s62 = sphi 0, %s48
    %s66 = sphi 0, %s66
    %s68 = sphi 0, %s66
    %s69 = sphi 0, %s68
    %s83 = sphi 0, %s69
    %s87 = sphi 0, %s87
    %s89 = sphi 0, %s87
    %s90 = sphi 0, %s89
    %s104 = sphi 0, %s90
    %s108 = sphi 0, %s108
    %s110 = sphi 0, %s108
    %s111 = sphi 0, %s110
    %s125 = sphi 0, %s111
    %s131 = sphi 0, %s133
    %s134 = sphi 0, %s131
    %s135 = sphi 0, %s134
    %s151 = sphi 0, %s135
  $region4: #{tpu_custom_call.1} parent=0 // loop_header_branch
    %14 = sbr.rel (%p12) target = $region8
  $region5: #{tpu_custom_call.1} parent=0 // loop_body
    %s16 = ssub.s32 %s11, 1
    %s17 = ssub.s32 %s11, 2
    %s18 = sadd.s32 %s11, 1
    %s19 = ssub.s32 %s11, %s18
    %p20 = scmp.eq.s32.totalorder %s19, 0
    %s22 = sadd.s32 %s21, 1
    %s23 = scalar_select %p20, %s21, %s22
    %p26 = pneg %p20
    %p27 = scmp.eq.s32.totalorder %s11, 1
    %p28 = por %p26, %p27
    %p29 = scmp.ne.s32.totalorder %s21, %s24
    %p30 = scmp.eq.s32.totalorder %s11, 0
    %p31 = por %p29, %p30
    %p32 = scmp.ne.s32.totalorder %s21, %s24
    %p33 = scmp.eq.s32.totalorder %s16, 1
    %p34 = por %p32, %p33
    %p35 = scmp.ne.s32.totalorder %s24, %s25
    %p36 = scmp.eq.s32.totalorder %s16, 0
    %p37 = por %p35, %p36
    %p38 = scmp.ne.s32.totalorder %s24, %s25
    %p39 = scmp.eq.s32.totalorder %s17, 1
    %p40 = por %p38, %p39
    %p42 = scmp.ne.s32.totalorder %s25, %s41
    %p43 = scmp.eq.s32.totalorder %s17, 0
    %p44 = por %p42, %p43
    %s46 = sadd.s32 %s45, 1
    %p49 = scmp.eq.s32.totalorder %s11, 1
    %p50 = scmp.ne.s32.totalorder %s45, %s47
    %p51 = scmp.eq.s32.totalorder %s11, 0
    %p52 = por %p50, %p51
    %p53 = scmp.ne.s32.totalorder %s45, %s47
    %p54 = scmp.eq.s32.totalorder %s16, 1
    %p55 = por %p53, %p54
    %p56 = scmp.ne.s32.totalorder %s47, %s48
    %p57 = scmp.eq.s32.totalorder %s16, 0
    %p58 = por %p56, %p57
    %p59 = scmp.ne.s32.totalorder %s47, %s48
    %p60 = scmp.eq.s32.totalorder %s17, 1
    %p61 = por %p59, %p60
    %p63 = scmp.ne.s32.totalorder %s48, %s62
    %p64 = scmp.eq.s32.totalorder %s17, 0
    %p65 = por %p63, %p64
    %s67 = sadd.s32 %s66, 1
    %p70 = scmp.eq.s32.totalorder %s11, 1
    %p71 = scmp.ne.s32.totalorder %s66, %s68
    %p72 = scmp.eq.s32.totalorder %s11, 0
    %p73 = por %p71, %p72
    %p74 = scmp.ne.s32.totalorder %s66, %s68
    %p75 = scmp.eq.s32.totalorder %s16, 1
    %p76 = por %p74, %p75
    %p77 = scmp.ne.s32.totalorder %s68, %s69
    %p78 = scmp.eq.s32.totalorder %s16, 0
    %p79 = por %p77, %p78
    %p80 = scmp.ne.s32.totalorder %s68, %s69
    %p81 = scmp.eq.s32.totalorder %s17, 1
    %p82 = por %p80, %p81
    %p84 = scmp.ne.s32.totalorder %s69, %s83
    %p85 = scmp.eq.s32.totalorder %s17, 0
    %p86 = por %p84, %p85
    %s88 = sadd.s32 %s87, 1
    %p91 = scmp.eq.s32.totalorder %s11, 1
    %p92 = scmp.ne.s32.totalorder %s87, %s89
    %p93 = scmp.eq.s32.totalorder %s11, 0
    %p94 = por %p92, %p93
    %p95 = scmp.ne.s32.totalorder %s87, %s89
    %p96 = scmp.eq.s32.totalorder %s16, 1
    %p97 = por %p95, %p96
    %p98 = scmp.ne.s32.totalorder %s89, %s90
    %p99 = scmp.eq.s32.totalorder %s16, 0
    %p100 = por %p98, %p99
    %p101 = scmp.ne.s32.totalorder %s89, %s90
    %p102 = scmp.eq.s32.totalorder %s17, 1
    %p103 = por %p101, %p102
    %p105 = scmp.ne.s32.totalorder %s90, %s104
    %p106 = scmp.eq.s32.totalorder %s17, 0
    %p107 = por %p105, %p106
    %s109 = sadd.s32 %s108, 1
    %p112 = scmp.eq.s32.totalorder %s11, 1
    %p113 = scmp.ne.s32.totalorder %s108, %s110
    %p114 = scmp.eq.s32.totalorder %s11, 0
    %p115 = por %p113, %p114
    %p116 = scmp.ne.s32.totalorder %s108, %s110
    %p117 = scmp.eq.s32.totalorder %s16, 1
    %p118 = por %p116, %p117
    %p119 = scmp.ne.s32.totalorder %s110, %s111
    %p120 = scmp.eq.s32.totalorder %s16, 0
    %p121 = por %p119, %p120
    %p122 = scmp.ne.s32.totalorder %s110, %s111
    %p123 = scmp.eq.s32.totalorder %s17, 1
    %p124 = por %p122, %p123
    %p126 = scmp.ne.s32.totalorder %s111, %s125
    %p127 = scmp.eq.s32.totalorder %s17, 0
    %p128 = por %p126, %p127
    %s129 = ssub.s32 %s11, %s18
    %p130 = scmp.eq.s32.totalorder %s129, 0
    %s132 = sadd.s32 %s131, 1
    %s133 = scalar_select %p130, %s131, %s132
    %p136 = pneg %p130
    %p137 = scmp.eq.s32.totalorder %s11, 1
    %p138 = por %p136, %p137
    %p139 = scmp.ne.s32.totalorder %s131, %s134
    %p140 = scmp.eq.s32.totalorder %s11, 0
    %p141 = por %p139, %p140
    %p142 = scmp.ne.s32.totalorder %s131, %s134
    %p143 = scmp.eq.s32.totalorder %s16, 1
    %p144 = por %p142, %p143
    %p145 = scmp.ne.s32.totalorder %s134, %s135
    %p146 = scmp.eq.s32.totalorder %s16, 0
    %p147 = por %p145, %p146
    %p148 = scmp.ne.s32.totalorder %s134, %s135
    %p149 = scmp.eq.s32.totalorder %s17, 1
    %p150 = por %p148, %p149
    %p152 = scmp.ne.s32.totalorder %s135, %s151
    %p153 = scmp.eq.s32.totalorder %s17, 0
    %p154 = por %p152, %p153
    %p155 = scmp.le.s32.totalorder 1, %s11
    %p156 = scmp.lt.s32.totalorder %s11, 3
    %p157 = pnand %p155, %p156
    %p158 = pneg %p157
    // Predicated region
    $region9: #{tpu_custom_call.1} parent=5 // pred_check
      _
    $region10: #{tpu_custom_call.1} parent=5 // pred_check_branch
      %160 = sbr.rel (%p157) target = $region12
    $region11: #{tpu_custom_call.1} parent=5 // pred_region
      %s161 = ssub.s32 %s11, 1
      // Predicated region
      $region13: #{tpu_custom_call.1} parent=11 // pred_check
        %p162 = pneg %p58
      $region14: #{tpu_custom_call.1} parent=11 // pred_check_branch
        %164 = sbr.rel (%p162) target = $region16
      $region15: #{tpu_custom_call.1} parent=11 // pred_region
        _
      $region16: #{tpu_custom_call.1} parent=11 // pred_fallthru
        _
      // Predicated region
      $region17: #{tpu_custom_call.1} parent=11 // pred_check
        %p165 = pneg %p79
      $region18: #{tpu_custom_call.1} parent=11 // pred_check_branch
        %167 = sbr.rel (%p165) target = $region20
      $region19: #{tpu_custom_call.1} parent=11 // pred_region
        _
      $region20: #{tpu_custom_call.1} parent=11 // pred_fallthru
        _
      // Predicated region
      $region21: #{tpu_custom_call.1} parent=11 // pred_check
        %p168 = pneg %p100
      $region22: #{tpu_custom_call.1} parent=11 // pred_check_branch
        %170 = sbr.rel (%p168) target = $region24
      $region23: #{tpu_custom_call.1} parent=11 // pred_region
        _
      $region24: #{tpu_custom_call.1} parent=11 // pred_fallthru
        _
      // Predicated region
      $region25: #{tpu_custom_call.1} parent=11 // pred_check
        %p171 = pneg %p121
      $region26: #{tpu_custom_call.1} parent=11 // pred_check_branch
        %173 = sbr.rel (%p171) target = $region28
      $region27: #{tpu_custom_call.1} parent=11 // pred_region
        _
      $region28: #{tpu_custom_call.1} parent=11 // pred_fallthru
        _
    $region12: #{tpu_custom_call.1} parent=5 // pred_fallthru
      _
    %p174 = scmp.lt.s32.totalorder %s11, 2
    // Predicated region
    $region29: #{tpu_custom_call.1} parent=5 // pred_check
      %p175 = pneg %p174
    $region30: #{tpu_custom_call.1} parent=5 // pred_check_branch
      %177 = sbr.rel (%p175) target = $region32
    $region31: #{tpu_custom_call.1} parent=5 // pred_region
      // Predicated region
      $region33: #{tpu_custom_call.1} parent=31 // pred_check
        %p178 = pneg %p31
      $region34: #{tpu_custom_call.1} parent=31 // pred_check_branch
        %180 = sbr.rel (%p178) target = $region36
      $region35: #{tpu_custom_call.1} parent=31 // pred_region
        %p181 = scmp.lt.s32.totalorder %s11, 1
        %s182 = scalar_select %p181, %s11, 1
        %s183 = smul.addr %s182, 32
        %s184 = smul.addr %s183, 8
        %s185 = scalar_lea.vmem %s0, %s184
      $region36: #{tpu_custom_call.1} parent=31 // pred_fallthru
        _
    $region32: #{tpu_custom_call.1} parent=5 // pred_fallthru
      _
    %p186 = scmp.le.s32.totalorder 1, %s11
    %p187 = scmp.lt.s32.totalorder %s11, 3
    %p188 = pnand %p186, %p187
    %p189 = pneg %p188
    // Predicated region
    $region37: #{tpu_custom_call.1} parent=5 // pred_check
      _
    $region38: #{tpu_custom_call.1} parent=5 // pred_check_branch
      %191 = sbr.rel (%p188) target = $region40
    $region39: #{tpu_custom_call.1} parent=5 // pred_region
      %s192 = ssub.s32 %s11, 1
      %p193 = scmp.lt.s32.totalorder %s16, 1
      %s194 = scalar_select %p193, %s16, 1
      %s195 = smul.addr %s194, 32
      %s196 = smul.addr %s195, 8
      %s197 = scalar_lea.vmem %s0, %s196
      %p198 = pneg %p37
      %p199 = pneg %p34
      %p200 = pneg %p58
      %p201 = pneg %p55
      %p202 = pneg %p79
      %p203 = pneg %p76
      %p204 = pneg %p100
      %p205 = pneg %p97
      %p206 = pneg %p121
      %p207 = pneg %p118
      %p208 = pneg %p147
      %p209 = pneg %p144
      %p210 = scmp.lt.s32.totalorder %s16, 1
      %s211 = scalar_select %p210, %s16, 1
      %s212 = smul.addr %s211, 32
      %s213 = smul.addr %s212, 8
      %s214 = scalar_lea.vmem %s5, %s213
      %p215 = scmp.lt.s32.totalorder %s16, 1
      %s216 = scalar_select %p215, %s16, 1
      %s217 = smul.addr %s216, 32
      %s218 = smul.addr %s217, 8
      %s219 = scalar_lea.vmem %s0, %s218
      %p220 = scmp.lt.s32.totalorder %s16, 1
      %s221 = scalar_select %p220, %s16, 1
      %s222 = smul.addr %s221, 32
      %s223 = smul.addr %s222, 8
      %s224 = scalar_lea.vmem %s5, %s223
      %v225 = vld [vmem:[%s219] sm:$0xff]
      %v226 = vld [vmem:[%s219 + $0x8] sm:$0xff]
      %v227 = vld [vmem:[%s219 + $0x10] sm:$0xff]
      %v228 = vld [vmem:[%s219 + $0x18] sm:$0xff]
      %v229 = vld [vmem:[%s219 + $0x20] sm:$0xff]
      %v230 = vld [vmem:[%s219 + $0x28] sm:$0xff]
      %v231 = vld [vmem:[%s219 + $0x30] sm:$0xff]
      %v232 = vld [vmem:[%s219 + $0x38] sm:$0xff]
      %v233 = vld [vmem:[%s219 + $0x40] sm:$0xff]
      %v234 = vld [vmem:[%s219 + $0x48] sm:$0xff]
      %v235 = vld [vmem:[%s219 + $0x50] sm:$0xff]
      %v236 = vld [vmem:[%s219 + $0x58] sm:$0xff]
      %v237 = vld [vmem:[%s219 + $0x60] sm:$0xff]
      %v238 = vld [vmem:[%s219 + $0x68] sm:$0xff]
      %v239 = vld [vmem:[%s219 + $0x70] sm:$0xff]
      %v240 = vld [vmem:[%s219 + $0x78] sm:$0xff]
      %v241 = vld [vmem:[%s219 + $0x80] sm:$0xff]
      %v242 = vld [vmem:[%s219 + $0x88] sm:$0xff]
      %v243 = vld [vmem:[%s219 + $0x90] sm:$0xff]
      %v244 = vld [vmem:[%s219 + $0x98] sm:$0xff]
      %v245 = vld [vmem:[%s219 + $0xa0] sm:$0xff]
      %v246 = vld [vmem:[%s219 + $0xa8] sm:$0xff]
      %v247 = vld [vmem:[%s219 + $0xb0] sm:$0xff]
      %v248 = vld [vmem:[%s219 + $0xb8] sm:$0xff]
      %v249 = vld [vmem:[%s219 + $0xc0] sm:$0xff]
      %v250 = vld [vmem:[%s219 + $0xc8] sm:$0xff]
      %v251 = vld [vmem:[%s219 + $0xd0] sm:$0xff]
      %v252 = vld [vmem:[%s219 + $0xd8] sm:$0xff]
      %v253 = vld [vmem:[%s219 + $0xe0] sm:$0xff]
      %v254 = vld [vmem:[%s219 + $0xe8] sm:$0xff]
      %v255 = vld [vmem:[%s219 + $0xf0] sm:$0xff]
      %v256 = vld [vmem:[%s219 + $0xf8] sm:$0xff]
      %v257 = vld [vmem:[%s1] sm:$0xf]
      %v258 = vld [vmem:[%s2] sm:$0x1]
      %v260 = vlaneseq
      %v261 = vshrl.u32 %v260, 7
      %v262 = vsub.s32 0, %v261
      %v263 = vrot.slane %v258, %v262
      %vm265 = vcmask 31744
      %v267 = vsel %vm265, %v225, 0
      %v270 = vsel %vm265, %v226, 0
      %v273 = vsel %vm265, %v227, 0
      %v276 = vsel %vm265, %v228, 0
      %v279 = vsel %vm265, %v229, 0
      %v282 = vsel %vm265, %v230, 0
      %v285 = vsel %vm265, %v231, 0
      %v288 = vsel %vm265, %v232, 0
      %v291 = vsel %vm265, %v233, 0
      %v294 = vsel %vm265, %v234, 0
      %v297 = vsel %vm265, %v235, 0
      %v300 = vsel %vm265, %v236, 0
      %v303 = vsel %vm265, %v237, 0
      %v306 = vsel %vm265, %v238, 0
      %v309 = vsel %vm265, %v239, 0
      %v312 = vsel %vm265, %v240, 0
      %v315 = vsel %vm265, %v241, 0
      %v318 = vsel %vm265, %v242, 0
      %v321 = vsel %vm265, %v243, 0
      %v324 = vsel %vm265, %v244, 0
      %v327 = vsel %vm265, %v245, 0
      %v330 = vsel %vm265, %v246, 0
      %v333 = vsel %vm265, %v247, 0
      %v336 = vsel %vm265, %v248, 0
      %v339 = vsel %vm265, %v249, 0
      %v342 = vsel %vm265, %v250, 0
      %v345 = vsel %vm265, %v251, 0
      %v348 = vsel %vm265, %v252, 0
      %v351 = vsel %vm265, %v253, 0
      %v354 = vsel %vm265, %v254, 0
      %v357 = vsel %vm265, %v255, 0
      %v360 = vsel %vm265, %v256, 0
      %vm362 = vcmask 1043456
      %v364 = vsel %vm362, %v257, 0
      %366 = vmatprep.subr.mxu0 0.0
      %367 = vmatpush1.msra.mxu0 %v364
      %368 = vmatprep.subr.mxu0 0.0
      %369 = vmatpush1.msra.mxu0 0.0
      %370 = vmatprep.subr.mxu0 0.0
      %371 = vmatpush1.msra.mxu0 0.0
      %372 = vmatprep.subr.mxu0 0.0
      %373 = vmatpush1.msra.mxu0 0.0
      %374 = vmatprep.subr.mxu0 0.0
      %375 = vmatpush1.msra.mxu0 0.0
      %376 = vmatprep.subr.mxu0 0.0
      %377 = vmatpush1.msra.mxu0 0.0
      %378 = vmatprep.subr.mxu0 0.0
      %379 = vmatpush1.msra.mxu0 0.0
      %380 = vmatprep.subr.mxu0 0.0
      %381 = vmatpush1.msra.mxu0 0.0
      %382 = vmatprep.subr.mxu0 0.0
      %383 = vmatpush1.msra.mxu0 0.0
      %384 = vmatprep.subr.mxu0 0.0
      %385 = vmatpush1.msra.mxu0 0.0
      %386 = vmatprep.subr.mxu0 0.0
      %387 = vmatpush1.msra.mxu0 0.0
      %388 = vmatprep.subr.mxu0 0.0
      %389 = vmatpush1.msra.mxu0 0.0
      %390 = vmatprep.subr.mxu0 0.0
      %391 = vmatpush1.msra.mxu0 0.0
      %392 = vmatprep.subr.mxu0 0.0
      %393 = vmatpush1.msra.mxu0 0.0
      %394 = vmatprep.subr.mxu0 0.0
      %395 = vmatpush1.msra.mxu0 0.0
      %396 = vmatprep.subr.mxu0 0.0
      %397 = vmatpush1.msra.mxu0 0.0
      %398 = vmatprep.subr.mxu0 0.0
      %399 = vmatpush1.msra.mxu0 0.0
      %400 = vmatprep.subr.mxu0 0.0
      %401 = vmatpush1.msra.mxu0 0.0
      %402 = vmatprep.subr.mxu0 0.0
      %403 = vmatpush1.msra.mxu0 0.0
      %404 = vmatprep.subr.mxu0 0.0
      %405 = vmatpush1.msra.mxu0 0.0
      %406 = vmatprep.subr.mxu0 0.0
      %407 = vmatpush1.msra.mxu0 0.0
      %408 = vmatprep.subr.mxu0 0.0
      %409 = vmatpush1.msra.mxu0 0.0
      %410 = vmatprep.subr.mxu0 0.0
      %411 = vmatpush1.msra.mxu0 0.0
      %412 = vmatprep.subr.mxu0 0.0
      %413 = vmatpush1.msra.mxu0 0.0
      %414 = vmatprep.subr.mxu0 0.0
      %415 = vmatpush1.msra.mxu0 0.0
      %416 = vmatprep.subr.mxu0 0.0
      %417 = vmatpush1.msra.mxu0 0.0
      %418 = vmatprep.subr.mxu0 0.0
      %419 = vmatpush1.msra.mxu0 0.0
      %420 = vmatprep.subr.mxu0 0.0
      %421 = vmatpush1.msra.mxu0 0.0
      %422 = vmatprep.subr.mxu0 0.0
      %423 = vmatpush1.msra.mxu0 0.0
      %424 = vmatprep.subr.mxu0 0.0
      %425 = vmatpush1.msra.mxu0 0.0
      %426 = vmatprep.subr.mxu0 0.0
      %427 = vmatpush1.msra.mxu0 0.0
      %428 = vmatprep.subr.mxu0 0.0
      %429 = vmatpush1.msra.mxu0 0.0
      %430 = vmatprep.mubr.f32.mxu0 0.0
      %431 = vmatmul.mubr.f32.gmra.mrb[0].mxu0 %v267
      %v432 = vpop.f32.mrb[0].mxu0
      %v433 = vadd.f32 %v263, %v432
      %v434 = vpop.f32.mrb[0].mxu0
      %435 = vmatprep.mubr.f32.mxu0 0.0
      %436 = vmatmul.mubr.f32.gmra.mrb[0].mxu0 %v270
      %v437 = vpop.f32.mrb[0].mxu0
      %v438 = vadd.f32 %v263, %v437
      %v439 = vpop.f32.mrb[0].mxu0
      %440 = vmatprep.mubr.f32.mxu0 0.0
      %441 = vmatmul.mubr.f32.gmra.mrb[0].mxu0 %v273
      %v442 = vpop.f32.mrb[0].mxu0
      %v443 = vadd.f32 %v263, %v442
      %v444 = vpop.f32.mrb[0].mxu0
      %445 = vmatprep.mubr.f32.mxu0 0.0
      %446 = vmatmul.mubr.f32.gmra.mrb[0].mxu0 %v276
      %v447 = vpop.f32.mrb[0].mxu0
      %v448 = vadd.f32 %v263, %v447
      %v449 = vpop.f32.mrb[0].mxu0
      %450 = vmatprep.mubr.f32.mxu0 0.0
      %451 = vmatmul.mubr.f32.gmra.mrb[0].mxu0 %v279
      %v452 = vpop.f32.mrb[0].mxu0
      %v453 = vadd.f32 %v263, %v452
      %v454 = vpop.f32.mrb[0].mxu0
      %455 = vmatprep.mubr.f32.mxu0 0.0
      %456 = vmatmul.mubr.f32.gmra.mrb[0].mxu0 %v282
      %v457 = vpop.f32.mrb[0].mxu0
      %v458 = vadd.f32 %v263, %v457
      %v459 = vpop.f32.mrb[0].mxu0
      %460 = vmatprep.mubr.f32.mxu0 0.0
      %461 = vmatmul.mubr.f32.gmra.mrb[0].mxu0 %v285
      %v462 = vpop.f32.mrb[0].mxu0
      %v463 = vadd.f32 %v263, %v462
      %v464 = vpop.f32.mrb[0].mxu0
      %465 = vmatprep.mubr.f32.mxu0 0.0
      %466 = vmatmul.mubr.f32.gmra.mrb[0].mxu0 %v288
      %v467 = vpop.f32.mrb[0].mxu0
      %v468 = vadd.f32 %v263, %v467
      %v469 = vpop.f32.mrb[0].mxu0
      %470 = vmatprep.mubr.f32.mxu0 0.0
      %471 = vmatmul.mubr.f32.gmra.mrb[0].mxu0 %v291
      %v472 = vpop.f32.mrb[0].mxu0
      %v473 = vadd.f32 %v263, %v472
      %v474 = vpop.f32.mrb[0].mxu0
      %475 = vmatprep.mubr.f32.mxu0 0.0
      %476 = vmatmul.mubr.f32.gmra.mrb[0].mxu0 %v294
      %v477 = vpop.f32.mrb[0].mxu0
      %v478 = vadd.f32 %v263, %v477
      %v479 = vpop.f32.mrb[0].mxu0
      %480 = vmatprep.mubr.f32.mxu0 0.0
      %481 = vmatmul.mubr.f32.gmra.mrb[0].mxu0 %v297
      %v482 = vpop.f32.mrb[0].mxu0
      %v483 = vadd.f32 %v263, %v482
      %v484 = vpop.f32.mrb[0].mxu0
      %485 = vmatprep.mubr.f32.mxu0 0.0
      %486 = vmatmul.mubr.f32.gmra.mrb[0].mxu0 %v300
      %v487 = vpop.f32.mrb[0].mxu0
      %v488 = vadd.f32 %v263, %v487
      %v489 = vpop.f32.mrb[0].mxu0
      %490 = vmatprep.mubr.f32.mxu0 0.0
      %491 = vmatmul.mubr.f32.gmra.mrb[0].mxu0 %v303
      %v492 = vpop.f32.mrb[0].mxu0
      %v493 = vadd.f32 %v263, %v492
      %v494 = vpop.f32.mrb[0].mxu0
      %495 = vmatprep.mubr.f32.mxu0 0.0
      %496 = vmatmul.mubr.f32.gmra.mrb[0].mxu0 %v306
      %v497 = vpop.f32.mrb[0].mxu0
      %v498 = vadd.f32 %v263, %v497
      %v499 = vpop.f32.mrb[0].mxu0
      %500 = vmatprep.mubr.f32.mxu0 0.0
      %501 = vmatmul.mubr.f32.gmra.mrb[0].mxu0 %v309
      %v502 = vpop.f32.mrb[0].mxu0
      %v503 = vadd.f32 %v263, %v502
      %v504 = vpop.f32.mrb[0].mxu0
      %505 = vmatprep.mubr.f32.mxu0 0.0
      %506 = vmatmul.mubr.f32.gmra.mrb[0].mxu0 %v312
      %v507 = vpop.f32.mrb[0].mxu0
      %v508 = vadd.f32 %v263, %v507
      %v509 = vpop.f32.mrb[0].mxu0
      %510 = vmatprep.mubr.f32.mxu0 0.0
      %511 = vmatmul.mubr.f32.gmra.mrb[0].mxu0 %v315
      %v512 = vpop.f32.mrb[0].mxu0
      %v513 = vadd.f32 %v263, %v512
      %v514 = vpop.f32.mrb[0].mxu0
      %515 = vmatprep.mubr.f32.mxu0 0.0
      %516 = vmatmul.mubr.f32.gmra.mrb[0].mxu0 %v318
      %v517 = vpop.f32.mrb[0].mxu0
      %v518 = vadd.f32 %v263, %v517
      %v519 = vpop.f32.mrb[0].mxu0
      %520 = vmatprep.mubr.f32.mxu0 0.0
      %521 = vmatmul.mubr.f32.gmra.mrb[0].mxu0 %v321
      %v522 = vpop.f32.mrb[0].mxu0
      %v523 = vadd.f32 %v263, %v522
      %v524 = vpop.f32.mrb[0].mxu0
      %525 = vmatprep.mubr.f32.mxu0 0.0
      %526 = vmatmul.mubr.f32.gmra.mrb[0].mxu0 %v324
      %v527 = vpop.f32.mrb[0].mxu0
      %v528 = vadd.f32 %v263, %v527
      %v529 = vpop.f32.mrb[0].mxu0
      %530 = vmatprep.mubr.f32.mxu0 0.0
      %531 = vmatmul.mubr.f32.gmra.mrb[0].mxu0 %v327
      %v532 = vpop.f32.mrb[0].mxu0
      %v533 = vadd.f32 %v263, %v532
      %v534 = vpop.f32.mrb[0].mxu0
      %535 = vmatprep.mubr.f32.mxu0 0.0
      %536 = vmatmul.mubr.f32.gmra.mrb[0].mxu0 %v330
      %v537 = vpop.f32.mrb[0].mxu0
      %v538 = vadd.f32 %v263, %v537
      %v539 = vpop.f32.mrb[0].mxu0
      %540 = vmatprep.mubr.f32.mxu0 0.0
      %541 = vmatmul.mubr.f32.gmra.mrb[0].mxu0 %v333
      %v542 = vpop.f32.mrb[0].mxu0
      %v543 = vadd.f32 %v263, %v542
      %v544 = vpop.f32.mrb[0].mxu0
      %545 = vmatprep.mubr.f32.mxu0 0.0
      %546 = vmatmul.mubr.f32.gmra.mrb[0].mxu0 %v336
      %v547 = vpop.f32.mrb[0].mxu0
      %v548 = vadd.f32 %v263, %v547
      %v549 = vpop.f32.mrb[0].mxu0
      %550 = vmatprep.mubr.f32.mxu0 0.0
      %551 = vmatmul.mubr.f32.gmra.mrb[0].mxu0 %v339
      %v552 = vpop.f32.mrb[0].mxu0
      %v553 = vadd.f32 %v263, %v552
      %v554 = vpop.f32.mrb[0].mxu0
      %555 = vmatprep.mubr.f32.mxu0 0.0
      %556 = vmatmul.mubr.f32.gmra.mrb[0].mxu0 %v342
      %v557 = vpop.f32.mrb[0].mxu0
      %v558 = vadd.f32 %v263, %v557
      %v559 = vpop.f32.mrb[0].mxu0
      %560 = vmatprep.mubr.f32.mxu0 0.0
      %561 = vmatmul.mubr.f32.gmra.mrb[0].mxu0 %v345
      %v562 = vpop.f32.mrb[0].mxu0
      %v563 = vadd.f32 %v263, %v562
      %v564 = vpop.f32.mrb[0].mxu0
      %565 = vmatprep.mubr.f32.mxu0 0.0
      %566 = vmatmul.mubr.f32.gmra.mrb[0].mxu0 %v348
      %v567 = vpop.f32.mrb[0].mxu0
      %v568 = vadd.f32 %v263, %v567
      %v569 = vpop.f32.mrb[0].mxu0
      %570 = vmatprep.mubr.f32.mxu0 0.0
      %571 = vmatmul.mubr.f32.gmra.mrb[0].mxu0 %v351
      %v572 = vpop.f32.mrb[0].mxu0
      %v573 = vadd.f32 %v263, %v572
      %v574 = vpop.f32.mrb[0].mxu0
      %575 = vmatprep.mubr.f32.mxu0 0.0
      %576 = vmatmul.mubr.f32.gmra.mrb[0].mxu0 %v354
      %v577 = vpop.f32.mrb[0].mxu0
      %v578 = vadd.f32 %v263, %v577
      %v579 = vpop.f32.mrb[0].mxu0
      %580 = vmatprep.mubr.f32.mxu0 0.0
      %581 = vmatmul.mubr.f32.gmra.mrb[0].mxu0 %v357
      %v582 = vpop.f32.mrb[0].mxu0
      %v583 = vadd.f32 %v263, %v582
      %v584 = vpop.f32.mrb[0].mxu0
      %585 = vmatprep.mubr.f32.mxu0 0.0
      %586 = vmatmul.mubr.f32.gmra.mrb[0].mxu0 %v360
      %v587 = vpop.f32.mrb[0].mxu0
      %v588 = vadd.f32 %v263, %v587
      %v589 = vpop.f32.mrb[0].mxu0
      %590 = vdwg.mxu0
      %v591 = vxor.u32 %v433, 2147483648
      %v592 = vxor.u32 %v438, 2147483648
      %v593 = vxor.u32 %v443, 2147483648
      %v594 = vxor.u32 %v448, 2147483648
      %v595 = vxor.u32 %v453, 2147483648
      %v596 = vxor.u32 %v458, 2147483648
      %v597 = vxor.u32 %v463, 2147483648
      %v598 = vxor.u32 %v468, 2147483648
      %v599 = vxor.u32 %v473, 2147483648
      %v600 = vxor.u32 %v478, 2147483648
      %v601 = vxor.u32 %v483, 2147483648
      %v602 = vxor.u32 %v488, 2147483648
      %v603 = vxor.u32 %v493, 2147483648
      %v604 = vxor.u32 %v498, 2147483648
      %v605 = vxor.u32 %v503, 2147483648
      %v606 = vxor.u32 %v508, 2147483648
      %v607 = vxor.u32 %v513, 2147483648
      %v608 = vxor.u32 %v518, 2147483648
      %v609 = vxor.u32 %v523, 2147483648
      %v610 = vxor.u32 %v528, 2147483648
      %v611 = vxor.u32 %v533, 2147483648
      %v612 = vxor.u32 %v538, 2147483648
      %v613 = vxor.u32 %v543, 2147483648
      %v614 = vxor.u32 %v548, 2147483648
      %v615 = vxor.u32 %v553, 2147483648
      %v616 = vxor.u32 %v558, 2147483648
      %v617 = vxor.u32 %v563, 2147483648
      %v618 = vxor.u32 %v568, 2147483648
      %v619 = vxor.u32 %v573, 2147483648
      %v620 = vxor.u32 %v578, 2147483648
      %v621 = vxor.u32 %v583, 2147483648
      %v622 = vxor.u32 %v588, 2147483648
      %v623 = vmul.f32 %v591, 1.442695
      %v624 = vpow.pop %v623
      %v625 = vmul.f32 %v592, 1.442695
      %v626 = vpow.pop %v625
      %v627 = vmul.f32 %v593, 1.442695
      %v628 = vpow.pop %v627
      %v629 = vmul.f32 %v594, 1.442695
      %v630 = vpow.pop %v629
      %v631 = vmul.f32 %v595, 1.442695
      %v632 = vpow.pop %v631
      %v633 = vmul.f32 %v596, 1.442695
      %v634 = vpow.pop %v633
      %v635 = vmul.f32 %v597, 1.442695
      %v636 = vpow.pop %v635
      %v637 = vmul.f32 %v598, 1.442695
      %v638 = vpow.pop %v637
      %v639 = vmul.f32 %v599, 1.442695
      %v640 = vpow.pop %v639
      %v641 = vmul.f32 %v600, 1.442695
      %v642 = vpow.pop %v641
      %v643 = vmul.f32 %v601, 1.442695
      %v644 = vpow.pop %v643
      %v645 = vmul.f32 %v602, 1.442695
      %v646 = vpow.pop %v645
      %v647 = vmul.f32 %v603, 1.442695
      %v648 = vpow.pop %v647
      %v649 = vmul.f32 %v604, 1.442695
      %v650 = vpow.pop %v649
      %v651 = vmul.f32 %v605, 1.442695
      %v652 = vpow.pop %v651
      %v653 = vmul.f32 %v606, 1.442695
      %v654 = vpow.pop %v653
      %v655 = vmul.f32 %v607, 1.442695
      %v656 = vpow.pop %v655
      %v657 = vmul.f32 %v608, 1.442695
      %v658 = vpow.pop %v657
      %v659 = vmul.f32 %v609, 1.442695
      %v660 = vpow.pop %v659
      %v661 = vmul.f32 %v610, 1.442695
      %v662 = vpow.pop %v661
      %v663 = vmul.f32 %v611, 1.442695
      %v664 = vpow.pop %v663
      %v665 = vmul.f32 %v612, 1.442695
      %v666 = vpow.pop %v665
      %v667 = vmul.f32 %v613, 1.442695
      %v668 = vpow.pop %v667
      %v669 = vmul.f32 %v614, 1.442695
      %v670 = vpow.pop %v669
      %v671 = vmul.f32 %v615, 1.442695
      %v672 = vpow.pop %v671
      %v673 = vmul.f32 %v616, 1.442695
      %v674 = vpow.pop %v673
      %v675 = vmul.f32 %v617, 1.442695
      %v676 = vpow.pop %v675
      %v677 = vmul.f32 %v618, 1.442695
      %v678 = vpow.pop %v677
      %v679 = vmul.f32 %v619, 1.442695
      %v680 = vpow.pop %v679
      %v681 = vmul.f32 %v620, 1.442695
      %v682 = vpow.pop %v681
      %v683 = vmul.f32 %v621, 1.442695
      %v684 = vpow.pop %v683
      %v685 = vmul.f32 %v622, 1.442695
      %v686 = vpow.pop %v685
      %v687 = vadd.f32 %v624, 1.0
      %v688 = vadd.f32 %v626, 1.0
      %v689 = vadd.f32 %v628, 1.0
      %v690 = vadd.f32 %v630, 1.0
      %v691 = vadd.f32 %v632, 1.0
      %v692 = vadd.f32 %v634, 1.0
      %v693 = vadd.f32 %v636, 1.0
      %v694 = vadd.f32 %v638, 1.0
      %v695 = vadd.f32 %v640, 1.0
      %v696 = vadd.f32 %v642, 1.0
      %v697 = vadd.f32 %v644, 1.0
      %v698 = vadd.f32 %v646, 1.0
      %v699 = vadd.f32 %v648, 1.0
      %v700 = vadd.f32 %v650, 1.0
      %v701 = vadd.f32 %v652, 1.0
      %v702 = vadd.f32 %v654, 1.0
      %v703 = vadd.f32 %v656, 1.0
      %v704 = vadd.f32 %v658, 1.0
      %v705 = vadd.f32 %v660, 1.0
      %v706 = vadd.f32 %v662, 1.0
      %v707 = vadd.f32 %v664, 1.0
      %v708 = vadd.f32 %v666, 1.0
      %v709 = vadd.f32 %v668, 1.0
      %v710 = vadd.f32 %v670, 1.0
      %v711 = vadd.f32 %v672, 1.0
      %v712 = vadd.f32 %v674, 1.0
      %v713 = vadd.f32 %v676, 1.0
      %v714 = vadd.f32 %v678, 1.0
      %v715 = vadd.f32 %v680, 1.0
      %v716 = vadd.f32 %v682, 1.0
      %v717 = vadd.f32 %v684, 1.0
      %v718 = vadd.f32 %v686, 1.0
      %v719 = vrcp.pop %v687
      %v720 = vmul.f32 1.0, %v719
      %v721 = vrcp.pop %v688
      %v722 = vmul.f32 1.0, %v721
      %v723 = vrcp.pop %v689
      %v724 = vmul.f32 1.0, %v723
      %v725 = vrcp.pop %v690
      %v726 = vmul.f32 1.0, %v725
      %v727 = vrcp.pop %v691
      %v728 = vmul.f32 1.0, %v727
      %v729 = vrcp.pop %v692
      %v730 = vmul.f32 1.0, %v729
      %v731 = vrcp.pop %v693
      %v732 = vmul.f32 1.0, %v731
      %v733 = vrcp.pop %v694
      %v734 = vmul.f32 1.0, %v733
      %v735 = vrcp.pop %v695
      %v736 = vmul.f32 1.0, %v735
      %v737 = vrcp.pop %v696
      %v738 = vmul.f32 1.0, %v737
      %v739 = vrcp.pop %v697
      %v740 = vmul.f32 1.0, %v739
      %v741 = vrcp.pop %v698
      %v742 = vmul.f32 1.0, %v741
      %v743 = vrcp.pop %v699
      %v744 = vmul.f32 1.0, %v743
      %v745 = vrcp.pop %v700
      %v746 = vmul.f32 1.0, %v745
      %v747 = vrcp.pop %v701
      %v748 = vmul.f32 1.0, %v747
      %v749 = vrcp.pop %v702
      %v750 = vmul.f32 1.0, %v749
      %v751 = vrcp.pop %v703
      %v752 = vmul.f32 1.0, %v751
      %v753 = vrcp.pop %v704
      %v754 = vmul.f32 1.0, %v753
      %v755 = vrcp.pop %v705
      %v756 = vmul.f32 1.0, %v755
      %v757 = vrcp.pop %v706
      %v758 = vmul.f32 1.0, %v757
      %v759 = vrcp.pop %v707
      %v760 = vmul.f32 1.0, %v759
      %v761 = vrcp.pop %v708
      %v762 = vmul.f32 1.0, %v761
      %v763 = vrcp.pop %v709
      %v764 = vmul.f32 1.0, %v763
      %v765 = vrcp.pop %v710
      %v766 = vmul.f32 1.0, %v765
      %v767 = vrcp.pop %v711
      %v768 = vmul.f32 1.0, %v767
      %v769 = vrcp.pop %v712
      %v770 = vmul.f32 1.0, %v769
      %v771 = vrcp.pop %v713
      %v772 = vmul.f32 1.0, %v771
      %v773 = vrcp.pop %v714
      %v774 = vmul.f32 1.0, %v773
      %v775 = vrcp.pop %v715
      %v776 = vmul.f32 1.0, %v775
      %v777 = vrcp.pop %v716
      %v778 = vmul.f32 1.0, %v777
      %v779 = vrcp.pop %v717
      %v780 = vmul.f32 1.0, %v779
      %v781 = vrcp.pop %v718
      %v782 = vmul.f32 1.0, %v781
      %v783 = vmul.f32 %v433, %v720
      %v784 = vmul.f32 %v438, %v722
      %v785 = vmul.f32 %v443, %v724
      %v786 = vmul.f32 %v448, %v726
      %v787 = vmul.f32 %v453, %v728
      %v788 = vmul.f32 %v458, %v730
      %v789 = vmul.f32 %v463, %v732
      %v790 = vmul.f32 %v468, %v734
      %v791 = vmul.f32 %v473, %v736
      %v792 = vmul.f32 %v478, %v738
      %v793 = vmul.f32 %v483, %v740
      %v794 = vmul.f32 %v488, %v742
      %v795 = vmul.f32 %v493, %v744
      %v796 = vmul.f32 %v498, %v746
      %v797 = vmul.f32 %v503, %v748
      %v798 = vmul.f32 %v508, %v750
      %v799 = vmul.f32 %v513, %v752
      %v800 = vmul.f32 %v518, %v754
      %v801 = vmul.f32 %v523, %v756
      %v802 = vmul.f32 %v528, %v758
      %v803 = vmul.f32 %v533, %v760
      %v804 = vmul.f32 %v538, %v762
      %v805 = vmul.f32 %v543, %v764
      %v806 = vmul.f32 %v548, %v766
      %v807 = vmul.f32 %v553, %v768
      %v808 = vmul.f32 %v558, %v770
      %v809 = vmul.f32 %v563, %v772
      %v810 = vmul.f32 %v568, %v774
      %v811 = vmul.f32 %v573, %v776
      %v812 = vmul.f32 %v578, %v778
      %v813 = vmul.f32 %v583, %v780
      %v814 = vmul.f32 %v588, %v782
      %v815 = vmax.f32 %v787, %v783
      %v816 = vmax.f32 %v788, %v784
      %v817 = vmax.f32 %v789, %v785
      %v818 = vmax.f32 %v790, %v786
      %v819 = vmax.f32 %v791, %v787
      %v820 = vmax.f32 %v792, %v788
      %v821 = vmax.f32 %v793, %v789
      %v822 = vmax.f32 %v794, %v790
      %v823 = vmax.f32 %v795, %v791
      %v824 = vmax.f32 %v796, %v792
      %v825 = vmax.f32 %v797, %v793
      %v826 = vmax.f32 %v798, %v794
      %v827 = vmax.f32 %v799, %v795
      %v828 = vmax.f32 %v800, %v796
      %v829 = vmax.f32 %v801, %v797
      %v830 = vmax.f32 %v802, %v798
      %v831 = vmax.f32 %v803, %v799
      %v832 = vmax.f32 %v804, %v800
      %v833 = vmax.f32 %v805, %v801
      %v834 = vmax.f32 %v806, %v802
      %v835 = vmax.f32 %v807, %v803
      %v836 = vmax.f32 %v808, %v804
      %v837 = vmax.f32 %v809, %v805
      %v838 = vmax.f32 %v810, %v806
      %v839 = vmax.f32 %v811, %v807
      %v840 = vmax.f32 %v812, %v808
      %v841 = vmax.f32 %v813, %v809
      %v842 = vmax.f32 %v814, %v810
      %v843 = vmax.f32 %v785, %v783
      %v844 = vmax.f32 %v786, %v784
      %v845 = vmax.f32 %v815, %v785
      %v846 = vmax.f32 %v816, %v786
      %v847 = vmax.f32 %v817, %v787
      %v848 = vmax.f32 %v818, %v788
      %v849 = vmax.f32 %v819, %v789
      %v850 = vmax.f32 %v820, %v790
      %v851 = vmax.f32 %v821, %v791
      %v852 = vmax.f32 %v822, %v792
      %v853 = vmax.f32 %v823, %v793
      %v854 = vmax.f32 %v824, %v794
      %v855 = vmax.f32 %v825, %v795
      %v856 = vmax.f32 %v826, %v796
      %v857 = vmax.f32 %v827, %v797
      %v858 = vmax.f32 %v828, %v798
      %v859 = vmax.f32 %v829, %v799
      %v860 = vmax.f32 %v830, %v800
      %v861 = vmax.f32 %v831, %v801
      %v862 = vmax.f32 %v832, %v802
      %v863 = vmax.f32 %v833, %v803
      %v864 = vmax.f32 %v834, %v804
      %v865 = vmax.f32 %v835, %v805
      %v866 = vmax.f32 %v836, %v806
      %v867 = vmax.f32 %v837, %v807
      %v868 = vmax.f32 %v838, %v808
      %v869 = vmax.f32 %v839, %v809
      %v870 = vmax.f32 %v840, %v810
      %v871 = vmax.f32 %v841, %v811
      %v872 = vmax.f32 %v842, %v812
      %v873 = vmax.f32 %v843, %v787
      %v874 = vmax.f32 %v844, %v788
      %v875 = vmax.f32 %v845, %v789
      %v876 = vmax.f32 %v846, %v790
      %v877 = vmax.f32 %v847, %v791
      %v878 = vmax.f32 %v848, %v792
      %v879 = vmax.f32 %v849, %v793
      %v880 = vmax.f32 %v850, %v794
      %v881 = vmax.f32 %v851, %v795
      %v882 = vmax.f32 %v852, %v796
      %v883 = vmax.f32 %v853, %v797
      %v884 = vmax.f32 %v854, %v798
      %v885 = vmax.f32 %v855, %v799
      %v886 = vmax.f32 %v856, %v800
      %v887 = vmax.f32 %v857, %v801
      %v888 = vmax.f32 %v858, %v802
      %v889 = vmax.f32 %v859, %v803
      %v890 = vmax.f32 %v860, %v804
      %v891 = vmax.f32 %v861, %v805
      %v892 = vmax.f32 %v862, %v806
      %v893 = vmax.f32 %v863, %v807
      %v894 = vmax.f32 %v864, %v808
      %v895 = vmax.f32 %v865, %v809
      %v896 = vmax.f32 %v866, %v810
      %v897 = vmax.f32 %v867, %v811
      %v898 = vmax.f32 %v868, %v812
      %v899 = vmax.f32 %v869, %v813
      %v900 = vmax.f32 %v870, %v814
      %v901 = vmax.f32 %v873, %v789
      %v902 = vmax.f32 %v874, %v790
      %v903 = vmax.f32 %v875, %v791
      %v904 = vmax.f32 %v876, %v792
      %v905 = vmax.f32 %v877, %v793
      %v906 = vmax.f32 %v878, %v794
      %v907 = vmax.f32 %v879, %v795
      %v908 = vmax.f32 %v880, %v796
      %v909 = vmax.f32 %v881, %v797
      %v910 = vmax.f32 %v882, %v798
      %v911 = vmax.f32 %v883, %v799
      %v912 = vmax.f32 %v884, %v800
      %v913 = vmax.f32 %v885, %v801
      %v914 = vmax.f32 %v886, %v802
      %v915 = vmax.f32 %v887, %v803
      %v916 = vmax.f32 %v888, %v804
      %v917 = vmax.f32 %v889, %v805
      %v918 = vmax.f32 %v890, %v806
      %v919 = vmax.f32 %v891, %v807
      %v920 = vmax.f32 %v892, %v808
      %v921 = vmax.f32 %v893, %v809
      %v922 = vmax.f32 %v894, %v810
      %v923 = vmax.f32 %v895, %v811
      %v924 = vmax.f32 %v896, %v812
      %v925 = vmax.f32 %v897, %v813
      %v926 = vmax.f32 %v898, %v814
      %v927 = vrot.slane %v873, 6
      %v928 = vrot.slane %v901, 6
      %v929 = vrot.slane %v903, 6
      %v930 = vrot.slane %v905, 6
      %v931 = vrot.slane %v907, 6
      %v932 = vrot.slane %v909, 6
      %v933 = vrot.slane %v911, 6
      %v934 = vrot.slane %v913, 6
      %v935 = vrot.slane %v915, 6
      %v936 = vrot.slane %v917, 6
      %v937 = vrot.slane %v919, 6
      %v938 = vrot.slane %v921, 6
      %v939 = vrot.slane %v923, 6
      %v940 = vrot.slane %v925, 6
      %v941 = vrot.slane %v899, 6
      %v942 = vrot.slane %v871, 6
      %v943 = vrot.slane %v874, 6
      %v944 = vrot.slane %v902, 6
      %v945 = vrot.slane %v904, 6
      %v946 = vrot.slane %v906, 6
      %v947 = vrot.slane %v908, 6
      %v948 = vrot.slane %v910, 6
      %v949 = vrot.slane %v912, 6
      %v950 = vrot.slane %v914, 6
      %v951 = vrot.slane %v916, 6
      %v952 = vrot.slane %v918, 6
      %v953 = vrot.slane %v920, 6
      %v954 = vrot.slane %v922, 6
      %v955 = vrot.slane %v924, 6
      %v956 = vrot.slane %v926, 6
      %v957 = vrot.slane %v900, 6
      %v958 = vrot.slane %v872, 6
      %v959 = vlaneseq
      %v960 = vshrl.u32 %v959, 7
      %vm961 = vcmp.lt.s32.totalorder %v960, 2
      %v962 = vsel %vm961, %v927, %v943
      %v963 = vsel %vm961, %v928, %v944
      %v964 = vsel %vm961, %v929, %v945
      %v965 = vsel %vm961, %v930, %v946
      %v966 = vsel %vm961, %v931, %v947
      %v967 = vsel %vm961, %v932, %v948
      %v968 = vsel %vm961, %v933, %v949
      %v969 = vsel %vm961, %v934, %v950
      %v970 = vsel %vm961, %v935, %v951
      %v971 = vsel %vm961, %v936, %v952
      %v972 = vsel %vm961, %v937, %v953
      %v973 = vsel %vm961, %v938, %v954
      %v974 = vsel %vm961, %v939, %v955
      %v975 = vsel %vm961, %v940, %v956
      %v976 = vsel %vm961, %v941, %v957
      %v977 = vsel %vm961, %v942, %v958
      %v978 = vsel %vm961, %v943, %v927
      %v979 = vsel %vm961, %v944, %v928
      %v980 = vsel %vm961, %v945, %v929
      %v981 = vsel %vm961, %v946, %v930
      %v982 = vsel %vm961, %v947, %v931
      %v983 = vsel %vm961, %v948, %v932
      %v984 = vsel %vm961, %v949, %v933
      %v985 = vsel %vm961, %v950, %v934
      %v986 = vsel %vm961, %v951, %v935
      %v987 = vsel %vm961, %v952, %v936
      %v988 = vsel %vm961, %v953, %v937
      %v989 = vsel %vm961, %v954, %v938
      %v990 = vsel %vm961, %v955, %v939
      %v991 = vsel %vm961, %v956, %v940
      %v992 = vsel %vm961, %v957, %v941
      %v993 = vsel %vm961, %v958, %v942
      %v994 = vadd.s32 %v960, 8
      %v995 = vadd.s32 %v960, 4294967294
      %v996 = vadd.s32 %v994, 4294967294
      %vm997 = vcmp.ge.s32.totalorder %v995, 0
      %vm998 = vcmp.ge.s32.totalorder %v996, 0
      %vm999 = vcmp.le.s32.totalorder %v995, 15
      %vm1000 = vcmp.le.s32.totalorder %v996, 15
      %vm1001 = vmand %vm997, %vm999
      %vm1002 = vmand %vm998, %vm1000
      %v1003 = vsel %vm1001, %v978, -inf
      %v1004 = vsel %vm1002, %v962, -inf
      %v1005 = vsel %vm1001, %v979, -inf
      %v1006 = vsel %vm1002, %v963, -inf
      %v1007 = vsel %vm1001, %v980, -inf
      %v1008 = vsel %vm1002, %v964, -inf
      %v1009 = vsel %vm1001, %v981, -inf
      %v1010 = vsel %vm1002, %v965, -inf
      %v1011 = vsel %vm1001, %v982, -inf
      %v1012 = vsel %vm1002, %v966, -inf
      %v1013 = vsel %vm1001, %v983, -inf
      %v1014 = vsel %vm1002, %v967, -inf
      %v1015 = vsel %vm1001, %v984, -inf
      %v1016 = vsel %vm1002, %v968, -inf
      %v1017 = vsel %vm1001, %v985, -inf
      %v1018 = vsel %vm1002, %v969, -inf
      %v1019 = vsel %vm1001, %v986, -inf
      %v1020 = vsel %vm1002, %v970, -inf
      %v1021 = vsel %vm1001, %v987, -inf
      %v1022 = vsel %vm1002, %v971, -inf
      %v1023 = vsel %vm1001, %v988, -inf
      %v1024 = vsel %vm1002, %v972, -inf
      %v1025 = vsel %vm1001, %v989, -inf
      %v1026 = vsel %vm1002, %v973, -inf
      %v1027 = vsel %vm1001, %v990, -inf
      %v1028 = vsel %vm1002, %v974, -inf
      %v1029 = vsel %vm1001, %v991, -inf
      %v1030 = vsel %vm1002, %v975, -inf
      %v1031 = vsel %vm1001, %v992, -inf
      %v1032 = vsel %vm1002, %v976, -inf
      %v1033 = vsel %vm1001, %v993, -inf
      %v1034 = vsel %vm1002, %v977, -inf
      %v1035 = vmax.f32 %v873, %v1003
      %v1036 = vmax.f32 %v874, %v1004
      %v1037 = vmax.f32 %v901, %v1005
      %v1038 = vmax.f32 %v902, %v1006
      %v1039 = vmax.f32 %v903, %v1007
      %v1040 = vmax.f32 %v904, %v1008
      %v1041 = vmax.f32 %v905, %v1009
      %v1042 = vmax.f32 %v906, %v1010
      %v1043 = vmax.f32 %v907, %v1011
      %v1044 = vmax.f32 %v908, %v1012
      %v1045 = vmax.f32 %v909, %v1013
      %v1046 = vmax.f32 %v910, %v1014
      %v1047 = vmax.f32 %v911, %v1015
      %v1048 = vmax.f32 %v912, %v1016
      %v1049 = vmax.f32 %v913, %v1017
      %v1050 = vmax.f32 %v914, %v1018
      %v1051 = vmax.f32 %v915, %v1019
      %v1052 = vmax.f32 %v916, %v1020
      %v1053 = vmax.f32 %v917, %v1021
      %v1054 = vmax.f32 %v918, %v1022
      %v1055 = vmax.f32 %v919, %v1023
      %v1056 = vmax.f32 %v920, %v1024
      %v1057 = vmax.f32 %v921, %v1025
      %v1058 = vmax.f32 %v922, %v1026
      %v1059 = vmax.f32 %v923, %v1027
      %v1060 = vmax.f32 %v924, %v1028
      %v1061 = vmax.f32 %v925, %v1029
      %v1062 = vmax.f32 %v926, %v1030
      %v1063 = vmax.f32 %v899, %v1031
      %v1064 = vmax.f32 %v900, %v1032
      %v1065 = vmax.f32 %v871, %v1033
      %v1066 = vmax.f32 %v872, %v1034
      %v1067 = vrot.slane %v873, 7
      %v1068 = vrot.slane %v901, 7
      %v1069 = vrot.slane %v903, 7
      %v1070 = vrot.slane %v905, 7
      %v1071 = vrot.slane %v907, 7
      %v1072 = vrot.slane %v909, 7
      %v1073 = vrot.slane %v911, 7
      %v1074 = vrot.slane %v913, 7
      %v1075 = vrot.slane %v915, 7
      %v1076 = vrot.slane %v917, 7
      %v1077 = vrot.slane %v919, 7
      %v1078 = vrot.slane %v921, 7
      %v1079 = vrot.slane %v923, 7
      %v1080 = vrot.slane %v925, 7
      %v1081 = vrot.slane %v899, 7
      %v1082 = vrot.slane %v871, 7
      %v1083 = vrot.slane %v874, 7
      %v1084 = vrot.slane %v902, 7
      %v1085 = vrot.slane %v904, 7
      %v1086 = vrot.slane %v906, 7
      %v1087 = vrot.slane %v908, 7
      %v1088 = vrot.slane %v910, 7
      %v1089 = vrot.slane %v912, 7
      %v1090 = vrot.slane %v914, 7
      %v1091 = vrot.slane %v916, 7
      %v1092 = vrot.slane %v918, 7
      %v1093 = vrot.slane %v920, 7
      %v1094 = vrot.slane %v922, 7
      %v1095 = vrot.slane %v924, 7
      %v1096 = vrot.slane %v926, 7
      %v1097 = vrot.slane %v900, 7
      %v1098 = vrot.slane %v872, 7
      %vm1099 = vcmp.lt.s32.totalorder %v960, 1
      %v1100 = vsel %vm1099, %v1067, %v1083
      %v1101 = vsel %vm1099, %v1068, %v1084
      %v1102 = vsel %vm1099, %v1069, %v1085
      %v1103 = vsel %vm1099, %v1070, %v1086
      %v1104 = vsel %vm1099, %v1071, %v1087
      %v1105 = vsel %vm1099, %v1072, %v1088
      %v1106 = vsel %vm1099, %v1073, %v1089
      %v1107 = vsel %vm1099, %v1074, %v1090
      %v1108 = vsel %vm1099, %v1075, %v1091
      %v1109 = vsel %vm1099, %v1076, %v1092
      %v1110 = vsel %vm1099, %v1077, %v1093
      %v1111 = vsel %vm1099, %v1078, %v1094
      %v1112 = vsel %vm1099, %v1079, %v1095
      %v1113 = vsel %vm1099, %v1080, %v1096
      %v1114 = vsel %vm1099, %v1081, %v1097
      %v1115 = vsel %vm1099, %v1082, %v1098
      %v1116 = vsel %vm1099, %v1083, %v1067
      %v1117 = vsel %vm1099, %v1084, %v1068
      %v1118 = vsel %vm1099, %v1085, %v1069
      %v1119 = vsel %vm1099, %v1086, %v1070
      %v1120 = vsel %vm1099, %v1087, %v1071
      %v1121 = vsel %vm1099, %v1088, %v1072
      %v1122 = vsel %vm1099, %v1089, %v1073
      %v1123 = vsel %vm1099, %v1090, %v1074
      %v1124 = vsel %vm1099, %v1091, %v1075
      %v1125 = vsel %vm1099, %v1092, %v1076
      %v1126 = vsel %vm1099, %v1093, %v1077
      %v1127 = vsel %vm1099, %v1094, %v1078
      %v1128 = vsel %vm1099, %v1095, %v1079
      %v1129 = vsel %vm1099, %v1096, %v1080
      %v1130 = vsel %vm1099, %v1097, %v1081
      %v1131 = vsel %vm1099, %v1098, %v1082
      %v1132 = vadd.s32 %v960, 4294967295
      %v1133 = vadd.s32 %v994, 4294967295
      %vm1134 = vcmp.ge.s32.totalorder %v1132, 0
      %vm1135 = vcmp.ge.s32.totalorder %v1133, 0
      %vm1136 = vcmp.le.s32.totalorder %v1132, 15
      %vm1137 = vcmp.le.s32.totalorder %v1133, 15
      %vm1138 = vmand %vm1134, %vm1136
      %vm1139 = vmand %vm1135, %vm1137
      %v1140 = vsel %vm1138, %v1116, -inf
      %v1141 = vsel %vm1139, %v1100, -inf
      %v1142 = vsel %vm1138, %v1117, -inf
      %v1143 = vsel %vm1139, %v1101, -inf
      %v1144 = vsel %vm1138, %v1118, -inf
      %v1145 = vsel %vm1139, %v1102, -inf
      %v1146 = vsel %vm1138, %v1119, -inf
      %v1147 = vsel %vm1139, %v1103, -inf
      %v1148 = vsel %vm1138, %v1120, -inf
      %v1149 = vsel %vm1139, %v1104, -inf
      %v1150 = vsel %vm1138, %v1121, -inf
      %v1151 = vsel %vm1139, %v1105, -inf
      %v1152 = vsel %vm1138, %v1122, -inf
      %v1153 = vsel %vm1139, %v1106, -inf
      %v1154 = vsel %vm1138, %v1123, -inf
      %v1155 = vsel %vm1139, %v1107, -inf
      %v1156 = vsel %vm1138, %v1124, -inf
      %v1157 = vsel %vm1139, %v1108, -inf
      %v1158 = vsel %vm1138, %v1125, -inf
      %v1159 = vsel %vm1139, %v1109, -inf
      %v1160 = vsel %vm1138, %v1126, -inf
      %v1161 = vsel %vm1139, %v1110, -inf
      %v1162 = vsel %vm1138, %v1127, -inf
      %v1163 = vsel %vm1139, %v1111, -inf
      %v1164 = vsel %vm1138, %v1128, -inf
      %v1165 = vsel %vm1139, %v1112, -inf
      %v1166 = vsel %vm1138, %v1129, -inf
      %v1167 = vsel %vm1139, %v1113, -inf
      %v1168 = vsel %vm1138, %v1130, -inf
      %v1169 = vsel %vm1139, %v1114, -inf
      %v1170 = vsel %vm1138, %v1131, -inf
      %v1171 = vsel %vm1139, %v1115, -inf
      %v1172 = vmax.f32 %v1035, %v1140
      %v1173 = vmax.f32 %v1036, %v1141
      %v1174 = vmax.f32 %v1037, %v1142
      %v1175 = vmax.f32 %v1038, %v1143
      %v1176 = vmax.f32 %v1039, %v1144
      %v1177 = vmax.f32 %v1040, %v1145
      %v1178 = vmax.f32 %v1041, %v1146
      %v1179 = vmax.f32 %v1042, %v1147
      %v1180 = vmax.f32 %v1043, %v1148
      %v1181 = vmax.f32 %v1044, %v1149
      %v1182 = vmax.f32 %v1045, %v1150
      %v1183 = vmax.f32 %v1046, %v1151
      %v1184 = vmax.f32 %v1047, %v1152
      %v1185 = vmax.f32 %v1048, %v1153
      %v1186 = vmax.f32 %v1049, %v1154
      %v1187 = vmax.f32 %v1050, %v1155
      %v1188 = vmax.f32 %v1051, %v1156
      %v1189 = vmax.f32 %v1052, %v1157
      %v1190 = vmax.f32 %v1053, %v1158
      %v1191 = vmax.f32 %v1054, %v1159
      %v1192 = vmax.f32 %v1055, %v1160
      %v1193 = vmax.f32 %v1056, %v1161
      %v1194 = vmax.f32 %v1057, %v1162
      %v1195 = vmax.f32 %v1058, %v1163
      %v1196 = vmax.f32 %v1059, %v1164
      %v1197 = vmax.f32 %v1060, %v1165
      %v1198 = vmax.f32 %v1061, %v1166
      %v1199 = vmax.f32 %v1062, %v1167
      %v1200 = vmax.f32 %v1063, %v1168
      %v1201 = vmax.f32 %v1064, %v1169
      %v1202 = vmax.f32 %v1065, %v1170
      %v1203 = vmax.f32 %v1066, %v1171
      %v1204 = vrot.slane %v873, 1
      %v1205 = vrot.slane %v901, 1
      %v1206 = vrot.slane %v903, 1
      %v1207 = vrot.slane %v905, 1
      %v1208 = vrot.slane %v907, 1
      %v1209 = vrot.slane %v909, 1
      %v1210 = vrot.slane %v911, 1
      %v1211 = vrot.slane %v913, 1
      %v1212 = vrot.slane %v915, 1
      %v1213 = vrot.slane %v917, 1
      %v1214 = vrot.slane %v919, 1
      %v1215 = vrot.slane %v921, 1
      %v1216 = vrot.slane %v923, 1
      %v1217 = vrot.slane %v925, 1
      %v1218 = vrot.slane %v899, 1
      %v1219 = vrot.slane %v871, 1
      %v1220 = vrot.slane %v874, 1
      %v1221 = vrot.slane %v902, 1
      %v1222 = vrot.slane %v904, 1
      %v1223 = vrot.slane %v906, 1
      %v1224 = vrot.slane %v908, 1
      %v1225 = vrot.slane %v910, 1
      %v1226 = vrot.slane %v912, 1
      %v1227 = vrot.slane %v914, 1
      %v1228 = vrot.slane %v916, 1
      %v1229 = vrot.slane %v918, 1
      %v1230 = vrot.slane %v920, 1
      %v1231 = vrot.slane %v922, 1
      %v1232 = vrot.slane %v924, 1
      %v1233 = vrot.slane %v926, 1
      %v1234 = vrot.slane %v900, 1
      %v1235 = vrot.slane %v872, 1
      %vm1236 = vcmp.lt.s32.totalorder %v960, 7
      %v1237 = vsel %vm1236, %v1204, %v1220
      %v1238 = vsel %vm1236, %v1205, %v1221
      %v1239 = vsel %vm1236, %v1206, %v1222
      %v1240 = vsel %vm1236, %v1207, %v1223
      %v1241 = vsel %vm1236, %v1208, %v1224
      %v1242 = vsel %vm1236, %v1209, %v1225
      %v1243 = vsel %vm1236, %v1210, %v1226
      %v1244 = vsel %vm1236, %v1211, %v1227
      %v1245 = vsel %vm1236, %v1212, %v1228
      %v1246 = vsel %vm1236, %v1213, %v1229
      %v1247 = vsel %vm1236, %v1214, %v1230
      %v1248 = vsel %vm1236, %v1215, %v1231
      %v1249 = vsel %vm1236, %v1216, %v1232
      %v1250 = vsel %vm1236, %v1217, %v1233
      %v1251 = vsel %vm1236, %v1218, %v1234
      %v1252 = vsel %vm1236, %v1219, %v1235
      %v1253 = vsel %vm1236, %v1220, %v1204
      %v1254 = vsel %vm1236, %v1221, %v1205
      %v1255 = vsel %vm1236, %v1222, %v1206
      %v1256 = vsel %vm1236, %v1223, %v1207
      %v1257 = vsel %vm1236, %v1224, %v1208
      %v1258 = vsel %vm1236, %v1225, %v1209
      %v1259 = vsel %vm1236, %v1226, %v1210
      %v1260 = vsel %vm1236, %v1227, %v1211
      %v1261 = vsel %vm1236, %v1228, %v1212
      %v1262 = vsel %vm1236, %v1229, %v1213
      %v1263 = vsel %vm1236, %v1230, %v1214
      %v1264 = vsel %vm1236, %v1231, %v1215
      %v1265 = vsel %vm1236, %v1232, %v1216
      %v1266 = vsel %vm1236, %v1233, %v1217
      %v1267 = vsel %vm1236, %v1234, %v1218
      %v1268 = vsel %vm1236, %v1235, %v1219
      %v1269 = vadd.s32 %v960, 1
      %v1270 = vadd.s32 %v994, 1
      %vm1271 = vcmp.ge.s32.totalorder %v1269, 0
      %vm1272 = vcmp.ge.s32.totalorder %v1270, 0
      %vm1273 = vcmp.le.s32.totalorder %v1269, 15
      %vm1274 = vcmp.le.s32.totalorder %v1270, 15
      %vm1275 = vmand %vm1271, %vm1273
      %vm1276 = vmand %vm1272, %vm1274
      %v1277 = vsel %vm1275, %v1237, -inf
      %v1278 = vsel %vm1276, %v1253, -inf
      %v1279 = vsel %vm1275, %v1238, -inf
      %v1280 = vsel %vm1276, %v1254, -inf
      %v1281 = vsel %vm1275, %v1239, -inf
      %v1282 = vsel %vm1276, %v1255, -inf
      %v1283 = vsel %vm1275, %v1240, -inf
      %v1284 = vsel %vm1276, %v1256, -inf
      %v1285 = vsel %vm1275, %v1241, -inf
      %v1286 = vsel %vm1276, %v1257, -inf
      %v1287 = vsel %vm1275, %v1242, -inf
      %v1288 = vsel %vm1276, %v1258, -inf
      %v1289 = vsel %vm1275, %v1243, -inf
      %v1290 = vsel %vm1276, %v1259, -inf
      %v1291 = vsel %vm1275, %v1244, -inf
      %v1292 = vsel %vm1276, %v1260, -inf
      %v1293 = vsel %vm1275, %v1245, -inf
      %v1294 = vsel %vm1276, %v1261, -inf
      %v1295 = vsel %vm1275, %v1246, -inf
      %v1296 = vsel %vm1276, %v1262, -inf
      %v1297 = vsel %vm1275, %v1247, -inf
      %v1298 = vsel %vm1276, %v1263, -inf
      %v1299 = vsel %vm1275, %v1248, -inf
      %v1300 = vsel %vm1276, %v1264, -inf
      %v1301 = vsel %vm1275, %v1249, -inf
      %v1302 = vsel %vm1276, %v1265, -inf
      %v1303 = vsel %vm1275, %v1250, -inf
      %v1304 = vsel %vm1276, %v1266, -inf
      %v1305 = vsel %vm1275, %v1251, -inf
      %v1306 = vsel %vm1276, %v1267, -inf
      %v1307 = vsel %vm1275, %v1252, -inf
      %v1308 = vsel %vm1276, %v1268, -inf
      %v1309 = vmax.f32 %v1172, %v1277
      %v1310 = vmax.f32 %v1173, %v1278
      %v1311 = vmax.f32 %v1174, %v1279
      %v1312 = vmax.f32 %v1175, %v1280
      %v1313 = vmax.f32 %v1176, %v1281
      %v1314 = vmax.f32 %v1177, %v1282
      %v1315 = vmax.f32 %v1178, %v1283
      %v1316 = vmax.f32 %v1179, %v1284
      %v1317 = vmax.f32 %v1180, %v1285
      %v1318 = vmax.f32 %v1181, %v1286
      %v1319 = vmax.f32 %v1182, %v1287
      %v1320 = vmax.f32 %v1183, %v1288
      %v1321 = vmax.f32 %v1184, %v1289
      %v1322 = vmax.f32 %v1185, %v1290
      %v1323 = vmax.f32 %v1186, %v1291
      %v1324 = vmax.f32 %v1187, %v1292
      %v1325 = vmax.f32 %v1188, %v1293
      %v1326 = vmax.f32 %v1189, %v1294
      %v1327 = vmax.f32 %v1190, %v1295
      %v1328 = vmax.f32 %v1191, %v1296
      %v1329 = vmax.f32 %v1192, %v1297
      %v1330 = vmax.f32 %v1193, %v1298
      %v1331 = vmax.f32 %v1194, %v1299
      %v1332 = vmax.f32 %v1195, %v1300
      %v1333 = vmax.f32 %v1196, %v1301
      %v1334 = vmax.f32 %v1197, %v1302
      %v1335 = vmax.f32 %v1198, %v1303
      %v1336 = vmax.f32 %v1199, %v1304
      %v1337 = vmax.f32 %v1200, %v1305
      %v1338 = vmax.f32 %v1201, %v1306
      %v1339 = vmax.f32 %v1202, %v1307
      %v1340 = vmax.f32 %v1203, %v1308
      %v1341 = vrot.slane %v873, 2
      %v1342 = vrot.slane %v901, 2
      %v1343 = vrot.slane %v903, 2
      %v1344 = vrot.slane %v905, 2
      %v1345 = vrot.slane %v907, 2
      %v1346 = vrot.slane %v909, 2
      %v1347 = vrot.slane %v911, 2
      %v1348 = vrot.slane %v913, 2
      %v1349 = vrot.slane %v915, 2
      %v1350 = vrot.slane %v917, 2
      %v1351 = vrot.slane %v919, 2
      %v1352 = vrot.slane %v921, 2
      %v1353 = vrot.slane %v923, 2
      %v1354 = vrot.slane %v925, 2
      %v1355 = vrot.slane %v899, 2
      %v1356 = vrot.slane %v871, 2
      %v1357 = vrot.slane %v874, 2
      %v1358 = vrot.slane %v902, 2
      %v1359 = vrot.slane %v904, 2
      %v1360 = vrot.slane %v906, 2
      %v1361 = vrot.slane %v908, 2
      %v1362 = vrot.slane %v910, 2
      %v1363 = vrot.slane %v912, 2
      %v1364 = vrot.slane %v914, 2
      %v1365 = vrot.slane %v916, 2
      %v1366 = vrot.slane %v918, 2
      %v1367 = vrot.slane %v920, 2
      %v1368 = vrot.slane %v922, 2
      %v1369 = vrot.slane %v924, 2
      %v1370 = vrot.slane %v926, 2
      %v1371 = vrot.slane %v900, 2
      %v1372 = vrot.slane %v872, 2
      %vm1373 = vcmp.lt.s32.totalorder %v960, 6
      %v1374 = vsel %vm1373, %v1341, %v1357
      %v1375 = vsel %vm1373, %v1342, %v1358
      %v1376 = vsel %vm1373, %v1343, %v1359
      %v1377 = vsel %vm1373, %v1344, %v1360
      %v1378 = vsel %vm1373, %v1345, %v1361
      %v1379 = vsel %vm1373, %v1346, %v1362
      %v1380 = vsel %vm1373, %v1347, %v1363
      %v1381 = vsel %vm1373, %v1348, %v1364
      %v1382 = vsel %vm1373, %v1349, %v1365
      %v1383 = vsel %vm1373, %v1350, %v1366
      %v1384 = vsel %vm1373, %v1351, %v1367
      %v1385 = vsel %vm1373, %v1352, %v1368
      %v1386 = vsel %vm1373, %v1353, %v1369
      %v1387 = vsel %vm1373, %v1354, %v1370
      %v1388 = vsel %vm1373, %v1355, %v1371
      %v1389 = vsel %vm1373, %v1356, %v1372
      %v1390 = vsel %vm1373, %v1357, %v1341
      %v1391 = vsel %vm1373, %v1358, %v1342
      %v1392 = vsel %vm1373, %v1359, %v1343
      %v1393 = vsel %vm1373, %v1360, %v1344
      %v1394 = vsel %vm1373, %v1361, %v1345
      %v1395 = vsel %vm1373, %v1362, %v1346
      %v1396 = vsel %vm1373, %v1363, %v1347
      %v1397 = vsel %vm1373, %v1364, %v1348
      %v1398 = vsel %vm1373, %v1365, %v1349
      %v1399 = vsel %vm1373, %v1366, %v1350
      %v1400 = vsel %vm1373, %v1367, %v1351
      %v1401 = vsel %vm1373, %v1368, %v1352
      %v1402 = vsel %vm1373, %v1369, %v1353
      %v1403 = vsel %vm1373, %v1370, %v1354
      %v1404 = vsel %vm1373, %v1371, %v1355
      %v1405 = vsel %vm1373, %v1372, %v1356
      %v1406 = vadd.s32 %v960, 2
      %v1407 = vadd.s32 %v994, 2
      %vm1408 = vcmp.ge.s32.totalorder %v1406, 0
      %vm1409 = vcmp.ge.s32.totalorder %v1407, 0
      %vm1410 = vcmp.le.s32.totalorder %v1406, 15
      %vm1411 = vcmp.le.s32.totalorder %v1407, 15
      %vm1412 = vmand %vm1408, %vm1410
      %vm1413 = vmand %vm1409, %vm1411
      %v1414 = vsel %vm1412, %v1374, -inf
      %v1415 = vsel %vm1413, %v1390, -inf
      %v1416 = vsel %vm1412, %v1375, -inf
      %v1417 = vsel %vm1413, %v1391, -inf
      %v1418 = vsel %vm1412, %v1376, -inf
      %v1419 = vsel %vm1413, %v1392, -inf
      %v1420 = vsel %vm1412, %v1377, -inf
      %v1421 = vsel %vm1413, %v1393, -inf
      %v1422 = vsel %vm1412, %v1378, -inf
      %v1423 = vsel %vm1413, %v1394, -inf
      %v1424 = vsel %vm1412, %v1379, -inf
      %v1425 = vsel %vm1413, %v1395, -inf
      %v1426 = vsel %vm1412, %v1380, -inf
      %v1427 = vsel %vm1413, %v1396, -inf
      %v1428 = vsel %vm1412, %v1381, -inf
      %v1429 = vsel %vm1413, %v1397, -inf
      %v1430 = vsel %vm1412, %v1382, -inf
      %v1431 = vsel %vm1413, %v1398, -inf
      %v1432 = vsel %vm1412, %v1383, -inf
      %v1433 = vsel %vm1413, %v1399, -inf
      %v1434 = vsel %vm1412, %v1384, -inf
      %v1435 = vsel %vm1413, %v1400, -inf
      %v1436 = vsel %vm1412, %v1385, -inf
      %v1437 = vsel %vm1413, %v1401, -inf
      %v1438 = vsel %vm1412, %v1386, -inf
      %v1439 = vsel %vm1413, %v1402, -inf
      %v1440 = vsel %vm1412, %v1387, -inf
      %v1441 = vsel %vm1413, %v1403, -inf
      %v1442 = vsel %vm1412, %v1388, -inf
      %v1443 = vsel %vm1413, %v1404, -inf
      %v1444 = vsel %vm1412, %v1389, -inf
      %v1445 = vsel %vm1413, %v1405, -inf
      %v1446 = vmax.f32 %v1309, %v1414
      %v1447 = vmax.f32 %v1310, %v1415
      %v1448 = vmax.f32 %v1311, %v1416
      %v1449 = vmax.f32 %v1312, %v1417
      %v1450 = vmax.f32 %v1313, %v1418
      %v1451 = vmax.f32 %v1314, %v1419
      %v1452 = vmax.f32 %v1315, %v1420
      %v1453 = vmax.f32 %v1316, %v1421
      %v1454 = vmax.f32 %v1317, %v1422
      %v1455 = vmax.f32 %v1318, %v1423
      %v1456 = vmax.f32 %v1319, %v1424
      %v1457 = vmax.f32 %v1320, %v1425
      %v1458 = vmax.f32 %v1321, %v1426
      %v1459 = vmax.f32 %v1322, %v1427
      %v1460 = vmax.f32 %v1323, %v1428
      %v1461 = vmax.f32 %v1324, %v1429
      %v1462 = vmax.f32 %v1325, %v1430
      %v1463 = vmax.f32 %v1326, %v1431
      %v1464 = vmax.f32 %v1327, %v1432
      %v1465 = vmax.f32 %v1328, %v1433
      %v1466 = vmax.f32 %v1329, %v1434
      %v1467 = vmax.f32 %v1330, %v1435
      %v1468 = vmax.f32 %v1331, %v1436
      %v1469 = vmax.f32 %v1332, %v1437
      %v1470 = vmax.f32 %v1333, %v1438
      %v1471 = vmax.f32 %v1334, %v1439
      %v1472 = vmax.f32 %v1335, %v1440
      %v1473 = vmax.f32 %v1336, %v1441
      %v1474 = vmax.f32 %v1337, %v1442
      %v1475 = vmax.f32 %v1338, %v1443
      %v1476 = vmax.f32 %v1339, %v1444
      %v1477 = vmax.f32 %v1340, %v1445
      %v1478 = vmax.f32 %v1450, %v1446
      %v1479 = vmax.f32 %v1451, %v1447
      %v1480 = vmax.f32 %v1452, %v1448
      %v1481 = vmax.f32 %v1453, %v1449
      %v1482 = vmax.f32 %v1454, %v1450
      %v1483 = vmax.f32 %v1455, %v1451
      %v1484 = vmax.f32 %v1456, %v1452
      %v1485 = vmax.f32 %v1457, %v1453
      %v1486 = vmax.f32 %v1458, %v1454
      %v1487 = vmax.f32 %v1459, %v1455
      %v1488 = vmax.f32 %v1460, %v1456
      %v1489 = vmax.f32 %v1461, %v1457
      %v1490 = vmax.f32 %v1462, %v1458
      %v1491 = vmax.f32 %v1463, %v1459
      %v1492 = vmax.f32 %v1464, %v1460
      %v1493 = vmax.f32 %v1465, %v1461
      %v1494 = vmax.f32 %v1466, %v1462
      %v1495 = vmax.f32 %v1467, %v1463
      %v1496 = vmax.f32 %v1468, %v1464
      %v1497 = vmax.f32 %v1469, %v1465
      %v1498 = vmax.f32 %v1470, %v1466
      %v1499 = vmax.f32 %v1471, %v1467
      %v1500 = vmax.f32 %v1472, %v1468
      %v1501 = vmax.f32 %v1473, %v1469
      %v1502 = vmax.f32 %v1474, %v1470
      %v1503 = vmax.f32 %v1475, %v1471
      %v1504 = vmax.f32 %v1476, %v1472
      %v1505 = vmax.f32 %v1477, %v1473
      %v1506 = vmax.f32 %v1448, %v1446
      %v1507 = vmax.f32 %v1449, %v1447
      %v1508 = vmax.f32 %v1478, %v1448
      %v1509 = vmax.f32 %v1479, %v1449
      %v1510 = vmax.f32 %v1480, %v1450
      %v1511 = vmax.f32 %v1481, %v1451
      %v1512 = vmax.f32 %v1482, %v1452
      %v1513 = vmax.f32 %v1483, %v1453
      %v1514 = vmax.f32 %v1484, %v1454
      %v1515 = vmax.f32 %v1485, %v1455
      %v1516 = vmax.f32 %v1486, %v1456
      %v1517 = vmax.f32 %v1487, %v1457
      %v1518 = vmax.f32 %v1488, %v1458
      %v1519 = vmax.f32 %v1489, %v1459
      %v1520 = vmax.f32 %v1490, %v1460
      %v1521 = vmax.f32 %v1491, %v1461
      %v1522 = vmax.f32 %v1492, %v1462
      %v1523 = vmax.f32 %v1493, %v1463
      %v1524 = vmax.f32 %v1494, %v1464
      %v1525 = vmax.f32 %v1495, %v1465
      %v1526 = vmax.f32 %v1496, %v1466
      %v1527 = vmax.f32 %v1497, %v1467
      %v1528 = vmax.f32 %v1498, %v1468
      %v1529 = vmax.f32 %v1499, %v1469
      %v1530 = vmax.f32 %v1500, %v1470
      %v1531 = vmax.f32 %v1501, %v1471
      %v1532 = vmax.f32 %v1502, %v1472
      %v1533 = vmax.f32 %v1503, %v1473
      %v1534 = vmax.f32 %v1504, %v1474
      %v1535 = vmax.f32 %v1505, %v1475
      %v1536 = vmax.f32 %v1506, %v1450
      %v1537 = vmax.f32 %v1507, %v1451
      %v1538 = vmax.f32 %v1508, %v1452
      %v1539 = vmax.f32 %v1509, %v1453
      %v1540 = vmax.f32 %v1510, %v1454
      %v1541 = vmax.f32 %v1511, %v1455
      %v1542 = vmax.f32 %v1512, %v1456
      %v1543 = vmax.f32 %v1513, %v1457
      %v1544 = vmax.f32 %v1514, %v1458
      %v1545 = vmax.f32 %v1515, %v1459
      %v1546 = vmax.f32 %v1516, %v1460
      %v1547 = vmax.f32 %v1517, %v1461
      %v1548 = vmax.f32 %v1518, %v1462
      %v1549 = vmax.f32 %v1519, %v1463
      %v1550 = vmax.f32 %v1520, %v1464
      %v1551 = vmax.f32 %v1521, %v1465
      %v1552 = vmax.f32 %v1522, %v1466
      %v1553 = vmax.f32 %v1523, %v1467
      %v1554 = vmax.f32 %v1524, %v1468
      %v1555 = vmax.f32 %v1525, %v1469
      %v1556 = vmax.f32 %v1526, %v1470
      %v1557 = vmax.f32 %v1527, %v1471
      %v1558 = vmax.f32 %v1528, %v1472
      %v1559 = vmax.f32 %v1529, %v1473
      %v1560 = vmax.f32 %v1530, %v1474
      %v1561 = vmax.f32 %v1531, %v1475
      %v1562 = vmax.f32 %v1532, %v1476
      %v1563 = vmax.f32 %v1533, %v1477
      %v1564 = vmax.f32 %v1536, %v1452
      %v1565 = vmax.f32 %v1537, %v1453
      %v1566 = vmax.f32 %v1538, %v1454
      %v1567 = vmax.f32 %v1539, %v1455
      %v1568 = vmax.f32 %v1540, %v1456
      %v1569 = vmax.f32 %v1541, %v1457
      %v1570 = vmax.f32 %v1542, %v1458
      %v1571 = vmax.f32 %v1543, %v1459
      %v1572 = vmax.f32 %v1544, %v1460
      %v1573 = vmax.f32 %v1545, %v1461
      %v1574 = vmax.f32 %v1546, %v1462
      %v1575 = vmax.f32 %v1547, %v1463
      %v1576 = vmax.f32 %v1548, %v1464
      %v1577 = vmax.f32 %v1549, %v1465
      %v1578 = vmax.f32 %v1550, %v1466
      %v1579 = vmax.f32 %v1551, %v1467
      %v1580 = vmax.f32 %v1552, %v1468
      %v1581 = vmax.f32 %v1553, %v1469
      %v1582 = vmax.f32 %v1554, %v1470
      %v1583 = vmax.f32 %v1555, %v1471
      %v1584 = vmax.f32 %v1556, %v1472
      %v1585 = vmax.f32 %v1557, %v1473
      %v1586 = vmax.f32 %v1558, %v1474
      %v1587 = vmax.f32 %v1559, %v1475
      %v1588 = vmax.f32 %v1560, %v1476
      %v1589 = vmax.f32 %v1561, %v1477
      %v1590 = vrot.slane %v1536, 6
      %v1591 = vrot.slane %v1564, 6
      %v1592 = vrot.slane %v1566, 6
      %v1593 = vrot.slane %v1568, 6
      %v1594 = vrot.slane %v1570, 6
      %v1595 = vrot.slane %v1572, 6
      %v1596 = vrot.slane %v1574, 6
      %v1597 = vrot.slane %v1576, 6
      %v1598 = vrot.slane %v1578, 6
      %v1599 = vrot.slane %v1580, 6
      %v1600 = vrot.slane %v1582, 6
      %v1601 = vrot.slane %v1584, 6
      %v1602 = vrot.slane %v1586, 6
      %v1603 = vrot.slane %v1588, 6
      %v1604 = vrot.slane %v1562, 6
      %v1605 = vrot.slane %v1534, 6
      %v1606 = vrot.slane %v1537, 6
      %v1607 = vrot.slane %v1565, 6
      %v1608 = vrot.slane %v1567, 6
      %v1609 = vrot.slane %v1569, 6
      %v1610 = vrot.slane %v1571, 6
      %v1611 = vrot.slane %v1573, 6
      %v1612 = vrot.slane %v1575, 6
      %v1613 = vrot.slane %v1577, 6
      %v1614 = vrot.slane %v1579, 6
      %v1615 = vrot.slane %v1581, 6
      %v1616 = vrot.slane %v1583, 6
      %v1617 = vrot.slane %v1585, 6
      %v1618 = vrot.slane %v1587, 6
      %v1619 = vrot.slane %v1589, 6
      %v1620 = vrot.slane %v1563, 6
      %v1621 = vrot.slane %v1535, 6
      %v1622 = vsel %vm961, %v1590, %v1606
      %v1623 = vsel %vm961, %v1591, %v1607
      %v1624 = vsel %vm961, %v1592, %v1608
      %v1625 = vsel %vm961, %v1593, %v1609
      %v1626 = vsel %vm961, %v1594, %v1610
      %v1627 = vsel %vm961, %v1595, %v1611
      %v1628 = vsel %vm961, %v1596, %v1612
      %v1629 = vsel %vm961, %v1597, %v1613
      %v1630 = vsel %vm961, %v1598, %v1614
      %v1631 = vsel %vm961, %v1599, %v1615
      %v1632 = vsel %vm961, %v1600, %v1616
      %v1633 = vsel %vm961, %v1601, %v1617
      %v1634 = vsel %vm961, %v1602, %v1618
      %v1635 = vsel %vm961, %v1603, %v1619
      %v1636 = vsel %vm961, %v1604, %v1620
      %v1637 = vsel %vm961, %v1605, %v1621
      %v1638 = vsel %vm961, %v1606, %v1590
      %v1639 = vsel %vm961, %v1607, %v1591
      %v1640 = vsel %vm961, %v1608, %v1592
      %v1641 = vsel %vm961, %v1609, %v1593
      %v1642 = vsel %vm961, %v1610, %v1594
      %v1643 = vsel %vm961, %v1611, %v1595
      %v1644 = vsel %vm961, %v1612, %v1596
      %v1645 = vsel %vm961, %v1613, %v1597
      %v1646 = vsel %vm961, %v1614, %v1598
      %v1647 = vsel %vm961, %v1615, %v1599
      %v1648 = vsel %vm961, %v1616, %v1600
      %v1649 = vsel %vm961, %v1617, %v1601
      %v1650 = vsel %vm961, %v1618, %v1602
      %v1651 = vsel %vm961, %v1619, %v1603
      %v1652 = vsel %vm961, %v1620, %v1604
      %v1653 = vsel %vm961, %v1621, %v1605
      %v1654 = vsel %vm1001, %v1638, -inf
      %v1655 = vsel %vm1002, %v1622, -inf
      %v1656 = vsel %vm1001, %v1639, -inf
      %v1657 = vsel %vm1002, %v1623, -inf
      %v1658 = vsel %vm1001, %v1640, -inf
      %v1659 = vsel %vm1002, %v1624, -inf
      %v1660 = vsel %vm1001, %v1641, -inf
      %v1661 = vsel %vm1002, %v1625, -inf
      %v1662 = vsel %vm1001, %v1642, -inf
      %v1663 = vsel %vm1002, %v1626, -inf
      %v1664 = vsel %vm1001, %v1643, -inf
      %v1665 = vsel %vm1002, %v1627, -inf
      %v1666 = vsel %vm1001, %v1644, -inf
      %v1667 = vsel %vm1002, %v1628, -inf
      %v1668 = vsel %vm1001, %v1645, -inf
      %v1669 = vsel %vm1002, %v1629, -inf
      %v1670 = vsel %vm1001, %v1646, -inf
      %v1671 = vsel %vm1002, %v1630, -inf
      %v1672 = vsel %vm1001, %v1647, -inf
      %v1673 = vsel %vm1002, %v1631, -inf
      %v1674 = vsel %vm1001, %v1648, -inf
      %v1675 = vsel %vm1002, %v1632, -inf
      %v1676 = vsel %vm1001, %v1649, -inf
      %v1677 = vsel %vm1002, %v1633, -inf
      %v1678 = vsel %vm1001, %v1650, -inf
      %v1679 = vsel %vm1002, %v1634, -inf
      %v1680 = vsel %vm1001, %v1651, -inf
      %v1681 = vsel %vm1002, %v1635, -inf
      %v1682 = vsel %vm1001, %v1652, -inf
      %v1683 = vsel %vm1002, %v1636, -inf
      %v1684 = vsel %vm1001, %v1653, -inf
      %v1685 = vsel %vm1002, %v1637, -inf
      %v1686 = vmax.f32 %v1536, %v1654
      %v1687 = vmax.f32 %v1537, %v1655
      %v1688 = vmax.f32 %v1564, %v1656
      %v1689 = vmax.f32 %v1565, %v1657
      %v1690 = vmax.f32 %v1566, %v1658
      %v1691 = vmax.f32 %v1567, %v1659
      %v1692 = vmax.f32 %v1568, %v1660
      %v1693 = vmax.f32 %v1569, %v1661
      %v1694 = vmax.f32 %v1570, %v1662
      %v1695 = vmax.f32 %v1571, %v1663
      %v1696 = vmax.f32 %v1572, %v1664
      %v1697 = vmax.f32 %v1573, %v1665
      %v1698 = vmax.f32 %v1574, %v1666
      %v1699 = vmax.f32 %v1575, %v1667
      %v1700 = vmax.f32 %v1576, %v1668
      %v1701 = vmax.f32 %v1577, %v1669
      %v1702 = vmax.f32 %v1578, %v1670
      %v1703 = vmax.f32 %v1579, %v1671
      %v1704 = vmax.f32 %v1580, %v1672
      %v1705 = vmax.f32 %v1581, %v1673
      %v1706 = vmax.f32 %v1582, %v1674
      %v1707 = vmax.f32 %v1583, %v1675
      %v1708 = vmax.f32 %v1584, %v1676
      %v1709 = vmax.f32 %v1585, %v1677
      %v1710 = vmax.f32 %v1586, %v1678
      %v1711 = vmax.f32 %v1587, %v1679
      %v1712 = vmax.f32 %v1588, %v1680
      %v1713 = vmax.f32 %v1589, %v1681
      %v1714 = vmax.f32 %v1562, %v1682
      %v1715 = vmax.f32 %v1563, %v1683
      %v1716 = vmax.f32 %v1534, %v1684
      %v1717 = vmax.f32 %v1535, %v1685
      %v1718 = vrot.slane %v1536, 7
      %v1719 = vrot.slane %v1564, 7
      %v1720 = vrot.slane %v1566, 7
      %v1721 = vrot.slane %v1568, 7
      %v1722 = vrot.slane %v1570, 7
      %v1723 = vrot.slane %v1572, 7
      %v1724 = vrot.slane %v1574, 7
      %v1725 = vrot.slane %v1576, 7
      %v1726 = vrot.slane %v1578, 7
      %v1727 = vrot.slane %v1580, 7
      %v1728 = vrot.slane %v1582, 7
      %v1729 = vrot.slane %v1584, 7
      %v1730 = vrot.slane %v1586, 7
      %v1731 = vrot.slane %v1588, 7
      %v1732 = vrot.slane %v1562, 7
      %v1733 = vrot.slane %v1534, 7
      %v1734 = vrot.slane %v1537, 7
      %v1735 = vrot.slane %v1565, 7
      %v1736 = vrot.slane %v1567, 7
      %v1737 = vrot.slane %v1569, 7
      %v1738 = vrot.slane %v1571, 7
      %v1739 = vrot.slane %v1573, 7
      %v1740 = vrot.slane %v1575, 7
      %v1741 = vrot.slane %v1577, 7
      %v1742 = vrot.slane %v1579, 7
      %v1743 = vrot.slane %v1581, 7
      %v1744 = vrot.slane %v1583, 7
      %v1745 = vrot.slane %v1585, 7
      %v1746 = vrot.slane %v1587, 7
      %v1747 = vrot.slane %v1589, 7
      %v1748 = vrot.slane %v1563, 7
      %v1749 = vrot.slane %v1535, 7
      %v1750 = vsel %vm1099, %v1718, %v1734
      %v1751 = vsel %vm1099, %v1719, %v1735
      %v1752 = vsel %vm1099, %v1720, %v1736
      %v1753 = vsel %vm1099, %v1721, %v1737
      %v1754 = vsel %vm1099, %v1722, %v1738
      %v1755 = vsel %vm1099, %v1723, %v1739
      %v1756 = vsel %vm1099, %v1724, %v1740
      %v1757 = vsel %vm1099, %v1725, %v1741
      %v1758 = vsel %vm1099, %v1726, %v1742
      %v1759 = vsel %vm1099, %v1727, %v1743
      %v1760 = vsel %vm1099, %v1728, %v1744
      %v1761 = vsel %vm1099, %v1729, %v1745
      %v1762 = vsel %vm1099, %v1730, %v1746
      %v1763 = vsel %vm1099, %v1731, %v1747
      %v1764 = vsel %vm1099, %v1732, %v1748
      %v1765 = vsel %vm1099, %v1733, %v1749
      %v1766 = vsel %vm1099, %v1734, %v1718
      %v1767 = vsel %vm1099, %v1735, %v1719
      %v1768 = vsel %vm1099, %v1736, %v1720
      %v1769 = vsel %vm1099, %v1737, %v1721
      %v1770 = vsel %vm1099, %v1738, %v1722
      %v1771 = vsel %vm1099, %v1739, %v1723
      %v1772 = vsel %vm1099, %v1740, %v1724
      %v1773 = vsel %vm1099, %v1741, %v1725
      %v1774 = vsel %vm1099, %v1742, %v1726
      %v1775 = vsel %vm1099, %v1743, %v1727
      %v1776 = vsel %vm1099, %v1744, %v1728
      %v1777 = vsel %vm1099, %v1745, %v1729
      %v1778 = vsel %vm1099, %v1746, %v1730
      %v1779 = vsel %vm1099, %v1747, %v1731
      %v1780 = vsel %vm1099, %v1748, %v1732
      %v1781 = vsel %vm1099, %v1749, %v1733
      %v1782 = vsel %vm1138, %v1766, -inf
      %v1783 = vsel %vm1139, %v1750, -inf
      %v1784 = vsel %vm1138, %v1767, -inf
      %v1785 = vsel %vm1139, %v1751, -inf
      %v1786 = vsel %vm1138, %v1768, -inf
      %v1787 = vsel %vm1139, %v1752, -inf
      %v1788 = vsel %vm1138, %v1769, -inf
      %v1789 = vsel %vm1139, %v1753, -inf
      %v1790 = vsel %vm1138, %v1770, -inf
      %v1791 = vsel %vm1139, %v1754, -inf
      %v1792 = vsel %vm1138, %v1771, -inf
      %v1793 = vsel %vm1139, %v1755, -inf
      %v1794 = vsel %vm1138, %v1772, -inf
      %v1795 = vsel %vm1139, %v1756, -inf
      %v1796 = vsel %vm1138, %v1773, -inf
      %v1797 = vsel %vm1139, %v1757, -inf
      %v1798 = vsel %vm1138, %v1774, -inf
      %v1799 = vsel %vm1139, %v1758, -inf
      %v1800 = vsel %vm1138, %v1775, -inf
      %v1801 = vsel %vm1139, %v1759, -inf
      %v1802 = vsel %vm1138, %v1776, -inf
      %v1803 = vsel %vm1139, %v1760, -inf
      %v1804 = vsel %vm1138, %v1777, -inf
      %v1805 = vsel %vm1139, %v1761, -inf
      %v1806 = vsel %vm1138, %v1778, -inf
      %v1807 = vsel %vm1139, %v1762, -inf
      %v1808 = vsel %vm1138, %v1779, -inf
      %v1809 = vsel %vm1139, %v1763, -inf
      %v1810 = vsel %vm1138, %v1780, -inf
      %v1811 = vsel %vm1139, %v1764, -inf
      %v1812 = vsel %vm1138, %v1781, -inf
      %v1813 = vsel %vm1139, %v1765, -inf
      %v1814 = vmax.f32 %v1686, %v1782
      %v1815 = vmax.f32 %v1687, %v1783
      %v1816 = vmax.f32 %v1688, %v1784
      %v1817 = vmax.f32 %v1689, %v1785
      %v1818 = vmax.f32 %v1690, %v1786
      %v1819 = vmax.f32 %v1691, %v1787
      %v1820 = vmax.f32 %v1692, %v1788
      %v1821 = vmax.f32 %v1693, %v1789
      %v1822 = vmax.f32 %v1694, %v1790
      %v1823 = vmax.f32 %v1695, %v1791
      %v1824 = vmax.f32 %v1696, %v1792
      %v1825 = vmax.f32 %v1697, %v1793
      %v1826 = vmax.f32 %v1698, %v1794
      %v1827 = vmax.f32 %v1699, %v1795
      %v1828 = vmax.f32 %v1700, %v1796
      %v1829 = vmax.f32 %v1701, %v1797
      %v1830 = vmax.f32 %v1702, %v1798
      %v1831 = vmax.f32 %v1703, %v1799
      %v1832 = vmax.f32 %v1704, %v1800
      %v1833 = vmax.f32 %v1705, %v1801
      %v1834 = vmax.f32 %v1706, %v1802
      %v1835 = vmax.f32 %v1707, %v1803
      %v1836 = vmax.f32 %v1708, %v1804
      %v1837 = vmax.f32 %v1709, %v1805
      %v1838 = vmax.f32 %v1710, %v1806
      %v1839 = vmax.f32 %v1711, %v1807
      %v1840 = vmax.f32 %v1712, %v1808
      %v1841 = vmax.f32 %v1713, %v1809
      %v1842 = vmax.f32 %v1714, %v1810
      %v1843 = vmax.f32 %v1715, %v1811
      %v1844 = vmax.f32 %v1716, %v1812
      %v1845 = vmax.f32 %v1717, %v1813
      %v1846 = vrot.slane %v1536, 1
      %v1847 = vrot.slane %v1564, 1
      %v1848 = vrot.slane %v1566, 1
      %v1849 = vrot.slane %v1568, 1
      %v1850 = vrot.slane %v1570, 1
      %v1851 = vrot.slane %v1572, 1
      %v1852 = vrot.slane %v1574, 1
      %v1853 = vrot.slane %v1576, 1
      %v1854 = vrot.slane %v1578, 1
      %v1855 = vrot.slane %v1580, 1
      %v1856 = vrot.slane %v1582, 1
      %v1857 = vrot.slane %v1584, 1
      %v1858 = vrot.slane %v1586, 1
      %v1859 = vrot.slane %v1588, 1
      %v1860 = vrot.slane %v1562, 1
      %v1861 = vrot.slane %v1534, 1
      %v1862 = vrot.slane %v1537, 1
      %v1863 = vrot.slane %v1565, 1
      %v1864 = vrot.slane %v1567, 1
      %v1865 = vrot.slane %v1569, 1
      %v1866 = vrot.slane %v1571, 1
      %v1867 = vrot.slane %v1573, 1
      %v1868 = vrot.slane %v1575, 1
      %v1869 = vrot.slane %v1577, 1
      %v1870 = vrot.slane %v1579, 1
      %v1871 = vrot.slane %v1581, 1
      %v1872 = vrot.slane %v1583, 1
      %v1873 = vrot.slane %v1585, 1
      %v1874 = vrot.slane %v1587, 1
      %v1875 = vrot.slane %v1589, 1
      %v1876 = vrot.slane %v1563, 1
      %v1877 = vrot.slane %v1535, 1
      %v1878 = vsel %vm1236, %v1846, %v1862
      %v1879 = vsel %vm1236, %v1847, %v1863
      %v1880 = vsel %vm1236, %v1848, %v1864
      %v1881 = vsel %vm1236, %v1849, %v1865
      %v1882 = vsel %vm1236, %v1850, %v1866
      %v1883 = vsel %vm1236, %v1851, %v1867
      %v1884 = vsel %vm1236, %v1852, %v1868
      %v1885 = vsel %vm1236, %v1853, %v1869
      %v1886 = vsel %vm1236, %v1854, %v1870
      %v1887 = vsel %vm1236, %v1855, %v1871
      %v1888 = vsel %vm1236, %v1856, %v1872
      %v1889 = vsel %vm1236, %v1857, %v1873
      %v1890 = vsel %vm1236, %v1858, %v1874
      %v1891 = vsel %vm1236, %v1859, %v1875
      %v1892 = vsel %vm1236, %v1860, %v1876
      %v1893 = vsel %vm1236, %v1861, %v1877
      %v1894 = vsel %vm1236, %v1862, %v1846
      %v1895 = vsel %vm1236, %v1863, %v1847
      %v1896 = vsel %vm1236, %v1864, %v1848
      %v1897 = vsel %vm1236, %v1865, %v1849
      %v1898 = vsel %vm1236, %v1866, %v1850
      %v1899 = vsel %vm1236, %v1867, %v1851
      %v1900 = vsel %vm1236, %v1868, %v1852
      %v1901 = vsel %vm1236, %v1869, %v1853
      %v1902 = vsel %vm1236, %v1870, %v1854
      %v1903 = vsel %vm1236, %v1871, %v1855
      %v1904 = vsel %vm1236, %v1872, %v1856
      %v1905 = vsel %vm1236, %v1873, %v1857
      %v1906 = vsel %vm1236, %v1874, %v1858
      %v1907 = vsel %vm1236, %v1875, %v1859
      %v1908 = vsel %vm1236, %v1876, %v1860
      %v1909 = vsel %vm1236, %v1877, %v1861
      %v1910 = vsel %vm1275, %v1878, -inf
      %v1911 = vsel %vm1276, %v1894, -inf
      %v1912 = vsel %vm1275, %v1879, -inf
      %v1913 = vsel %vm1276, %v1895, -inf
      %v1914 = vsel %vm1275, %v1880, -inf
      %v1915 = vsel %vm1276, %v1896, -inf
      %v1916 = vsel %vm1275, %v1881, -inf
      %v1917 = vsel %vm1276, %v1897, -inf
      %v1918 = vsel %vm1275, %v1882, -inf
      %v1919 = vsel %vm1276, %v1898, -inf
      %v1920 = vsel %vm1275, %v1883, -inf
      %v1921 = vsel %vm1276, %v1899, -inf
      %v1922 = vsel %vm1275, %v1884, -inf
      %v1923 = vsel %vm1276, %v1900, -inf
      %v1924 = vsel %vm1275, %v1885, -inf
      %v1925 = vsel %vm1276, %v1901, -inf
      %v1926 = vsel %vm1275, %v1886, -inf
      %v1927 = vsel %vm1276, %v1902, -inf
      %v1928 = vsel %vm1275, %v1887, -inf
      %v1929 = vsel %vm1276, %v1903, -inf
      %v1930 = vsel %vm1275, %v1888, -inf
      %v1931 = vsel %vm1276, %v1904, -inf
      %v1932 = vsel %vm1275, %v1889, -inf
      %v1933 = vsel %vm1276, %v1905, -inf
      %v1934 = vsel %vm1275, %v1890, -inf
      %v1935 = vsel %vm1276, %v1906, -inf
      %v1936 = vsel %vm1275, %v1891, -inf
      %v1937 = vsel %vm1276, %v1907, -inf
      %v1938 = vsel %vm1275, %v1892, -inf
      %v1939 = vsel %vm1276, %v1908, -inf
      %v1940 = vsel %vm1275, %v1893, -inf
      %v1941 = vsel %vm1276, %v1909, -inf
      %v1942 = vmax.f32 %v1814, %v1910
      %v1943 = vmax.f32 %v1815, %v1911
      %v1944 = vmax.f32 %v1816, %v1912
      %v1945 = vmax.f32 %v1817, %v1913
      %v1946 = vmax.f32 %v1818, %v1914
      %v1947 = vmax.f32 %v1819, %v1915
      %v1948 = vmax.f32 %v1820, %v1916
      %v1949 = vmax.f32 %v1821, %v1917
      %v1950 = vmax.f32 %v1822, %v1918
      %v1951 = vmax.f32 %v1823, %v1919
      %v1952 = vmax.f32 %v1824, %v1920
      %v1953 = vmax.f32 %v1825, %v1921
      %v1954 = vmax.f32 %v1826, %v1922
      %v1955 = vmax.f32 %v1827, %v1923
      %v1956 = vmax.f32 %v1828, %v1924
      %v1957 = vmax.f32 %v1829, %v1925
      %v1958 = vmax.f32 %v1830, %v1926
      %v1959 = vmax.f32 %v1831, %v1927
      %v1960 = vmax.f32 %v1832, %v1928
      %v1961 = vmax.f32 %v1833, %v1929
      %v1962 = vmax.f32 %v1834, %v1930
      %v1963 = vmax.f32 %v1835, %v1931
      %v1964 = vmax.f32 %v1836, %v1932
      %v1965 = vmax.f32 %v1837, %v1933
      %v1966 = vmax.f32 %v1838, %v1934
      %v1967 = vmax.f32 %v1839, %v1935
      %v1968 = vmax.f32 %v1840, %v1936
      %v1969 = vmax.f32 %v1841, %v1937
      %v1970 = vmax.f32 %v1842, %v1938
      %v1971 = vmax.f32 %v1843, %v1939
      %v1972 = vmax.f32 %v1844, %v1940
      %v1973 = vmax.f32 %v1845, %v1941
      %v1974 = vrot.slane %v1536, 2
      %v1975 = vrot.slane %v1564, 2
      %v1976 = vrot.slane %v1566, 2
      %v1977 = vrot.slane %v1568, 2
      %v1978 = vrot.slane %v1570, 2
      %v1979 = vrot.slane %v1572, 2
      %v1980 = vrot.slane %v1574, 2
      %v1981 = vrot.slane %v1576, 2
      %v1982 = vrot.slane %v1578, 2
      %v1983 = vrot.slane %v1580, 2
      %v1984 = vrot.slane %v1582, 2
      %v1985 = vrot.slane %v1584, 2
      %v1986 = vrot.slane %v1586, 2
      %v1987 = vrot.slane %v1588, 2
      %v1988 = vrot.slane %v1562, 2
      %v1989 = vrot.slane %v1534, 2
      %v1990 = vrot.slane %v1537, 2
      %v1991 = vrot.slane %v1565, 2
      %v1992 = vrot.slane %v1567, 2
      %v1993 = vrot.slane %v1569, 2
      %v1994 = vrot.slane %v1571, 2
      %v1995 = vrot.slane %v1573, 2
      %v1996 = vrot.slane %v1575, 2
      %v1997 = vrot.slane %v1577, 2
      %v1998 = vrot.slane %v1579, 2
      %v1999 = vrot.slane %v1581, 2
      %v2000 = vrot.slane %v1583, 2
      %v2001 = vrot.slane %v1585, 2
      %v2002 = vrot.slane %v1587, 2
      %v2003 = vrot.slane %v1589, 2
      %v2004 = vrot.slane %v1563, 2
      %v2005 = vrot.slane %v1535, 2
      %v2006 = vsel %vm1373, %v1974, %v1990
      %v2007 = vsel %vm1373, %v1975, %v1991
      %v2008 = vsel %vm1373, %v1976, %v1992
      %v2009 = vsel %vm1373, %v1977, %v1993
      %v2010 = vsel %vm1373, %v1978, %v1994
      %v2011 = vsel %vm1373, %v1979, %v1995
      %v2012 = vsel %vm1373, %v1980, %v1996
      %v2013 = vsel %vm1373, %v1981, %v1997
      %v2014 = vsel %vm1373, %v1982, %v1998
      %v2015 = vsel %vm1373, %v1983, %v1999
      %v2016 = vsel %vm1373, %v1984, %v2000
      %v2017 = vsel %vm1373, %v1985, %v2001
      %v2018 = vsel %vm1373, %v1986, %v2002
      %v2019 = vsel %vm1373, %v1987, %v2003
      %v2020 = vsel %vm1373, %v1988, %v2004
      %v2021 = vsel %vm1373, %v1989, %v2005
      %v2022 = vsel %vm1373, %v1990, %v1974
      %v2023 = vsel %vm1373, %v1991, %v1975
      %v2024 = vsel %vm1373, %v1992, %v1976
      %v2025 = vsel %vm1373, %v1993, %v1977
      %v2026 = vsel %vm1373, %v1994, %v1978
      %v2027 = vsel %vm1373, %v1995, %v1979
      %v2028 = vsel %vm1373, %v1996, %v1980
      %v2029 = vsel %vm1373, %v1997, %v1981
      %v2030 = vsel %vm1373, %v1998, %v1982
      %v2031 = vsel %vm1373, %v1999, %v1983
      %v2032 = vsel %vm1373, %v2000, %v1984
      %v2033 = vsel %vm1373, %v2001, %v1985
      %v2034 = vsel %vm1373, %v2002, %v1986
      %v2035 = vsel %vm1373, %v2003, %v1987
      %v2036 = vsel %vm1373, %v2004, %v1988
      %v2037 = vsel %vm1373, %v2005, %v1989
      %v2038 = vsel %vm1412, %v2006, -inf
      %v2039 = vsel %vm1413, %v2022, -inf
      %v2040 = vsel %vm1412, %v2007, -inf
      %v2041 = vsel %vm1413, %v2023, -inf
      %v2042 = vsel %vm1412, %v2008, -inf
      %v2043 = vsel %vm1413, %v2024, -inf
      %v2044 = vsel %vm1412, %v2009, -inf
      %v2045 = vsel %vm1413, %v2025, -inf
      %v2046 = vsel %vm1412, %v2010, -inf
      %v2047 = vsel %vm1413, %v2026, -inf
      %v2048 = vsel %vm1412, %v2011, -inf
      %v2049 = vsel %vm1413, %v2027, -inf
      %v2050 = vsel %vm1412, %v2012, -inf
      %v2051 = vsel %vm1413, %v2028, -inf
      %v2052 = vsel %vm1412, %v2013, -inf
      %v2053 = vsel %vm1413, %v2029, -inf
      %v2054 = vsel %vm1412, %v2014, -inf
      %v2055 = vsel %vm1413, %v2030, -inf
      %v2056 = vsel %vm1412, %v2015, -inf
      %v2057 = vsel %vm1413, %v2031, -inf
      %v2058 = vsel %vm1412, %v2016, -inf
      %v2059 = vsel %vm1413, %v2032, -inf
      %v2060 = vsel %vm1412, %v2017, -inf
      %v2061 = vsel %vm1413, %v2033, -inf
      %v2062 = vsel %vm1412, %v2018, -inf
      %v2063 = vsel %vm1413, %v2034, -inf
      %v2064 = vsel %vm1412, %v2019, -inf
      %v2065 = vsel %vm1413, %v2035, -inf
      %v2066 = vsel %vm1412, %v2020, -inf
      %v2067 = vsel %vm1413, %v2036, -inf
      %v2068 = vsel %vm1412, %v2021, -inf
      %v2069 = vsel %vm1413, %v2037, -inf
      %v2070 = vmax.f32 %v1942, %v2038
      %v2071 = vmax.f32 %v1943, %v2039
      %v2072 = vmax.f32 %v1944, %v2040
      %v2073 = vmax.f32 %v1945, %v2041
      %v2074 = vmax.f32 %v1946, %v2042
      %v2075 = vmax.f32 %v1947, %v2043
      %v2076 = vmax.f32 %v1948, %v2044
      %v2077 = vmax.f32 %v1949, %v2045
      %v2078 = vmax.f32 %v1950, %v2046
      %v2079 = vmax.f32 %v1951, %v2047
      %v2080 = vmax.f32 %v1952, %v2048
      %v2081 = vmax.f32 %v1953, %v2049
      %v2082 = vmax.f32 %v1954, %v2050
      %v2083 = vmax.f32 %v1955, %v2051
      %v2084 = vmax.f32 %v1956, %v2052
      %v2085 = vmax.f32 %v1957, %v2053
      %v2086 = vmax.f32 %v1958, %v2054
      %v2087 = vmax.f32 %v1959, %v2055
      %v2088 = vmax.f32 %v1960, %v2056
      %v2089 = vmax.f32 %v1961, %v2057
      %v2090 = vmax.f32 %v1962, %v2058
      %v2091 = vmax.f32 %v1963, %v2059
      %v2092 = vmax.f32 %v1964, %v2060
      %v2093 = vmax.f32 %v1965, %v2061
      %v2094 = vmax.f32 %v1966, %v2062
      %v2095 = vmax.f32 %v1967, %v2063
      %v2096 = vmax.f32 %v1968, %v2064
      %v2097 = vmax.f32 %v1969, %v2065
      %v2098 = vmax.f32 %v1970, %v2066
      %v2099 = vmax.f32 %v1971, %v2067
      %v2100 = vmax.f32 %v1972, %v2068
      %v2101 = vmax.f32 %v1973, %v2069
      %v2102 = vmax.f32 %v2074, %v2070
      %v2103 = vmax.f32 %v2075, %v2071
      %v2104 = vmax.f32 %v2076, %v2072
      %v2105 = vmax.f32 %v2077, %v2073
      %v2106 = vmax.f32 %v2078, %v2074
      %v2107 = vmax.f32 %v2079, %v2075
      %v2108 = vmax.f32 %v2080, %v2076
      %v2109 = vmax.f32 %v2081, %v2077
      %v2110 = vmax.f32 %v2082, %v2078
      %v2111 = vmax.f32 %v2083, %v2079
      %v2112 = vmax.f32 %v2084, %v2080
      %v2113 = vmax.f32 %v2085, %v2081
      %v2114 = vmax.f32 %v2086, %v2082
      %v2115 = vmax.f32 %v2087, %v2083
      %v2116 = vmax.f32 %v2088, %v2084
      %v2117 = vmax.f32 %v2089, %v2085
      %v2118 = vmax.f32 %v2090, %v2086
      %v2119 = vmax.f32 %v2091, %v2087
      %v2120 = vmax.f32 %v2092, %v2088
      %v2121 = vmax.f32 %v2093, %v2089
      %v2122 = vmax.f32 %v2094, %v2090
      %v2123 = vmax.f32 %v2095, %v2091
      %v2124 = vmax.f32 %v2096, %v2092
      %v2125 = vmax.f32 %v2097, %v2093
      %v2126 = vmax.f32 %v2098, %v2094
      %v2127 = vmax.f32 %v2099, %v2095
      %v2128 = vmax.f32 %v2100, %v2096
      %v2129 = vmax.f32 %v2101, %v2097
      %v2130 = vmax.f32 %v2072, %v2070
      %v2131 = vmax.f32 %v2073, %v2071
      %v2132 = vmax.f32 %v2102, %v2072
      %v2133 = vmax.f32 %v2103, %v2073
      %v2134 = vmax.f32 %v2104, %v2074
      %v2135 = vmax.f32 %v2105, %v2075
      %v2136 = vmax.f32 %v2106, %v2076
      %v2137 = vmax.f32 %v2107, %v2077
      %v2138 = vmax.f32 %v2108, %v2078
      %v2139 = vmax.f32 %v2109, %v2079
      %v2140 = vmax.f32 %v2110, %v2080
      %v2141 = vmax.f32 %v2111, %v2081
      %v2142 = vmax.f32 %v2112, %v2082
      %v2143 = vmax.f32 %v2113, %v2083
      %v2144 = vmax.f32 %v2114, %v2084
      %v2145 = vmax.f32 %v2115, %v2085
      %v2146 = vmax.f32 %v2116, %v2086
      %v2147 = vmax.f32 %v2117, %v2087
      %v2148 = vmax.f32 %v2118, %v2088
      %v2149 = vmax.f32 %v2119, %v2089
      %v2150 = vmax.f32 %v2120, %v2090
      %v2151 = vmax.f32 %v2121, %v2091
      %v2152 = vmax.f32 %v2122, %v2092
      %v2153 = vmax.f32 %v2123, %v2093
      %v2154 = vmax.f32 %v2124, %v2094
      %v2155 = vmax.f32 %v2125, %v2095
      %v2156 = vmax.f32 %v2126, %v2096
      %v2157 = vmax.f32 %v2127, %v2097
      %v2158 = vmax.f32 %v2128, %v2098
      %v2159 = vmax.f32 %v2129, %v2099
      %v2160 = vmax.f32 %v2130, %v2074
      %v2161 = vmax.f32 %v2131, %v2075
      %v2162 = vmax.f32 %v2132, %v2076
      %v2163 = vmax.f32 %v2133, %v2077
      %v2164 = vmax.f32 %v2134, %v2078
      %v2165 = vmax.f32 %v2135, %v2079
      %v2166 = vmax.f32 %v2136, %v2080
      %v2167 = vmax.f32 %v2137, %v2081
      %v2168 = vmax.f32 %v2138, %v2082
      %v2169 = vmax.f32 %v2139, %v2083
      %v2170 = vmax.f32 %v2140, %v2084
      %v2171 = vmax.f32 %v2141, %v2085
      %v2172 = vmax.f32 %v2142, %v2086
      %v2173 = vmax.f32 %v2143, %v2087
      %v2174 = vmax.f32 %v2144, %v2088
      %v2175 = vmax.f32 %v2145, %v2089
      %v2176 = vmax.f32 %v2146, %v2090
      %v2177 = vmax.f32 %v2147, %v2091
      %v2178 = vmax.f32 %v2148, %v2092
      %v2179 = vmax.f32 %v2149, %v2093
      %v2180 = vmax.f32 %v2150, %v2094
      %v2181 = vmax.f32 %v2151, %v2095
      %v2182 = vmax.f32 %v2152, %v2096
      %v2183 = vmax.f32 %v2153, %v2097
      %v2184 = vmax.f32 %v2154, %v2098
      %v2185 = vmax.f32 %v2155, %v2099
      %v2186 = vmax.f32 %v2156, %v2100
      %v2187 = vmax.f32 %v2157, %v2101
      %v2188 = vmax.f32 %v2160, %v2076
      %v2189 = vmax.f32 %v2161, %v2077
      %v2190 = vmax.f32 %v2162, %v2078
      %v2191 = vmax.f32 %v2163, %v2079
      %v2192 = vmax.f32 %v2164, %v2080
      %v2193 = vmax.f32 %v2165, %v2081
      %v2194 = vmax.f32 %v2166, %v2082
      %v2195 = vmax.f32 %v2167, %v2083
      %v2196 = vmax.f32 %v2168, %v2084
      %v2197 = vmax.f32 %v2169, %v2085
      %v2198 = vmax.f32 %v2170, %v2086
      %v2199 = vmax.f32 %v2171, %v2087
      %v2200 = vmax.f32 %v2172, %v2088
      %v2201 = vmax.f32 %v2173, %v2089
      %v2202 = vmax.f32 %v2174, %v2090
      %v2203 = vmax.f32 %v2175, %v2091
      %v2204 = vmax.f32 %v2176, %v2092
      %v2205 = vmax.f32 %v2177, %v2093
      %v2206 = vmax.f32 %v2178, %v2094
      %v2207 = vmax.f32 %v2179, %v2095
      %v2208 = vmax.f32 %v2180, %v2096
      %v2209 = vmax.f32 %v2181, %v2097
      %v2210 = vmax.f32 %v2182, %v2098
      %v2211 = vmax.f32 %v2183, %v2099
      %v2212 = vmax.f32 %v2184, %v2100
      %v2213 = vmax.f32 %v2185, %v2101
      %v2214 = vrot.slane %v2160, 6
      %v2215 = vrot.slane %v2188, 6
      %v2216 = vrot.slane %v2190, 6
      %v2217 = vrot.slane %v2192, 6
      %v2218 = vrot.slane %v2194, 6
      %v2219 = vrot.slane %v2196, 6
      %v2220 = vrot.slane %v2198, 6
      %v2221 = vrot.slane %v2200, 6
      %v2222 = vrot.slane %v2202, 6
      %v2223 = vrot.slane %v2204, 6
      %v2224 = vrot.slane %v2206, 6
      %v2225 = vrot.slane %v2208, 6
      %v2226 = vrot.slane %v2210, 6
      %v2227 = vrot.slane %v2212, 6
      %v2228 = vrot.slane %v2186, 6
      %v2229 = vrot.slane %v2158, 6
      %v2230 = vrot.slane %v2161, 6
      %v2231 = vrot.slane %v2189, 6
      %v2232 = vrot.slane %v2191, 6
      %v2233 = vrot.slane %v2193, 6
      %v2234 = vrot.slane %v2195, 6
      %v2235 = vrot.slane %v2197, 6
      %v2236 = vrot.slane %v2199, 6
      %v2237 = vrot.slane %v2201, 6
      %v2238 = vrot.slane %v2203, 6
      %v2239 = vrot.slane %v2205, 6
      %v2240 = vrot.slane %v2207, 6
      %v2241 = vrot.slane %v2209, 6
      %v2242 = vrot.slane %v2211, 6
      %v2243 = vrot.slane %v2213, 6
      %v2244 = vrot.slane %v2187, 6
      %v2245 = vrot.slane %v2159, 6
      %v2246 = vsel %vm961, %v2214, %v2230
      %v2247 = vsel %vm961, %v2215, %v2231
      %v2248 = vsel %vm961, %v2216, %v2232
      %v2249 = vsel %vm961, %v2217, %v2233
      %v2250 = vsel %vm961, %v2218, %v2234
      %v2251 = vsel %vm961, %v2219, %v2235
      %v2252 = vsel %vm961, %v2220, %v2236
      %v2253 = vsel %vm961, %v2221, %v2237
      %v2254 = vsel %vm961, %v2222, %v2238
      %v2255 = vsel %vm961, %v2223, %v2239
      %v2256 = vsel %vm961, %v2224, %v2240
      %v2257 = vsel %vm961, %v2225, %v2241
      %v2258 = vsel %vm961, %v2226, %v2242
      %v2259 = vsel %vm961, %v2227, %v2243
      %v2260 = vsel %vm961, %v2228, %v2244
      %v2261 = vsel %vm961, %v2229, %v2245
      %v2262 = vsel %vm961, %v2230, %v2214
      %v2263 = vsel %vm961, %v2231, %v2215
      %v2264 = vsel %vm961, %v2232, %v2216
      %v2265 = vsel %vm961, %v2233, %v2217
      %v2266 = vsel %vm961, %v2234, %v2218
      %v2267 = vsel %vm961, %v2235, %v2219
      %v2268 = vsel %vm961, %v2236, %v2220
      %v2269 = vsel %vm961, %v2237, %v2221
      %v2270 = vsel %vm961, %v2238, %v2222
      %v2271 = vsel %vm961, %v2239, %v2223
      %v2272 = vsel %vm961, %v2240, %v2224
      %v2273 = vsel %vm961, %v2241, %v2225
      %v2274 = vsel %vm961, %v2242, %v2226
      %v2275 = vsel %vm961, %v2243, %v2227
      %v2276 = vsel %vm961, %v2244, %v2228
      %v2277 = vsel %vm961, %v2245, %v2229
      %v2278 = vsel %vm1001, %v2262, -inf
      %v2279 = vsel %vm1002, %v2246, -inf
      %v2280 = vsel %vm1001, %v2263, -inf
      %v2281 = vsel %vm1002, %v2247, -inf
      %v2282 = vsel %vm1001, %v2264, -inf
      %v2283 = vsel %vm1002, %v2248, -inf
      %v2284 = vsel %vm1001, %v2265, -inf
      %v2285 = vsel %vm1002, %v2249, -inf
      %v2286 = vsel %vm1001, %v2266, -inf
      %v2287 = vsel %vm1002, %v2250, -inf
      %v2288 = vsel %vm1001, %v2267, -inf
      %v2289 = vsel %vm1002, %v2251, -inf
      %v2290 = vsel %vm1001, %v2268, -inf
      %v2291 = vsel %vm1002, %v2252, -inf
      %v2292 = vsel %vm1001, %v2269, -inf
      %v2293 = vsel %vm1002, %v2253, -inf
      %v2294 = vsel %vm1001, %v2270, -inf
      %v2295 = vsel %vm1002, %v2254, -inf
      %v2296 = vsel %vm1001, %v2271, -inf
      %v2297 = vsel %vm1002, %v2255, -inf
      %v2298 = vsel %vm1001, %v2272, -inf
      %v2299 = vsel %vm1002, %v2256, -inf
      %v2300 = vsel %vm1001, %v2273, -inf
      %v2301 = vsel %vm1002, %v2257, -inf
      %v2302 = vsel %vm1001, %v2274, -inf
      %v2303 = vsel %vm1002, %v2258, -inf
      %v2304 = vsel %vm1001, %v2275, -inf
      %v2305 = vsel %vm1002, %v2259, -inf
      %v2306 = vsel %vm1001, %v2276, -inf
      %v2307 = vsel %vm1002, %v2260, -inf
      %v2308 = vsel %vm1001, %v2277, -inf
      %v2309 = vsel %vm1002, %v2261, -inf
      %v2310 = vmax.f32 %v2160, %v2278
      %v2311 = vmax.f32 %v2161, %v2279
      %v2312 = vmax.f32 %v2188, %v2280
      %v2313 = vmax.f32 %v2189, %v2281
      %v2314 = vmax.f32 %v2190, %v2282
      %v2315 = vmax.f32 %v2191, %v2283
      %v2316 = vmax.f32 %v2192, %v2284
      %v2317 = vmax.f32 %v2193, %v2285
      %v2318 = vmax.f32 %v2194, %v2286
      %v2319 = vmax.f32 %v2195, %v2287
      %v2320 = vmax.f32 %v2196, %v2288
      %v2321 = vmax.f32 %v2197, %v2289
      %v2322 = vmax.f32 %v2198, %v2290
      %v2323 = vmax.f32 %v2199, %v2291
      %v2324 = vmax.f32 %v2200, %v2292
      %v2325 = vmax.f32 %v2201, %v2293
      %v2326 = vmax.f32 %v2202, %v2294
      %v2327 = vmax.f32 %v2203, %v2295
      %v2328 = vmax.f32 %v2204, %v2296
      %v2329 = vmax.f32 %v2205, %v2297
      %v2330 = vmax.f32 %v2206, %v2298
      %v2331 = vmax.f32 %v2207, %v2299
      %v2332 = vmax.f32 %v2208, %v2300
      %v2333 = vmax.f32 %v2209, %v2301
      %v2334 = vmax.f32 %v2210, %v2302
      %v2335 = vmax.f32 %v2211, %v2303
      %v2336 = vmax.f32 %v2212, %v2304
      %v2337 = vmax.f32 %v2213, %v2305
      %v2338 = vmax.f32 %v2186, %v2306
      %v2339 = vmax.f32 %v2187, %v2307
      %v2340 = vmax.f32 %v2158, %v2308
      %v2341 = vmax.f32 %v2159, %v2309
      %v2342 = vrot.slane %v2160, 7
      %v2343 = vrot.slane %v2188, 7
      %v2344 = vrot.slane %v2190, 7
      %v2345 = vrot.slane %v2192, 7
      %v2346 = vrot.slane %v2194, 7
      %v2347 = vrot.slane %v2196, 7
      %v2348 = vrot.slane %v2198, 7
      %v2349 = vrot.slane %v2200, 7
      %v2350 = vrot.slane %v2202, 7
      %v2351 = vrot.slane %v2204, 7
      %v2352 = vrot.slane %v2206, 7
      %v2353 = vrot.slane %v2208, 7
      %v2354 = vrot.slane %v2210, 7
      %v2355 = vrot.slane %v2212, 7
      %v2356 = vrot.slane %v2186, 7
      %v2357 = vrot.slane %v2158, 7
      %v2358 = vrot.slane %v2161, 7
      %v2359 = vrot.slane %v2189, 7
      %v2360 = vrot.slane %v2191, 7
      %v2361 = vrot.slane %v2193, 7
      %v2362 = vrot.slane %v2195, 7
      %v2363 = vrot.slane %v2197, 7
      %v2364 = vrot.slane %v2199, 7
      %v2365 = vrot.slane %v2201, 7
      %v2366 = vrot.slane %v2203, 7
      %v2367 = vrot.slane %v2205, 7
      %v2368 = vrot.slane %v2207, 7
      %v2369 = vrot.slane %v2209, 7
      %v2370 = vrot.slane %v2211, 7
      %v2371 = vrot.slane %v2213, 7
      %v2372 = vrot.slane %v2187, 7
      %v2373 = vrot.slane %v2159, 7
      %v2374 = vsel %vm1099, %v2342, %v2358
      %v2375 = vsel %vm1099, %v2343, %v2359
      %v2376 = vsel %vm1099, %v2344, %v2360
      %v2377 = vsel %vm1099, %v2345, %v2361
      %v2378 = vsel %vm1099, %v2346, %v2362
      %v2379 = vsel %vm1099, %v2347, %v2363
      %v2380 = vsel %vm1099, %v2348, %v2364
      %v2381 = vsel %vm1099, %v2349, %v2365
      %v2382 = vsel %vm1099, %v2350, %v2366
      %v2383 = vsel %vm1099, %v2351, %v2367
      %v2384 = vsel %vm1099, %v2352, %v2368
      %v2385 = vsel %vm1099, %v2353, %v2369
      %v2386 = vsel %vm1099, %v2354, %v2370
      %v2387 = vsel %vm1099, %v2355, %v2371
      %v2388 = vsel %vm1099, %v2356, %v2372
      %v2389 = vsel %vm1099, %v2357, %v2373
      %v2390 = vsel %vm1099, %v2358, %v2342
      %v2391 = vsel %vm1099, %v2359, %v2343
      %v2392 = vsel %vm1099, %v2360, %v2344
      %v2393 = vsel %vm1099, %v2361, %v2345
      %v2394 = vsel %vm1099, %v2362, %v2346
      %v2395 = vsel %vm1099, %v2363, %v2347
      %v2396 = vsel %vm1099, %v2364, %v2348
      %v2397 = vsel %vm1099, %v2365, %v2349
      %v2398 = vsel %vm1099, %v2366, %v2350
      %v2399 = vsel %vm1099, %v2367, %v2351
      %v2400 = vsel %vm1099, %v2368, %v2352
      %v2401 = vsel %vm1099, %v2369, %v2353
      %v2402 = vsel %vm1099, %v2370, %v2354
      %v2403 = vsel %vm1099, %v2371, %v2355
      %v2404 = vsel %vm1099, %v2372, %v2356
      %v2405 = vsel %vm1099, %v2373, %v2357
      %v2406 = vsel %vm1138, %v2390, -inf
      %v2407 = vsel %vm1139, %v2374, -inf
      %v2408 = vsel %vm1138, %v2391, -inf
      %v2409 = vsel %vm1139, %v2375, -inf
      %v2410 = vsel %vm1138, %v2392, -inf
      %v2411 = vsel %vm1139, %v2376, -inf
      %v2412 = vsel %vm1138, %v2393, -inf
      %v2413 = vsel %vm1139, %v2377, -inf
      %v2414 = vsel %vm1138, %v2394, -inf
      %v2415 = vsel %vm1139, %v2378, -inf
      %v2416 = vsel %vm1138, %v2395, -inf
      %v2417 = vsel %vm1139, %v2379, -inf
      %v2418 = vsel %vm1138, %v2396, -inf
      %v2419 = vsel %vm1139, %v2380, -inf
      %v2420 = vsel %vm1138, %v2397, -inf
      %v2421 = vsel %vm1139, %v2381, -inf
      %v2422 = vsel %vm1138, %v2398, -inf
      %v2423 = vsel %vm1139, %v2382, -inf
      %v2424 = vsel %vm1138, %v2399, -inf
      %v2425 = vsel %vm1139, %v2383, -inf
      %v2426 = vsel %vm1138, %v2400, -inf
      %v2427 = vsel %vm1139, %v2384, -inf
      %v2428 = vsel %vm1138, %v2401, -inf
      %v2429 = vsel %vm1139, %v2385, -inf
      %v2430 = vsel %vm1138, %v2402, -inf
      %v2431 = vsel %vm1139, %v2386, -inf
      %v2432 = vsel %vm1138, %v2403, -inf
      %v2433 = vsel %vm1139, %v2387, -inf
      %v2434 = vsel %vm1138, %v2404, -inf
      %v2435 = vsel %vm1139, %v2388, -inf
      %v2436 = vsel %vm1138, %v2405, -inf
      %v2437 = vsel %vm1139, %v2389, -inf
      %v2438 = vmax.f32 %v2310, %v2406
      %v2439 = vmax.f32 %v2311, %v2407
      %v2440 = vmax.f32 %v2312, %v2408
      %v2441 = vmax.f32 %v2313, %v2409
      %v2442 = vmax.f32 %v2314, %v2410
      %v2443 = vmax.f32 %v2315, %v2411
      %v2444 = vmax.f32 %v2316, %v2412
      %v2445 = vmax.f32 %v2317, %v2413
      %v2446 = vmax.f32 %v2318, %v2414
      %v2447 = vmax.f32 %v2319, %v2415
      %v2448 = vmax.f32 %v2320, %v2416
      %v2449 = vmax.f32 %v2321, %v2417
      %v2450 = vmax.f32 %v2322, %v2418
      %v2451 = vmax.f32 %v2323, %v2419
      %v2452 = vmax.f32 %v2324, %v2420
      %v2453 = vmax.f32 %v2325, %v2421
      %v2454 = vmax.f32 %v2326, %v2422
      %v2455 = vmax.f32 %v2327, %v2423
      %v2456 = vmax.f32 %v2328, %v2424
      %v2457 = vmax.f32 %v2329, %v2425
      %v2458 = vmax.f32 %v2330, %v2426
      %v2459 = vmax.f32 %v2331, %v2427
      %v2460 = vmax.f32 %v2332, %v2428
      %v2461 = vmax.f32 %v2333, %v2429
      %v2462 = vmax.f32 %v2334, %v2430
      %v2463 = vmax.f32 %v2335, %v2431
      %v2464 = vmax.f32 %v2336, %v2432
      %v2465 = vmax.f32 %v2337, %v2433
      %v2466 = vmax.f32 %v2338, %v2434
      %v2467 = vmax.f32 %v2339, %v2435
      %v2468 = vmax.f32 %v2340, %v2436
      %v2469 = vmax.f32 %v2341, %v2437
      %v2470 = vrot.slane %v2160, 1
      %v2471 = vrot.slane %v2188, 1
      %v2472 = vrot.slane %v2190, 1
      %v2473 = vrot.slane %v2192, 1
      %v2474 = vrot.slane %v2194, 1
      %v2475 = vrot.slane %v2196, 1
      %v2476 = vrot.slane %v2198, 1
      %v2477 = vrot.slane %v2200, 1
      %v2478 = vrot.slane %v2202, 1
      %v2479 = vrot.slane %v2204, 1
      %v2480 = vrot.slane %v2206, 1
      %v2481 = vrot.slane %v2208, 1
      %v2482 = vrot.slane %v2210, 1
      %v2483 = vrot.slane %v2212, 1
      %v2484 = vrot.slane %v2186, 1
      %v2485 = vrot.slane %v2158, 1
      %v2486 = vrot.slane %v2161, 1
      %v2487 = vrot.slane %v2189, 1
      %v2488 = vrot.slane %v2191, 1
      %v2489 = vrot.slane %v2193, 1
      %v2490 = vrot.slane %v2195, 1
      %v2491 = vrot.slane %v2197, 1
      %v2492 = vrot.slane %v2199, 1
      %v2493 = vrot.slane %v2201, 1
      %v2494 = vrot.slane %v2203, 1
      %v2495 = vrot.slane %v2205, 1
      %v2496 = vrot.slane %v2207, 1
      %v2497 = vrot.slane %v2209, 1
      %v2498 = vrot.slane %v2211, 1
      %v2499 = vrot.slane %v2213, 1
      %v2500 = vrot.slane %v2187, 1
      %v2501 = vrot.slane %v2159, 1
      %v2502 = vsel %vm1236, %v2470, %v2486
      %v2503 = vsel %vm1236, %v2471, %v2487
      %v2504 = vsel %vm1236, %v2472, %v2488
      %v2505 = vsel %vm1236, %v2473, %v2489
      %v2506 = vsel %vm1236, %v2474, %v2490
      %v2507 = vsel %vm1236, %v2475, %v2491
      %v2508 = vsel %vm1236, %v2476, %v2492
      %v2509 = vsel %vm1236, %v2477, %v2493
      %v2510 = vsel %vm1236, %v2478, %v2494
      %v2511 = vsel %vm1236, %v2479, %v2495
      %v2512 = vsel %vm1236, %v2480, %v2496
      %v2513 = vsel %vm1236, %v2481, %v2497
      %v2514 = vsel %vm1236, %v2482, %v2498
      %v2515 = vsel %vm1236, %v2483, %v2499
      %v2516 = vsel %vm1236, %v2484, %v2500
      %v2517 = vsel %vm1236, %v2485, %v2501
      %v2518 = vsel %vm1236, %v2486, %v2470
      %v2519 = vsel %vm1236, %v2487, %v2471
      %v2520 = vsel %vm1236, %v2488, %v2472
      %v2521 = vsel %vm1236, %v2489, %v2473
      %v2522 = vsel %vm1236, %v2490, %v2474
      %v2523 = vsel %vm1236, %v2491, %v2475
      %v2524 = vsel %vm1236, %v2492, %v2476
      %v2525 = vsel %vm1236, %v2493, %v2477
      %v2526 = vsel %vm1236, %v2494, %v2478
      %v2527 = vsel %vm1236, %v2495, %v2479
      %v2528 = vsel %vm1236, %v2496, %v2480
      %v2529 = vsel %vm1236, %v2497, %v2481
      %v2530 = vsel %vm1236, %v2498, %v2482
      %v2531 = vsel %vm1236, %v2499, %v2483
      %v2532 = vsel %vm1236, %v2500, %v2484
      %v2533 = vsel %vm1236, %v2501, %v2485
      %v2534 = vsel %vm1275, %v2502, -inf
      %v2535 = vsel %vm1276, %v2518, -inf
      %v2536 = vsel %vm1275, %v2503, -inf
      %v2537 = vsel %vm1276, %v2519, -inf
      %v2538 = vsel %vm1275, %v2504, -inf
      %v2539 = vsel %vm1276, %v2520, -inf
      %v2540 = vsel %vm1275, %v2505, -inf
      %v2541 = vsel %vm1276, %v2521, -inf
      %v2542 = vsel %vm1275, %v2506, -inf
      %v2543 = vsel %vm1276, %v2522, -inf
      %v2544 = vsel %vm1275, %v2507, -inf
      %v2545 = vsel %vm1276, %v2523, -inf
      %v2546 = vsel %vm1275, %v2508, -inf
      %v2547 = vsel %vm1276, %v2524, -inf
      %v2548 = vsel %vm1275, %v2509, -inf
      %v2549 = vsel %vm1276, %v2525, -inf
      %v2550 = vsel %vm1275, %v2510, -inf
      %v2551 = vsel %vm1276, %v2526, -inf
      %v2552 = vsel %vm1275, %v2511, -inf
      %v2553 = vsel %vm1276, %v2527, -inf
      %v2554 = vsel %vm1275, %v2512, -inf
      %v2555 = vsel %vm1276, %v2528, -inf
      %v2556 = vsel %vm1275, %v2513, -inf
      %v2557 = vsel %vm1276, %v2529, -inf
      %v2558 = vsel %vm1275, %v2514, -inf
      %v2559 = vsel %vm1276, %v2530, -inf
      %v2560 = vsel %vm1275, %v2515, -inf
      %v2561 = vsel %vm1276, %v2531, -inf
      %v2562 = vsel %vm1275, %v2516, -inf
      %v2563 = vsel %vm1276, %v2532, -inf
      %v2564 = vsel %vm1275, %v2517, -inf
      %v2565 = vsel %vm1276, %v2533, -inf
      %v2566 = vmax.f32 %v2438, %v2534
      %v2567 = vmax.f32 %v2439, %v2535
      %v2568 = vmax.f32 %v2440, %v2536
      %v2569 = vmax.f32 %v2441, %v2537
      %v2570 = vmax.f32 %v2442, %v2538
      %v2571 = vmax.f32 %v2443, %v2539
      %v2572 = vmax.f32 %v2444, %v2540
      %v2573 = vmax.f32 %v2445, %v2541
      %v2574 = vmax.f32 %v2446, %v2542
      %v2575 = vmax.f32 %v2447, %v2543
      %v2576 = vmax.f32 %v2448, %v2544
      %v2577 = vmax.f32 %v2449, %v2545
      %v2578 = vmax.f32 %v2450, %v2546
      %v2579 = vmax.f32 %v2451, %v2547
      %v2580 = vmax.f32 %v2452, %v2548
      %v2581 = vmax.f32 %v2453, %v2549
      %v2582 = vmax.f32 %v2454, %v2550
      %v2583 = vmax.f32 %v2455, %v2551
      %v2584 = vmax.f32 %v2456, %v2552
      %v2585 = vmax.f32 %v2457, %v2553
      %v2586 = vmax.f32 %v2458, %v2554
      %v2587 = vmax.f32 %v2459, %v2555
      %v2588 = vmax.f32 %v2460, %v2556
      %v2589 = vmax.f32 %v2461, %v2557
      %v2590 = vmax.f32 %v2462, %v2558
      %v2591 = vmax.f32 %v2463, %v2559
      %v2592 = vmax.f32 %v2464, %v2560
      %v2593 = vmax.f32 %v2465, %v2561
      %v2594 = vmax.f32 %v2466, %v2562
      %v2595 = vmax.f32 %v2467, %v2563
      %v2596 = vmax.f32 %v2468, %v2564
      %v2597 = vmax.f32 %v2469, %v2565
      %v2598 = vrot.slane %v2160, 2
      %v2599 = vrot.slane %v2188, 2
      %v2600 = vrot.slane %v2190, 2
      %v2601 = vrot.slane %v2192, 2
      %v2602 = vrot.slane %v2194, 2
      %v2603 = vrot.slane %v2196, 2
      %v2604 = vrot.slane %v2198, 2
      %v2605 = vrot.slane %v2200, 2
      %v2606 = vrot.slane %v2202, 2
      %v2607 = vrot.slane %v2204, 2
      %v2608 = vrot.slane %v2206, 2
      %v2609 = vrot.slane %v2208, 2
      %v2610 = vrot.slane %v2210, 2
      %v2611 = vrot.slane %v2212, 2
      %v2612 = vrot.slane %v2186, 2
      %v2613 = vrot.slane %v2158, 2
      %v2614 = vrot.slane %v2161, 2
      %v2615 = vrot.slane %v2189, 2
      %v2616 = vrot.slane %v2191, 2
      %v2617 = vrot.slane %v2193, 2
      %v2618 = vrot.slane %v2195, 2
      %v2619 = vrot.slane %v2197, 2
      %v2620 = vrot.slane %v2199, 2
      %v2621 = vrot.slane %v2201, 2
      %v2622 = vrot.slane %v2203, 2
      %v2623 = vrot.slane %v2205, 2
      %v2624 = vrot.slane %v2207, 2
      %v2625 = vrot.slane %v2209, 2
      %v2626 = vrot.slane %v2211, 2
      %v2627 = vrot.slane %v2213, 2
      %v2628 = vrot.slane %v2187, 2
      %v2629 = vrot.slane %v2159, 2
      %v2630 = vsel %vm1373, %v2598, %v2614
      %v2631 = vsel %vm1373, %v2599, %v2615
      %v2632 = vsel %vm1373, %v2600, %v2616
      %v2633 = vsel %vm1373, %v2601, %v2617
      %v2634 = vsel %vm1373, %v2602, %v2618
      %v2635 = vsel %vm1373, %v2603, %v2619
      %v2636 = vsel %vm1373, %v2604, %v2620
      %v2637 = vsel %vm1373, %v2605, %v2621
      %v2638 = vsel %vm1373, %v2606, %v2622
      %v2639 = vsel %vm1373, %v2607, %v2623
      %v2640 = vsel %vm1373, %v2608, %v2624
      %v2641 = vsel %vm1373, %v2609, %v2625
      %v2642 = vsel %vm1373, %v2610, %v2626
      %v2643 = vsel %vm1373, %v2611, %v2627
      %v2644 = vsel %vm1373, %v2612, %v2628
      %v2645 = vsel %vm1373, %v2613, %v2629
      %v2646 = vsel %vm1373, %v2614, %v2598
      %v2647 = vsel %vm1373, %v2615, %v2599
      %v2648 = vsel %vm1373, %v2616, %v2600
      %v2649 = vsel %vm1373, %v2617, %v2601
      %v2650 = vsel %vm1373, %v2618, %v2602
      %v2651 = vsel %vm1373, %v2619, %v2603
      %v2652 = vsel %vm1373, %v2620, %v2604
      %v2653 = vsel %vm1373, %v2621, %v2605
      %v2654 = vsel %vm1373, %v2622, %v2606
      %v2655 = vsel %vm1373, %v2623, %v2607
      %v2656 = vsel %vm1373, %v2624, %v2608
      %v2657 = vsel %vm1373, %v2625, %v2609
      %v2658 = vsel %vm1373, %v2626, %v2610
      %v2659 = vsel %vm1373, %v2627, %v2611
      %v2660 = vsel %vm1373, %v2628, %v2612
      %v2661 = vsel %vm1373, %v2629, %v2613
      %v2662 = vsel %vm1412, %v2630, -inf
      %v2663 = vsel %vm1413, %v2646, -inf
      %v2664 = vsel %vm1412, %v2631, -inf
      %v2665 = vsel %vm1413, %v2647, -inf
      %v2666 = vsel %vm1412, %v2632, -inf
      %v2667 = vsel %vm1413, %v2648, -inf
      %v2668 = vsel %vm1412, %v2633, -inf
      %v2669 = vsel %vm1413, %v2649, -inf
      %v2670 = vsel %vm1412, %v2634, -inf
      %v2671 = vsel %vm1413, %v2650, -inf
      %v2672 = vsel %vm1412, %v2635, -inf
      %v2673 = vsel %vm1413, %v2651, -inf
      %v2674 = vsel %vm1412, %v2636, -inf
      %v2675 = vsel %vm1413, %v2652, -inf
      %v2676 = vsel %vm1412, %v2637, -inf
      %v2677 = vsel %vm1413, %v2653, -inf
      %v2678 = vsel %vm1412, %v2638, -inf
      %v2679 = vsel %vm1413, %v2654, -inf
      %v2680 = vsel %vm1412, %v2639, -inf
      %v2681 = vsel %vm1413, %v2655, -inf
      %v2682 = vsel %vm1412, %v2640, -inf
      %v2683 = vsel %vm1413, %v2656, -inf
      %v2684 = vsel %vm1412, %v2641, -inf
      %v2685 = vsel %vm1413, %v2657, -inf
      %v2686 = vsel %vm1412, %v2642, -inf
      %v2687 = vsel %vm1413, %v2658, -inf
      %v2688 = vsel %vm1412, %v2643, -inf
      %v2689 = vsel %vm1413, %v2659, -inf
      %v2690 = vsel %vm1412, %v2644, -inf
      %v2691 = vsel %vm1413, %v2660, -inf
      %v2692 = vsel %vm1412, %v2645, -inf
      %v2693 = vsel %vm1413, %v2661, -inf
      %v2694 = vmax.f32 %v2566, %v2662
      %v2695 = vmax.f32 %v2567, %v2663
      %v2696 = vmax.f32 %v2568, %v2664
      %v2697 = vmax.f32 %v2569, %v2665
      %v2698 = vmax.f32 %v2570, %v2666
      %v2699 = vmax.f32 %v2571, %v2667
      %v2700 = vmax.f32 %v2572, %v2668
      %v2701 = vmax.f32 %v2573, %v2669
      %v2702 = vmax.f32 %v2574, %v2670
      %v2703 = vmax.f32 %v2575, %v2671
      %v2704 = vmax.f32 %v2576, %v2672
      %v2705 = vmax.f32 %v2577, %v2673
      %v2706 = vmax.f32 %v2578, %v2674
      %v2707 = vmax.f32 %v2579, %v2675
      %v2708 = vmax.f32 %v2580, %v2676
      %v2709 = vmax.f32 %v2581, %v2677
      %v2710 = vmax.f32 %v2582, %v2678
      %v2711 = vmax.f32 %v2583, %v2679
      %v2712 = vmax.f32 %v2584, %v2680
      %v2713 = vmax.f32 %v2585, %v2681
      %v2714 = vmax.f32 %v2586, %v2682
      %v2715 = vmax.f32 %v2587, %v2683
      %v2716 = vmax.f32 %v2588, %v2684
      %v2717 = vmax.f32 %v2589, %v2685
      %v2718 = vmax.f32 %v2590, %v2686
      %v2719 = vmax.f32 %v2591, %v2687
      %v2720 = vmax.f32 %v2592, %v2688
      %v2721 = vmax.f32 %v2593, %v2689
      %v2722 = vmax.f32 %v2594, %v2690
      %v2723 = vmax.f32 %v2595, %v2691
      %v2724 = vmax.f32 %v2596, %v2692
      %v2725 = vmax.f32 %v2597, %v2693
      %v2726 = vld [vmem:[%s3] sm:$0x3]
      %s2727 = scalar_lea.vmem %s3, 2
      %v2728 = vld [vmem:[%s2727] sm:$0x3]
      %vm2729 = vcmask 15360
      %v2731 = vsel %vm2729, %v1446, 0
      %v2734 = vsel %vm2729, %v1447, 0
      %v2737 = vsel %vm2729, %v1448, 0
      %v2740 = vsel %vm2729, %v1449, 0
      %v2743 = vsel %vm2729, %v1450, 0
      %v2746 = vsel %vm2729, %v1451, 0
      %v2749 = vsel %vm2729, %v1452, 0
      %v2752 = vsel %vm2729, %v1453, 0
      %v2755 = vsel %vm2729, %v1454, 0
      %v2758 = vsel %vm2729, %v1455, 0
      %v2761 = vsel %vm2729, %v1456, 0
      %v2764 = vsel %vm2729, %v1457, 0
      %v2767 = vsel %vm2729, %v1458, 0
      %v2770 = vsel %vm2729, %v1459, 0
      %v2773 = vsel %vm2729, %v1460, 0
      %v2776 = vsel %vm2729, %v1461, 0
      %v2779 = vsel %vm2729, %v1462, 0
      %v2782 = vsel %vm2729, %v1463, 0
      %v2785 = vsel %vm2729, %v1464, 0
      %v2788 = vsel %vm2729, %v1465, 0
      %v2791 = vsel %vm2729, %v1466, 0
      %v2794 = vsel %vm2729, %v1467, 0
      %v2797 = vsel %vm2729, %v1468, 0
      %v2800 = vsel %vm2729, %v1469, 0
      %v2803 = vsel %vm2729, %v1470, 0
      %v2806 = vsel %vm2729, %v1471, 0
      %v2809 = vsel %vm2729, %v1472, 0
      %v2812 = vsel %vm2729, %v1473, 0
      %v2815 = vsel %vm2729, %v1474, 0
      %v2818 = vsel %vm2729, %v1475, 0
      %v2821 = vsel %vm2729, %v1476, 0
      %v2824 = vsel %vm2729, %v1477, 0
      %vm2826 = vcmask 1041408
      %v2828 = vsel %vm2826, %v2728, 0
      %2830 = vmatprep.subr.mxu0 0.0
      %2831 = vmatpush1.msra.mxu0 %v2828
      %2832 = vmatprep.subr.mxu0 0.0
      %2833 = vmatpush1.msra.mxu0 0.0
      %2834 = vmatprep.subr.mxu0 0.0
      %2835 = vmatpush1.msra.mxu0 0.0
      %2836 = vmatprep.subr.mxu0 0.0
      %2837 = vmatpush1.msra.mxu0 0.0
      %2838 = vmatprep.subr.mxu0 0.0
      %2839 = vmatpush1.msra.mxu0 0.0
      %2840 = vmatprep.subr.mxu0 0.0
      %2841 = vmatpush1.msra.mxu0 0.0
      %2842 = vmatprep.subr.mxu0 0.0
      %2843 = vmatpush1.msra.mxu0 0.0
      %2844 = vmatprep.subr.mxu0 0.0
      %2845 = vmatpush1.msra.mxu0 0.0
      %2846 = vmatprep.subr.mxu0 0.0
      %2847 = vmatpush1.msra.mxu0 0.0
      %2848 = vmatprep.subr.mxu0 0.0
      %2849 = vmatpush1.msra.mxu0 0.0
      %2850 = vmatprep.subr.mxu0 0.0
      %2851 = vmatpush1.msra.mxu0 0.0
      %2852 = vmatprep.subr.mxu0 0.0
      %2853 = vmatpush1.msra.mxu0 0.0
      %2854 = vmatprep.subr.mxu0 0.0
      %2855 = vmatpush1.msra.mxu0 0.0
      %2856 = vmatprep.subr.mxu0 0.0
      %2857 = vmatpush1.msra.mxu0 0.0
      %2858 = vmatprep.subr.mxu0 0.0
      %2859 = vmatpush1.msra.mxu0 0.0
      %2860 = vmatprep.subr.mxu0 0.0
      %2861 = vmatpush1.msra.mxu0 0.0
      %2862 = vmatprep.subr.mxu0 0.0
      %2863 = vmatpush1.msra.mxu0 0.0
      %2864 = vmatprep.subr.mxu0 0.0
      %2865 = vmatpush1.msra.mxu0 0.0
      %2866 = vmatprep.subr.mxu0 0.0
      %2867 = vmatpush1.msra.mxu0 0.0
      %2868 = vmatprep.subr.mxu0 0.0
      %2869 = vmatpush1.msra.mxu0 0.0
      %2870 = vmatprep.subr.mxu0 0.0
      %2871 = vmatpush1.msra.mxu0 0.0
      %2872 = vmatprep.subr.mxu0 0.0
      %2873 = vmatpush1.msra.mxu0 0.0
      %2874 = vmatprep.subr.mxu0 0.0
      %2875 = vmatpush1.msra.mxu0 0.0
      %2876 = vmatprep.subr.mxu0 0.0
      %2877 = vmatpush1.msra.mxu0 0.0
      %2878 = vmatprep.subr.mxu0 0.0
      %2879 = vmatpush1.msra.mxu0 0.0
      %2880 = vmatprep.subr.mxu0 0.0
      %2881 = vmatpush1.msra.mxu0 0.0
      %2882 = vmatprep.subr.mxu0 0.0
      %2883 = vmatpush1.msra.mxu0 0.0
      %2884 = vmatprep.subr.mxu0 0.0
      %2885 = vmatpush1.msra.mxu0 0.0
      %2886 = vmatprep.subr.mxu0 0.0
      %2887 = vmatpush1.msra.mxu0 0.0
      %2888 = vmatprep.subr.mxu0 0.0
      %2889 = vmatpush1.msra.mxu0 0.0
      %2890 = vmatprep.subr.mxu0 0.0
      %2891 = vmatpush1.msra.mxu0 0.0
      %2892 = vmatprep.subr.mxu0 0.0
      %2893 = vmatpush1.msra.mxu0 0.0
      %2894 = vmatprep.mubr.f32.mxu0 0.0
      %2895 = vmatmul.mubr.f32.gmra.mrb[0].mxu0 %v2731
      %v2896 = vpop.f32.mrb[0].mxu0
      %v2897 = vadd.f32 0.0, %v2896
      %v2898 = vpop.f32.mrb[0].mxu0
      %2899 = vmatprep.mubr.f32.mxu0 0.0
      %2900 = vmatmul.mubr.f32.gmra.mrb[0].mxu0 %v2734
      %v2901 = vpop.f32.mrb[0].mxu0
      %v2902 = vadd.f32 0.0, %v2901
      %v2903 = vpop.f32.mrb[0].mxu0
      %2904 = vmatprep.mubr.f32.mxu0 0.0
      %2905 = vmatmul.mubr.f32.gmra.mrb[0].mxu0 %v2737
      %v2906 = vpop.f32.mrb[0].mxu0
      %v2907 = vadd.f32 0.0, %v2906
      %v2908 = vpop.f32.mrb[0].mxu0
      %2909 = vmatprep.mubr.f32.mxu0 0.0
      %2910 = vmatmul.mubr.f32.gmra.mrb[0].mxu0 %v2740
      %v2911 = vpop.f32.mrb[0].mxu0
      %v2912 = vadd.f32 0.0, %v2911
      %v2913 = vpop.f32.mrb[0].mxu0
      %2914 = vmatprep.mubr.f32.mxu0 0.0
      %2915 = vmatmul.mubr.f32.gmra.mrb[0].mxu0 %v2743
      %v2916 = vpop.f32.mrb[0].mxu0
      %v2917 = vadd.f32 0.0, %v2916
      %v2918 = vpop.f32.mrb[0].mxu0
      %2919 = vmatprep.mubr.f32.mxu0 0.0
      %2920 = vmatmul.mubr.f32.gmra.mrb[0].mxu0 %v2746
      %v2921 = vpop.f32.mrb[0].mxu0
      %v2922 = vadd.f32 0.0, %v2921
      %v2923 = vpop.f32.mrb[0].mxu0
      %2924 = vmatprep.mubr.f32.mxu0 0.0
      %2925 = vmatmul.mubr.f32.gmra.mrb[0].mxu0 %v2749
      %v2926 = vpop.f32.mrb[0].mxu0
      %v2927 = vadd.f32 0.0, %v2926
      %v2928 = vpop.f32.mrb[0].mxu0
      %2929 = vmatprep.mubr.f32.mxu0 0.0
      %2930 = vmatmul.mubr.f32.gmra.mrb[0].mxu0 %v2752
      %v2931 = vpop.f32.mrb[0].mxu0
      %v2932 = vadd.f32 0.0, %v2931
      %v2933 = vpop.f32.mrb[0].mxu0
      %2934 = vmatprep.mubr.f32.mxu0 0.0
      %2935 = vmatmul.mubr.f32.gmra.mrb[0].mxu0 %v2755
      %v2936 = vpop.f32.mrb[0].mxu0
      %v2937 = vadd.f32 0.0, %v2936
      %v2938 = vpop.f32.mrb[0].mxu0
      %2939 = vmatprep.mubr.f32.mxu0 0.0
      %2940 = vmatmul.mubr.f32.gmra.mrb[0].mxu0 %v2758
      %v2941 = vpop.f32.mrb[0].mxu0
      %v2942 = vadd.f32 0.0, %v2941
      %v2943 = vpop.f32.mrb[0].mxu0
      %2944 = vmatprep.mubr.f32.mxu0 0.0
      %2945 = vmatmul.mubr.f32.gmra.mrb[0].mxu0 %v2761
      %v2946 = vpop.f32.mrb[0].mxu0
      %v2947 = vadd.f32 0.0, %v2946
      %v2948 = vpop.f32.mrb[0].mxu0
      %2949 = vmatprep.mubr.f32.mxu0 0.0
      %2950 = vmatmul.mubr.f32.gmra.mrb[0].mxu0 %v2764
      %v2951 = vpop.f32.mrb[0].mxu0
      %v2952 = vadd.f32 0.0, %v2951
      %v2953 = vpop.f32.mrb[0].mxu0
      %2954 = vmatprep.mubr.f32.mxu0 0.0
      %2955 = vmatmul.mubr.f32.gmra.mrb[0].mxu0 %v2767
      %v2956 = vpop.f32.mrb[0].mxu0
      %v2957 = vadd.f32 0.0, %v2956
      %v2958 = vpop.f32.mrb[0].mxu0
      %2959 = vmatprep.mubr.f32.mxu0 0.0
      %2960 = vmatmul.mubr.f32.gmra.mrb[0].mxu0 %v2770
      %v2961 = vpop.f32.mrb[0].mxu0
      %v2962 = vadd.f32 0.0, %v2961
      %v2963 = vpop.f32.mrb[0].mxu0
      %2964 = vmatprep.mubr.f32.mxu0 0.0
      %2965 = vmatmul.mubr.f32.gmra.mrb[0].mxu0 %v2773
      %v2966 = vpop.f32.mrb[0].mxu0
      %v2967 = vadd.f32 0.0, %v2966
      %v2968 = vpop.f32.mrb[0].mxu0
      %2969 = vmatprep.mubr.f32.mxu0 0.0
      %2970 = vmatmul.mubr.f32.gmra.mrb[0].mxu0 %v2776
      %v2971 = vpop.f32.mrb[0].mxu0
      %v2972 = vadd.f32 0.0, %v2971
      %v2973 = vpop.f32.mrb[0].mxu0
      %2974 = vmatprep.mubr.f32.mxu0 0.0
      %2975 = vmatmul.mubr.f32.gmra.mrb[0].mxu0 %v2779
      %v2976 = vpop.f32.mrb[0].mxu0
      %v2977 = vadd.f32 0.0, %v2976
      %v2978 = vpop.f32.mrb[0].mxu0
      %2979 = vmatprep.mubr.f32.mxu0 0.0
      %2980 = vmatmul.mubr.f32.gmra.mrb[0].mxu0 %v2782
      %v2981 = vpop.f32.mrb[0].mxu0
      %v2982 = vadd.f32 0.0, %v2981
      %v2983 = vpop.f32.mrb[0].mxu0
      %2984 = vmatprep.mubr.f32.mxu0 0.0
      %2985 = vmatmul.mubr.f32.gmra.mrb[0].mxu0 %v2785
      %v2986 = vpop.f32.mrb[0].mxu0
      %v2987 = vadd.f32 0.0, %v2986
      %v2988 = vpop.f32.mrb[0].mxu0
      %2989 = vmatprep.mubr.f32.mxu0 0.0
      %2990 = vmatmul.mubr.f32.gmra.mrb[0].mxu0 %v2788
      %v2991 = vpop.f32.mrb[0].mxu0
      %v2992 = vadd.f32 0.0, %v2991
      %v2993 = vpop.f32.mrb[0].mxu0
      %2994 = vmatprep.mubr.f32.mxu0 0.0
      %2995 = vmatmul.mubr.f32.gmra.mrb[0].mxu0 %v2791
      %v2996 = vpop.f32.mrb[0].mxu0
      %v2997 = vadd.f32 0.0, %v2996
      %v2998 = vpop.f32.mrb[0].mxu0
      %2999 = vmatprep.mubr.f32.mxu0 0.0
      %3000 = vmatmul.mubr.f32.gmra.mrb[0].mxu0 %v2794
      %v3001 = vpop.f32.mrb[0].mxu0
      %v3002 = vadd.f32 0.0, %v3001
      %v3003 = vpop.f32.mrb[0].mxu0
      %3004 = vmatprep.mubr.f32.mxu0 0.0
      %3005 = vmatmul.mubr.f32.gmra.mrb[0].mxu0 %v2797
      %v3006 = vpop.f32.mrb[0].mxu0
      %v3007 = vadd.f32 0.0, %v3006
      %v3008 = vpop.f32.mrb[0].mxu0
      %3009 = vmatprep.mubr.f32.mxu0 0.0
      %3010 = vmatmul.mubr.f32.gmra.mrb[0].mxu0 %v2800
      %v3011 = vpop.f32.mrb[0].mxu0
      %v3012 = vadd.f32 0.0, %v3011
      %v3013 = vpop.f32.mrb[0].mxu0
      %3014 = vmatprep.mubr.f32.mxu0 0.0
      %3015 = vmatmul.mubr.f32.gmra.mrb[0].mxu0 %v2803
      %v3016 = vpop.f32.mrb[0].mxu0
      %v3017 = vadd.f32 0.0, %v3016
      %v3018 = vpop.f32.mrb[0].mxu0
      %3019 = vmatprep.mubr.f32.mxu0 0.0
      %3020 = vmatmul.mubr.f32.gmra.mrb[0].mxu0 %v2806
      %v3021 = vpop.f32.mrb[0].mxu0
      %v3022 = vadd.f32 0.0, %v3021
      %v3023 = vpop.f32.mrb[0].mxu0
      %3024 = vmatprep.mubr.f32.mxu0 0.0
      %3025 = vmatmul.mubr.f32.gmra.mrb[0].mxu0 %v2809
      %v3026 = vpop.f32.mrb[0].mxu0
      %v3027 = vadd.f32 0.0, %v3026
      %v3028 = vpop.f32.mrb[0].mxu0
      %3029 = vmatprep.mubr.f32.mxu0 0.0
      %3030 = vmatmul.mubr.f32.gmra.mrb[0].mxu0 %v2812
      %v3031 = vpop.f32.mrb[0].mxu0
      %v3032 = vadd.f32 0.0, %v3031
      %v3033 = vpop.f32.mrb[0].mxu0
      %3034 = vmatprep.mubr.f32.mxu0 0.0
      %3035 = vmatmul.mubr.f32.gmra.mrb[0].mxu0 %v2815
      %v3036 = vpop.f32.mrb[0].mxu0
      %v3037 = vadd.f32 0.0, %v3036
      %v3038 = vpop.f32.mrb[0].mxu0
      %3039 = vmatprep.mubr.f32.mxu0 0.0
      %3040 = vmatmul.mubr.f32.gmra.mrb[0].mxu0 %v2818
      %v3041 = vpop.f32.mrb[0].mxu0
      %v3042 = vadd.f32 0.0, %v3041
      %v3043 = vpop.f32.mrb[0].mxu0
      %3044 = vmatprep.mubr.f32.mxu0 0.0
      %3045 = vmatmul.mubr.f32.gmra.mrb[0].mxu0 %v2821
      %v3046 = vpop.f32.mrb[0].mxu0
      %v3047 = vadd.f32 0.0, %v3046
      %v3048 = vpop.f32.mrb[0].mxu0
      %3049 = vmatprep.mubr.f32.mxu0 0.0
      %3050 = vmatmul.mubr.f32.gmra.mrb[0].mxu0 %v2824
      %v3051 = vpop.f32.mrb[0].mxu0
      %v3052 = vadd.f32 0.0, %v3051
      %v3053 = vpop.f32.mrb[0].mxu0
      %3054 = vdwg.mxu0
      %v3056 = vsel %vm2729, %v783, 0
      %v3059 = vsel %vm2729, %v784, 0
      %v3062 = vsel %vm2729, %v785, 0
      %v3065 = vsel %vm2729, %v786, 0
      %v3068 = vsel %vm2729, %v787, 0
      %v3071 = vsel %vm2729, %v788, 0
      %v3074 = vsel %vm2729, %v789, 0
      %v3077 = vsel %vm2729, %v790, 0
      %v3080 = vsel %vm2729, %v791, 0
      %v3083 = vsel %vm2729, %v792, 0
      %v3086 = vsel %vm2729, %v793, 0
      %v3089 = vsel %vm2729, %v794, 0
      %v3092 = vsel %vm2729, %v795, 0
      %v3095 = vsel %vm2729, %v796, 0
      %v3098 = vsel %vm2729, %v797, 0
      %v3101 = vsel %vm2729, %v798, 0
      %v3104 = vsel %vm2729, %v799, 0
      %v3107 = vsel %vm2729, %v800, 0
      %v3110 = vsel %vm2729, %v801, 0
      %v3113 = vsel %vm2729, %v802, 0
      %v3116 = vsel %vm2729, %v803, 0
      %v3119 = vsel %vm2729, %v804, 0
      %v3122 = vsel %vm2729, %v805, 0
      %v3125 = vsel %vm2729, %v806, 0
      %v3128 = vsel %vm2729, %v807, 0
      %v3131 = vsel %vm2729, %v808, 0
      %v3134 = vsel %vm2729, %v809, 0
      %v3137 = vsel %vm2729, %v810, 0
      %v3140 = vsel %vm2729, %v811, 0
      %v3143 = vsel %vm2729, %v812, 0
      %v3146 = vsel %vm2729, %v813, 0
      %v3149 = vsel %vm2729, %v814, 0
      %v3152 = vsel %vm2826, %v2726, 0
      %3154 = vmatprep.subr.mxu0 0.0
      %3155 = vmatpush1.msra.mxu0 %v3152
      %3156 = vmatprep.subr.mxu0 0.0
      %3157 = vmatpush1.msra.mxu0 0.0
      %3158 = vmatprep.subr.mxu0 0.0
      %3159 = vmatpush1.msra.mxu0 0.0
      %3160 = vmatprep.subr.mxu0 0.0
      %3161 = vmatpush1.msra.mxu0 0.0
      %3162 = vmatprep.subr.mxu0 0.0
      %3163 = vmatpush1.msra.mxu0 0.0
      %3164 = vmatprep.subr.mxu0 0.0
      %3165 = vmatpush1.msra.mxu0 0.0
      %3166 = vmatprep.subr.mxu0 0.0
      %3167 = vmatpush1.msra.mxu0 0.0
      %3168 = vmatprep.subr.mxu0 0.0
      %3169 = vmatpush1.msra.mxu0 0.0
      %3170 = vmatprep.subr.mxu0 0.0
      %3171 = vmatpush1.msra.mxu0 0.0
      %3172 = vmatprep.subr.mxu0 0.0
      %3173 = vmatpush1.msra.mxu0 0.0
      %3174 = vmatprep.subr.mxu0 0.0
      %3175 = vmatpush1.msra.mxu0 0.0
      %3176 = vmatprep.subr.mxu0 0.0
      %3177 = vmatpush1.msra.mxu0 0.0
      %3178 = vmatprep.subr.mxu0 0.0
      %3179 = vmatpush1.msra.mxu0 0.0
      %3180 = vmatprep.subr.mxu0 0.0
      %3181 = vmatpush1.msra.mxu0 0.0
      %3182 = vmatprep.subr.mxu0 0.0
      %3183 = vmatpush1.msra.mxu0 0.0
      %3184 = vmatprep.subr.mxu0 0.0
      %3185 = vmatpush1.msra.mxu0 0.0
      %3186 = vmatprep.subr.mxu0 0.0
      %3187 = vmatpush1.msra.mxu0 0.0
      %3188 = vmatprep.subr.mxu0 0.0
      %3189 = vmatpush1.msra.mxu0 0.0
      %3190 = vmatprep.subr.mxu0 0.0
      %3191 = vmatpush1.msra.mxu0 0.0
      %3192 = vmatprep.subr.mxu0 0.0
      %3193 = vmatpush1.msra.mxu0 0.0
      %3194 = vmatprep.subr.mxu0 0.0
      %3195 = vmatpush1.msra.mxu0 0.0
      %3196 = vmatprep.subr.mxu0 0.0
      %3197 = vmatpush1.msra.mxu0 0.0
      %3198 = vmatprep.subr.mxu0 0.0
      %3199 = vmatpush1.msra.mxu0 0.0
      %3200 = vmatprep.subr.mxu0 0.0
      %3201 = vmatpush1.msra.mxu0 0.0
      %3202 = vmatprep.subr.mxu0 0.0
      %3203 = vmatpush1.msra.mxu0 0.0
      %3204 = vmatprep.subr.mxu0 0.0
      %3205 = vmatpush1.msra.mxu0 0.0
      %3206 = vmatprep.subr.mxu0 0.0
      %3207 = vmatpush1.msra.mxu0 0.0
      %3208 = vmatprep.subr.mxu0 0.0
      %3209 = vmatpush1.msra.mxu0 0.0
      %3210 = vmatprep.subr.mxu0 0.0
      %3211 = vmatpush1.msra.mxu0 0.0
      %3212 = vmatprep.subr.mxu0 0.0
      %3213 = vmatpush1.msra.mxu0 0.0
      %3214 = vmatprep.subr.mxu0 0.0
      %3215 = vmatpush1.msra.mxu0 0.0
      %3216 = vmatprep.subr.mxu0 0.0
      %3217 = vmatpush1.msra.mxu0 0.0
      %3218 = vmatprep.mubr.f32.mxu0 0.0
      %3219 = vmatmul.mubr.f32.gmra.mrb[0].mxu0 %v3056
      %v3220 = vpop.f32.mrb[0].mxu0
      %v3221 = vadd.f32 %v2897, %v3220
      %v3222 = vpop.f32.mrb[0].mxu0
      %3223 = vmatprep.mubr.f32.mxu0 0.0
      %3224 = vmatmul.mubr.f32.gmra.mrb[0].mxu0 %v3059
      %v3225 = vpop.f32.mrb[0].mxu0
      %v3226 = vadd.f32 %v2902, %v3225
      %v3227 = vpop.f32.mrb[0].mxu0
      %3228 = vmatprep.mubr.f32.mxu0 0.0
      %3229 = vmatmul.mubr.f32.gmra.mrb[0].mxu0 %v3062
      %v3230 = vpop.f32.mrb[0].mxu0
      %v3231 = vadd.f32 %v2907, %v3230
      %v3232 = vpop.f32.mrb[0].mxu0
      %3233 = vmatprep.mubr.f32.mxu0 0.0
      %3234 = vmatmul.mubr.f32.gmra.mrb[0].mxu0 %v3065
      %v3235 = vpop.f32.mrb[0].mxu0
      %v3236 = vadd.f32 %v2912, %v3235
      %v3237 = vpop.f32.mrb[0].mxu0
      %3238 = vmatprep.mubr.f32.mxu0 0.0
      %3239 = vmatmul.mubr.f32.gmra.mrb[0].mxu0 %v3068
      %v3240 = vpop.f32.mrb[0].mxu0
      %v3241 = vadd.f32 %v2917, %v3240
      %v3242 = vpop.f32.mrb[0].mxu0
      %3243 = vmatprep.mubr.f32.mxu0 0.0
      %3244 = vmatmul.mubr.f32.gmra.mrb[0].mxu0 %v3071
      %v3245 = vpop.f32.mrb[0].mxu0
      %v3246 = vadd.f32 %v2922, %v3245
      %v3247 = vpop.f32.mrb[0].mxu0
      %3248 = vmatprep.mubr.f32.mxu0 0.0
      %3249 = vmatmul.mubr.f32.gmra.mrb[0].mxu0 %v3074
      %v3250 = vpop.f32.mrb[0].mxu0
      %v3251 = vadd.f32 %v2927, %v3250
      %v3252 = vpop.f32.mrb[0].mxu0
      %3253 = vmatprep.mubr.f32.mxu0 0.0
      %3254 = vmatmul.mubr.f32.gmra.mrb[0].mxu0 %v3077
      %v3255 = vpop.f32.mrb[0].mxu0
      %v3256 = vadd.f32 %v2932, %v3255
      %v3257 = vpop.f32.mrb[0].mxu0
      %3258 = vmatprep.mubr.f32.mxu0 0.0
      %3259 = vmatmul.mubr.f32.gmra.mrb[0].mxu0 %v3080
      %v3260 = vpop.f32.mrb[0].mxu0
      %v3261 = vadd.f32 %v2937, %v3260
      %v3262 = vpop.f32.mrb[0].mxu0
      %3263 = vmatprep.mubr.f32.mxu0 0.0
      %3264 = vmatmul.mubr.f32.gmra.mrb[0].mxu0 %v3083
      %v3265 = vpop.f32.mrb[0].mxu0
      %v3266 = vadd.f32 %v2942, %v3265
      %v3267 = vpop.f32.mrb[0].mxu0
      %3268 = vmatprep.mubr.f32.mxu0 0.0
      %3269 = vmatmul.mubr.f32.gmra.mrb[0].mxu0 %v3086
      %v3270 = vpop.f32.mrb[0].mxu0
      %v3271 = vadd.f32 %v2947, %v3270
      %v3272 = vpop.f32.mrb[0].mxu0
      %3273 = vmatprep.mubr.f32.mxu0 0.0
      %3274 = vmatmul.mubr.f32.gmra.mrb[0].mxu0 %v3089
      %v3275 = vpop.f32.mrb[0].mxu0
      %v3276 = vadd.f32 %v2952, %v3275
      %v3277 = vpop.f32.mrb[0].mxu0
      %3278 = vmatprep.mubr.f32.mxu0 0.0
      %3279 = vmatmul.mubr.f32.gmra.mrb[0].mxu0 %v3092
      %v3280 = vpop.f32.mrb[0].mxu0
      %v3281 = vadd.f32 %v2957, %v3280
      %v3282 = vpop.f32.mrb[0].mxu0
      %3283 = vmatprep.mubr.f32.mxu0 0.0
      %3284 = vmatmul.mubr.f32.gmra.mrb[0].mxu0 %v3095
      %v3285 = vpop.f32.mrb[0].mxu0
      %v3286 = vadd.f32 %v2962, %v3285
      %v3287 = vpop.f32.mrb[0].mxu0
      %3288 = vmatprep.mubr.f32.mxu0 0.0
      %3289 = vmatmul.mubr.f32.gmra.mrb[0].mxu0 %v3098
      %v3290 = vpop.f32.mrb[0].mxu0
      %v3291 = vadd.f32 %v2967, %v3290
      %v3292 = vpop.f32.mrb[0].mxu0
      %3293 = vmatprep.mubr.f32.mxu0 0.0
      %3294 = vmatmul.mubr.f32.gmra.mrb[0].mxu0 %v3101
      %v3295 = vpop.f32.mrb[0].mxu0
      %v3296 = vadd.f32 %v2972, %v3295
      %v3297 = vpop.f32.mrb[0].mxu0
      %3298 = vmatprep.mubr.f32.mxu0 0.0
      %3299 = vmatmul.mubr.f32.gmra.mrb[0].mxu0 %v3104
      %v3300 = vpop.f32.mrb[0].mxu0
      %v3301 = vadd.f32 %v2977, %v3300
      %v3302 = vpop.f32.mrb[0].mxu0
      %3303 = vmatprep.mubr.f32.mxu0 0.0
      %3304 = vmatmul.mubr.f32.gmra.mrb[0].mxu0 %v3107
      %v3305 = vpop.f32.mrb[0].mxu0
      %v3306 = vadd.f32 %v2982, %v3305
      %v3307 = vpop.f32.mrb[0].mxu0
      %3308 = vmatprep.mubr.f32.mxu0 0.0
      %3309 = vmatmul.mubr.f32.gmra.mrb[0].mxu0 %v3110
      %v3310 = vpop.f32.mrb[0].mxu0
      %v3311 = vadd.f32 %v2987, %v3310
      %v3312 = vpop.f32.mrb[0].mxu0
      %3313 = vmatprep.mubr.f32.mxu0 0.0
      %3314 = vmatmul.mubr.f32.gmra.mrb[0].mxu0 %v3113
      %v3315 = vpop.f32.mrb[0].mxu0
      %v3316 = vadd.f32 %v2992, %v3315
      %v3317 = vpop.f32.mrb[0].mxu0
      %3318 = vmatprep.mubr.f32.mxu0 0.0
      %3319 = vmatmul.mubr.f32.gmra.mrb[0].mxu0 %v3116
      %v3320 = vpop.f32.mrb[0].mxu0
      %v3321 = vadd.f32 %v2997, %v3320
      %v3322 = vpop.f32.mrb[0].mxu0
      %3323 = vmatprep.mubr.f32.mxu0 0.0
      %3324 = vmatmul.mubr.f32.gmra.mrb[0].mxu0 %v3119
      %v3325 = vpop.f32.mrb[0].mxu0
      %v3326 = vadd.f32 %v3002, %v3325
      %v3327 = vpop.f32.mrb[0].mxu0
      %3328 = vmatprep.mubr.f32.mxu0 0.0
      %3329 = vmatmul.mubr.f32.gmra.mrb[0].mxu0 %v3122
      %v3330 = vpop.f32.mrb[0].mxu0
      %v3331 = vadd.f32 %v3007, %v3330
      %v3332 = vpop.f32.mrb[0].mxu0
      %3333 = vmatprep.mubr.f32.mxu0 0.0
      %3334 = vmatmul.mubr.f32.gmra.mrb[0].mxu0 %v3125
      %v3335 = vpop.f32.mrb[0].mxu0
      %v3336 = vadd.f32 %v3012, %v3335
      %v3337 = vpop.f32.mrb[0].mxu0
      %3338 = vmatprep.mubr.f32.mxu0 0.0
      %3339 = vmatmul.mubr.f32.gmra.mrb[0].mxu0 %v3128
      %v3340 = vpop.f32.mrb[0].mxu0
      %v3341 = vadd.f32 %v3017, %v3340
      %v3342 = vpop.f32.mrb[0].mxu0
      %3343 = vmatprep.mubr.f32.mxu0 0.0
      %3344 = vmatmul.mubr.f32.gmra.mrb[0].mxu0 %v3131
      %v3345 = vpop.f32.mrb[0].mxu0
      %v3346 = vadd.f32 %v3022, %v3345
      %v3347 = vpop.f32.mrb[0].mxu0
      %3348 = vmatprep.mubr.f32.mxu0 0.0
      %3349 = vmatmul.mubr.f32.gmra.mrb[0].mxu0 %v3134
      %v3350 = vpop.f32.mrb[0].mxu0
      %v3351 = vadd.f32 %v3027, %v3350
      %v3352 = vpop.f32.mrb[0].mxu0
      %3353 = vmatprep.mubr.f32.mxu0 0.0
      %3354 = vmatmul.mubr.f32.gmra.mrb[0].mxu0 %v3137
      %v3355 = vpop.f32.mrb[0].mxu0
      %v3356 = vadd.f32 %v3032, %v3355
      %v3357 = vpop.f32.mrb[0].mxu0
      %3358 = vmatprep.mubr.f32.mxu0 0.0
      %3359 = vmatmul.mubr.f32.gmra.mrb[0].mxu0 %v3140
      %v3360 = vpop.f32.mrb[0].mxu0
      %v3361 = vadd.f32 %v3037, %v3360
      %v3362 = vpop.f32.mrb[0].mxu0
      %3363 = vmatprep.mubr.f32.mxu0 0.0
      %3364 = vmatmul.mubr.f32.gmra.mrb[0].mxu0 %v3143
      %v3365 = vpop.f32.mrb[0].mxu0
      %v3366 = vadd.f32 %v3042, %v3365
      %v3367 = vpop.f32.mrb[0].mxu0
      %3368 = vmatprep.mubr.f32.mxu0 0.0
      %3369 = vmatmul.mubr.f32.gmra.mrb[0].mxu0 %v3146
      %v3370 = vpop.f32.mrb[0].mxu0
      %v3371 = vadd.f32 %v3047, %v3370
      %v3372 = vpop.f32.mrb[0].mxu0
      %3373 = vmatprep.mubr.f32.mxu0 0.0
      %3374 = vmatmul.mubr.f32.gmra.mrb[0].mxu0 %v3149
      %v3375 = vpop.f32.mrb[0].mxu0
      %v3376 = vadd.f32 %v3052, %v3375
      %v3377 = vpop.f32.mrb[0].mxu0
      %3378 = vdwg.mxu0
      %s3379 = scalar_lea.vmem %s3, 4
      %v3380 = vld [vmem:[%s3379] sm:$0x3]
      %v3382 = vsel %vm2729, %v2070, 0
      %v3385 = vsel %vm2729, %v2071, 0
      %v3388 = vsel %vm2729, %v2072, 0
      %v3391 = vsel %vm2729, %v2073, 0
      %v3394 = vsel %vm2729, %v2074, 0
      %v3397 = vsel %vm2729, %v2075, 0
      %v3400 = vsel %vm2729, %v2076, 0
      %v3403 = vsel %vm2729, %v2077, 0
      %v3406 = vsel %vm2729, %v2078, 0
      %v3409 = vsel %vm2729, %v2079, 0
      %v3412 = vsel %vm2729, %v2080, 0
      %v3415 = vsel %vm2729, %v2081, 0
      %v3418 = vsel %vm2729, %v2082, 0
      %v3421 = vsel %vm2729, %v2083, 0
      %v3424 = vsel %vm2729, %v2084, 0
      %v3427 = vsel %vm2729, %v2085, 0
      %v3430 = vsel %vm2729, %v2086, 0
      %v3433 = vsel %vm2729, %v2087, 0
      %v3436 = vsel %vm2729, %v2088, 0
      %v3439 = vsel %vm2729, %v2089, 0
      %v3442 = vsel %vm2729, %v2090, 0
      %v3445 = vsel %vm2729, %v2091, 0
      %v3448 = vsel %vm2729, %v2092, 0
      %v3451 = vsel %vm2729, %v2093, 0
      %v3454 = vsel %vm2729, %v2094, 0
      %v3457 = vsel %vm2729, %v2095, 0
      %v3460 = vsel %vm2729, %v2096, 0
      %v3463 = vsel %vm2729, %v2097, 0
      %v3466 = vsel %vm2729, %v2098, 0
      %v3469 = vsel %vm2729, %v2099, 0
      %v3472 = vsel %vm2729, %v2100, 0
      %v3475 = vsel %vm2729, %v2101, 0
      %v3478 = vsel %vm2826, %v3380, 0
      %3480 = vmatprep.subr.mxu0 0.0
      %3481 = vmatpush1.msra.mxu0 %v3478
      %3482 = vmatprep.subr.mxu0 0.0
      %3483 = vmatpush1.msra.mxu0 0.0
      %3484 = vmatprep.subr.mxu0 0.0
      %3485 = vmatpush1.msra.mxu0 0.0
      %3486 = vmatprep.subr.mxu0 0.0
      %3487 = vmatpush1.msra.mxu0 0.0
      %3488 = vmatprep.subr.mxu0 0.0
      %3489 = vmatpush1.msra.mxu0 0.0
      %3490 = vmatprep.subr.mxu0 0.0
      %3491 = vmatpush1.msra.mxu0 0.0
      %3492 = vmatprep.subr.mxu0 0.0
      %3493 = vmatpush1.msra.mxu0 0.0
      %3494 = vmatprep.subr.mxu0 0.0
      %3495 = vmatpush1.msra.mxu0 0.0
      %3496 = vmatprep.subr.mxu0 0.0
      %3497 = vmatpush1.msra.mxu0 0.0
      %3498 = vmatprep.subr.mxu0 0.0
      %3499 = vmatpush1.msra.mxu0 0.0
      %3500 = vmatprep.subr.mxu0 0.0
      %3501 = vmatpush1.msra.mxu0 0.0
      %3502 = vmatprep.subr.mxu0 0.0
      %3503 = vmatpush1.msra.mxu0 0.0
      %3504 = vmatprep.subr.mxu0 0.0
      %3505 = vmatpush1.msra.mxu0 0.0
      %3506 = vmatprep.subr.mxu0 0.0
      %3507 = vmatpush1.msra.mxu0 0.0
      %3508 = vmatprep.subr.mxu0 0.0
      %3509 = vmatpush1.msra.mxu0 0.0
      %3510 = vmatprep.subr.mxu0 0.0
      %3511 = vmatpush1.msra.mxu0 0.0
      %3512 = vmatprep.subr.mxu0 0.0
      %3513 = vmatpush1.msra.mxu0 0.0
      %3514 = vmatprep.subr.mxu0 0.0
      %3515 = vmatpush1.msra.mxu0 0.0
      %3516 = vmatprep.subr.mxu0 0.0
      %3517 = vmatpush1.msra.mxu0 0.0
      %3518 = vmatprep.subr.mxu0 0.0
      %3519 = vmatpush1.msra.mxu0 0.0
      %3520 = vmatprep.subr.mxu0 0.0
      %3521 = vmatpush1.msra.mxu0 0.0
      %3522 = vmatprep.subr.mxu0 0.0
      %3523 = vmatpush1.msra.mxu0 0.0
      %3524 = vmatprep.subr.mxu0 0.0
      %3525 = vmatpush1.msra.mxu0 0.0
      %3526 = vmatprep.subr.mxu0 0.0
      %3527 = vmatpush1.msra.mxu0 0.0
      %3528 = vmatprep.subr.mxu0 0.0
      %3529 = vmatpush1.msra.mxu0 0.0
      %3530 = vmatprep.subr.mxu0 0.0
      %3531 = vmatpush1.msra.mxu0 0.0
      %3532 = vmatprep.subr.mxu0 0.0
      %3533 = vmatpush1.msra.mxu0 0.0
      %3534 = vmatprep.subr.mxu0 0.0
      %3535 = vmatpush1.msra.mxu0 0.0
      %3536 = vmatprep.subr.mxu0 0.0
      %3537 = vmatpush1.msra.mxu0 0.0
      %3538 = vmatprep.subr.mxu0 0.0
      %3539 = vmatpush1.msra.mxu0 0.0
      %3540 = vmatprep.subr.mxu0 0.0
      %3541 = vmatpush1.msra.mxu0 0.0
      %3542 = vmatprep.subr.mxu0 0.0
      %3543 = vmatpush1.msra.mxu0 0.0
      %3544 = vmatprep.mubr.f32.mxu0 0.0
      %3545 = vmatmul.mubr.f32.gmra.mrb[0].mxu0 %v3382
      %v3546 = vpop.f32.mrb[0].mxu0
      %v3547 = vadd.f32 0.0, %v3546
      %v3548 = vpop.f32.mrb[0].mxu0
      %3549 = vmatprep.mubr.f32.mxu0 0.0
      %3550 = vmatmul.mubr.f32.gmra.mrb[0].mxu0 %v3385
      %v3551 = vpop.f32.mrb[0].mxu0
      %v3552 = vadd.f32 0.0, %v3551
      %v3553 = vpop.f32.mrb[0].mxu0
      %3554 = vmatprep.mubr.f32.mxu0 0.0
      %3555 = vmatmul.mubr.f32.gmra.mrb[0].mxu0 %v3388
      %v3556 = vpop.f32.mrb[0].mxu0
      %v3557 = vadd.f32 0.0, %v3556
      %v3558 = vpop.f32.mrb[0].mxu0
      %3559 = vmatprep.mubr.f32.mxu0 0.0
      %3560 = vmatmul.mubr.f32.gmra.mrb[0].mxu0 %v3391
      %v3561 = vpop.f32.mrb[0].mxu0
      %v3562 = vadd.f32 0.0, %v3561
      %v3563 = vpop.f32.mrb[0].mxu0
      %3564 = vmatprep.mubr.f32.mxu0 0.0
      %3565 = vmatmul.mubr.f32.gmra.mrb[0].mxu0 %v3394
      %v3566 = vpop.f32.mrb[0].mxu0
      %v3567 = vadd.f32 0.0, %v3566
      %v3568 = vpop.f32.mrb[0].mxu0
      %3569 = vmatprep.mubr.f32.mxu0 0.0
      %3570 = vmatmul.mubr.f32.gmra.mrb[0].mxu0 %v3397
      %v3571 = vpop.f32.mrb[0].mxu0
      %v3572 = vadd.f32 0.0, %v3571
      %v3573 = vpop.f32.mrb[0].mxu0
      %3574 = vmatprep.mubr.f32.mxu0 0.0
      %3575 = vmatmul.mubr.f32.gmra.mrb[0].mxu0 %v3400
      %v3576 = vpop.f32.mrb[0].mxu0
      %v3577 = vadd.f32 0.0, %v3576
      %v3578 = vpop.f32.mrb[0].mxu0
      %3579 = vmatprep.mubr.f32.mxu0 0.0
      %3580 = vmatmul.mubr.f32.gmra.mrb[0].mxu0 %v3403
      %v3581 = vpop.f32.mrb[0].mxu0
      %v3582 = vadd.f32 0.0, %v3581
      %v3583 = vpop.f32.mrb[0].mxu0
      %3584 = vmatprep.mubr.f32.mxu0 0.0
      %3585 = vmatmul.mubr.f32.gmra.mrb[0].mxu0 %v3406
      %v3586 = vpop.f32.mrb[0].mxu0
      %v3587 = vadd.f32 0.0, %v3586
      %v3588 = vpop.f32.mrb[0].mxu0
      %3589 = vmatprep.mubr.f32.mxu0 0.0
      %3590 = vmatmul.mubr.f32.gmra.mrb[0].mxu0 %v3409
      %v3591 = vpop.f32.mrb[0].mxu0
      %v3592 = vadd.f32 0.0, %v3591
      %v3593 = vpop.f32.mrb[0].mxu0
      %3594 = vmatprep.mubr.f32.mxu0 0.0
      %3595 = vmatmul.mubr.f32.gmra.mrb[0].mxu0 %v3412
      %v3596 = vpop.f32.mrb[0].mxu0
      %v3597 = vadd.f32 0.0, %v3596
      %v3598 = vpop.f32.mrb[0].mxu0
      %3599 = vmatprep.mubr.f32.mxu0 0.0
      %3600 = vmatmul.mubr.f32.gmra.mrb[0].mxu0 %v3415
      %v3601 = vpop.f32.mrb[0].mxu0
      %v3602 = vadd.f32 0.0, %v3601
      %v3603 = vpop.f32.mrb[0].mxu0
      %3604 = vmatprep.mubr.f32.mxu0 0.0
      %3605 = vmatmul.mubr.f32.gmra.mrb[0].mxu0 %v3418
      %v3606 = vpop.f32.mrb[0].mxu0
      %v3607 = vadd.f32 0.0, %v3606
      %v3608 = vpop.f32.mrb[0].mxu0
      %3609 = vmatprep.mubr.f32.mxu0 0.0
      %3610 = vmatmul.mubr.f32.gmra.mrb[0].mxu0 %v3421
      %v3611 = vpop.f32.mrb[0].mxu0
      %v3612 = vadd.f32 0.0, %v3611
      %v3613 = vpop.f32.mrb[0].mxu0
      %3614 = vmatprep.mubr.f32.mxu0 0.0
      %3615 = vmatmul.mubr.f32.gmra.mrb[0].mxu0 %v3424
      %v3616 = vpop.f32.mrb[0].mxu0
      %v3617 = vadd.f32 0.0, %v3616
      %v3618 = vpop.f32.mrb[0].mxu0
      %3619 = vmatprep.mubr.f32.mxu0 0.0
      %3620 = vmatmul.mubr.f32.gmra.mrb[0].mxu0 %v3427
      %v3621 = vpop.f32.mrb[0].mxu0
      %v3622 = vadd.f32 0.0, %v3621
      %v3623 = vpop.f32.mrb[0].mxu0
      %3624 = vmatprep.mubr.f32.mxu0 0.0
      %3625 = vmatmul.mubr.f32.gmra.mrb[0].mxu0 %v3430
      %v3626 = vpop.f32.mrb[0].mxu0
      %v3627 = vadd.f32 0.0, %v3626
      %v3628 = vpop.f32.mrb[0].mxu0
      %3629 = vmatprep.mubr.f32.mxu0 0.0
      %3630 = vmatmul.mubr.f32.gmra.mrb[0].mxu0 %v3433
      %v3631 = vpop.f32.mrb[0].mxu0
      %v3632 = vadd.f32 0.0, %v3631
      %v3633 = vpop.f32.mrb[0].mxu0
      %3634 = vmatprep.mubr.f32.mxu0 0.0
      %3635 = vmatmul.mubr.f32.gmra.mrb[0].mxu0 %v3436
      %v3636 = vpop.f32.mrb[0].mxu0
      %v3637 = vadd.f32 0.0, %v3636
      %v3638 = vpop.f32.mrb[0].mxu0
      %3639 = vmatprep.mubr.f32.mxu0 0.0
      %3640 = vmatmul.mubr.f32.gmra.mrb[0].mxu0 %v3439
      %v3641 = vpop.f32.mrb[0].mxu0
      %v3642 = vadd.f32 0.0, %v3641
      %v3643 = vpop.f32.mrb[0].mxu0
      %3644 = vmatprep.mubr.f32.mxu0 0.0
      %3645 = vmatmul.mubr.f32.gmra.mrb[0].mxu0 %v3442
      %v3646 = vpop.f32.mrb[0].mxu0
      %v3647 = vadd.f32 0.0, %v3646
      %v3648 = vpop.f32.mrb[0].mxu0
      %3649 = vmatprep.mubr.f32.mxu0 0.0
      %3650 = vmatmul.mubr.f32.gmra.mrb[0].mxu0 %v3445
      %v3651 = vpop.f32.mrb[0].mxu0
      %v3652 = vadd.f32 0.0, %v3651
      %v3653 = vpop.f32.mrb[0].mxu0
      %3654 = vmatprep.mubr.f32.mxu0 0.0
      %3655 = vmatmul.mubr.f32.gmra.mrb[0].mxu0 %v3448
      %v3656 = vpop.f32.mrb[0].mxu0
      %v3657 = vadd.f32 0.0, %v3656
      %v3658 = vpop.f32.mrb[0].mxu0
      %3659 = vmatprep.mubr.f32.mxu0 0.0
      %3660 = vmatmul.mubr.f32.gmra.mrb[0].mxu0 %v3451
      %v3661 = vpop.f32.mrb[0].mxu0
      %v3662 = vadd.f32 0.0, %v3661
      %v3663 = vpop.f32.mrb[0].mxu0
      %3664 = vmatprep.mubr.f32.mxu0 0.0
      %3665 = vmatmul.mubr.f32.gmra.mrb[0].mxu0 %v3454
      %v3666 = vpop.f32.mrb[0].mxu0
      %v3667 = vadd.f32 0.0, %v3666
      %v3668 = vpop.f32.mrb[0].mxu0
      %3669 = vmatprep.mubr.f32.mxu0 0.0
      %3670 = vmatmul.mubr.f32.gmra.mrb[0].mxu0 %v3457
      %v3671 = vpop.f32.mrb[0].mxu0
      %v3672 = vadd.f32 0.0, %v3671
      %v3673 = vpop.f32.mrb[0].mxu0
      %3674 = vmatprep.mubr.f32.mxu0 0.0
      %3675 = vmatmul.mubr.f32.gmra.mrb[0].mxu0 %v3460
      %v3676 = vpop.f32.mrb[0].mxu0
      %v3677 = vadd.f32 0.0, %v3676
      %v3678 = vpop.f32.mrb[0].mxu0
      %3679 = vmatprep.mubr.f32.mxu0 0.0
      %3680 = vmatmul.mubr.f32.gmra.mrb[0].mxu0 %v3463
      %v3681 = vpop.f32.mrb[0].mxu0
      %v3682 = vadd.f32 0.0, %v3681
      %v3683 = vpop.f32.mrb[0].mxu0
      %3684 = vmatprep.mubr.f32.mxu0 0.0
      %3685 = vmatmul.mubr.f32.gmra.mrb[0].mxu0 %v3466
      %v3686 = vpop.f32.mrb[0].mxu0
      %v3687 = vadd.f32 0.0, %v3686
      %v3688 = vpop.f32.mrb[0].mxu0
      %3689 = vmatprep.mubr.f32.mxu0 0.0
      %3690 = vmatmul.mubr.f32.gmra.mrb[0].mxu0 %v3469
      %v3691 = vpop.f32.mrb[0].mxu0
      %v3692 = vadd.f32 0.0, %v3691
      %v3693 = vpop.f32.mrb[0].mxu0
      %3694 = vmatprep.mubr.f32.mxu0 0.0
      %3695 = vmatmul.mubr.f32.gmra.mrb[0].mxu0 %v3472
      %v3696 = vpop.f32.mrb[0].mxu0
      %v3697 = vadd.f32 0.0, %v3696
      %v3698 = vpop.f32.mrb[0].mxu0
      %3699 = vmatprep.mubr.f32.mxu0 0.0
      %3700 = vmatmul.mubr.f32.gmra.mrb[0].mxu0 %v3475
      %v3701 = vpop.f32.mrb[0].mxu0
      %v3702 = vadd.f32 0.0, %v3701
      %v3703 = vpop.f32.mrb[0].mxu0
      %3704 = vdwg.mxu0
      %v3705 = vadd.f32 %v3221, %v3547
      %v3706 = vadd.f32 %v3226, %v3552
      %v3707 = vadd.f32 %v3231, %v3557
      %v3708 = vadd.f32 %v3236, %v3562
      %v3709 = vadd.f32 %v3241, %v3567
      %v3710 = vadd.f32 %v3246, %v3572
      %v3711 = vadd.f32 %v3251, %v3577
      %v3712 = vadd.f32 %v3256, %v3582
      %v3713 = vadd.f32 %v3261, %v3587
      %v3714 = vadd.f32 %v3266, %v3592
      %v3715 = vadd.f32 %v3271, %v3597
      %v3716 = vadd.f32 %v3276, %v3602
      %v3717 = vadd.f32 %v3281, %v3607
      %v3718 = vadd.f32 %v3286, %v3612
      %v3719 = vadd.f32 %v3291, %v3617
      %v3720 = vadd.f32 %v3296, %v3622
      %v3721 = vadd.f32 %v3301, %v3627
      %v3722 = vadd.f32 %v3306, %v3632
      %v3723 = vadd.f32 %v3311, %v3637
      %v3724 = vadd.f32 %v3316, %v3642
      %v3725 = vadd.f32 %v3321, %v3647
      %v3726 = vadd.f32 %v3326, %v3652
      %v3727 = vadd.f32 %v3331, %v3657
      %v3728 = vadd.f32 %v3336, %v3662
      %v3729 = vadd.f32 %v3341, %v3667
      %v3730 = vadd.f32 %v3346, %v3672
      %v3731 = vadd.f32 %v3351, %v3677
      %v3732 = vadd.f32 %v3356, %v3682
      %v3733 = vadd.f32 %v3361, %v3687
      %v3734 = vadd.f32 %v3366, %v3692
      %v3735 = vadd.f32 %v3371, %v3697
      %v3736 = vadd.f32 %v3376, %v3702
      %s3737 = scalar_lea.vmem %s3, 6
      %v3738 = vld [vmem:[%s3737] sm:$0x3]
      %v3740 = vsel %vm2729, %v2694, 0
      %v3743 = vsel %vm2729, %v2695, 0
      %v3746 = vsel %vm2729, %v2696, 0
      %v3749 = vsel %vm2729, %v2697, 0
      %v3752 = vsel %vm2729, %v2698, 0
      %v3755 = vsel %vm2729, %v2699, 0
      %v3758 = vsel %vm2729, %v2700, 0
      %v3761 = vsel %vm2729, %v2701, 0
      %v3764 = vsel %vm2729, %v2702, 0
      %v3767 = vsel %vm2729, %v2703, 0
      %v3770 = vsel %vm2729, %v2704, 0
      %v3773 = vsel %vm2729, %v2705, 0
      %v3776 = vsel %vm2729, %v2706, 0
      %v3779 = vsel %vm2729, %v2707, 0
      %v3782 = vsel %vm2729, %v2708, 0
      %v3785 = vsel %vm2729, %v2709, 0
      %v3788 = vsel %vm2729, %v2710, 0
      %v3791 = vsel %vm2729, %v2711, 0
      %v3794 = vsel %vm2729, %v2712, 0
      %v3797 = vsel %vm2729, %v2713, 0
      %v3800 = vsel %vm2729, %v2714, 0
      %v3803 = vsel %vm2729, %v2715, 0
      %v3806 = vsel %vm2729, %v2716, 0
      %v3809 = vsel %vm2729, %v2717, 0
      %v3812 = vsel %vm2729, %v2718, 0
      %v3815 = vsel %vm2729, %v2719, 0
      %v3818 = vsel %vm2729, %v2720, 0
      %v3821 = vsel %vm2729, %v2721, 0
      %v3824 = vsel %vm2729, %v2722, 0
      %v3827 = vsel %vm2729, %v2723, 0
      %v3830 = vsel %vm2729, %v2724, 0
      %v3833 = vsel %vm2729, %v2725, 0
      %v3836 = vsel %vm2826, %v3738, 0
      %3838 = vmatprep.subr.mxu0 0.0
      %3839 = vmatpush1.msra.mxu0 %v3836
      %3840 = vmatprep.subr.mxu0 0.0
      %3841 = vmatpush1.msra.mxu0 0.0
      %3842 = vmatprep.subr.mxu0 0.0
      %3843 = vmatpush1.msra.mxu0 0.0
      %3844 = vmatprep.subr.mxu0 0.0
      %3845 = vmatpush1.msra.mxu0 0.0
      %3846 = vmatprep.subr.mxu0 0.0
      %3847 = vmatpush1.msra.mxu0 0.0
      %3848 = vmatprep.subr.mxu0 0.0
      %3849 = vmatpush1.msra.mxu0 0.0
      %3850 = vmatprep.subr.mxu0 0.0
      %3851 = vmatpush1.msra.mxu0 0.0
      %3852 = vmatprep.subr.mxu0 0.0
      %3853 = vmatpush1.msra.mxu0 0.0
      %3854 = vmatprep.subr.mxu0 0.0
      %3855 = vmatpush1.msra.mxu0 0.0
      %3856 = vmatprep.subr.mxu0 0.0
      %3857 = vmatpush1.msra.mxu0 0.0
      %3858 = vmatprep.subr.mxu0 0.0
      %3859 = vmatpush1.msra.mxu0 0.0
      %3860 = vmatprep.subr.mxu0 0.0
      %3861 = vmatpush1.msra.mxu0 0.0
      %3862 = vmatprep.subr.mxu0 0.0
      %3863 = vmatpush1.msra.mxu0 0.0
      %3864 = vmatprep.subr.mxu0 0.0
      %3865 = vmatpush1.msra.mxu0 0.0
      %3866 = vmatprep.subr.mxu0 0.0
      %3867 = vmatpush1.msra.mxu0 0.0
      %3868 = vmatprep.subr.mxu0 0.0
      %3869 = vmatpush1.msra.mxu0 0.0
      %3870 = vmatprep.subr.mxu0 0.0
      %3871 = vmatpush1.msra.mxu0 0.0
      %3872 = vmatprep.subr.mxu0 0.0
      %3873 = vmatpush1.msra.mxu0 0.0
      %3874 = vmatprep.subr.mxu0 0.0
      %3875 = vmatpush1.msra.mxu0 0.0
      %3876 = vmatprep.subr.mxu0 0.0
      %3877 = vmatpush1.msra.mxu0 0.0
      %3878 = vmatprep.subr.mxu0 0.0
      %3879 = vmatpush1.msra.mxu0 0.0
      %3880 = vmatprep.subr.mxu0 0.0
      %3881 = vmatpush1.msra.mxu0 0.0
      %3882 = vmatprep.subr.mxu0 0.0
      %3883 = vmatpush1.msra.mxu0 0.0
      %3884 = vmatprep.subr.mxu0 0.0
      %3885 = vmatpush1.msra.mxu0 0.0
      %3886 = vmatprep.subr.mxu0 0.0
      %3887 = vmatpush1.msra.mxu0 0.0
      %3888 = vmatprep.subr.mxu0 0.0
      %3889 = vmatpush1.msra.mxu0 0.0
      %3890 = vmatprep.subr.mxu0 0.0
      %3891 = vmatpush1.msra.mxu0 0.0
      %3892 = vmatprep.subr.mxu0 0.0
      %3893 = vmatpush1.msra.mxu0 0.0
      %3894 = vmatprep.subr.mxu0 0.0
      %3895 = vmatpush1.msra.mxu0 0.0
      %3896 = vmatprep.subr.mxu0 0.0
      %3897 = vmatpush1.msra.mxu0 0.0
      %3898 = vmatprep.subr.mxu0 0.0
      %3899 = vmatpush1.msra.mxu0 0.0
      %3900 = vmatprep.subr.mxu0 0.0
      %3901 = vmatpush1.msra.mxu0 0.0
      %3902 = vmatprep.mubr.f32.mxu0 0.0
      %3903 = vmatmul.mubr.f32.gmra.mrb[0].mxu0 %v3740
      %v3904 = vpop.f32.mrb[0].mxu0
      %v3905 = vadd.f32 0.0, %v3904
      %v3906 = vpop.f32.mrb[0].mxu0
      %3907 = vmatprep.mubr.f32.mxu0 0.0
      %3908 = vmatmul.mubr.f32.gmra.mrb[0].mxu0 %v3743
      %v3909 = vpop.f32.mrb[0].mxu0
      %v3910 = vadd.f32 0.0, %v3909
      %v3911 = vpop.f32.mrb[0].mxu0
      %3912 = vmatprep.mubr.f32.mxu0 0.0
      %3913 = vmatmul.mubr.f32.gmra.mrb[0].mxu0 %v3746
      %v3914 = vpop.f32.mrb[0].mxu0
      %v3915 = vadd.f32 0.0, %v3914
      %v3916 = vpop.f32.mrb[0].mxu0
      %3917 = vmatprep.mubr.f32.mxu0 0.0
      %3918 = vmatmul.mubr.f32.gmra.mrb[0].mxu0 %v3749
      %v3919 = vpop.f32.mrb[0].mxu0
      %v3920 = vadd.f32 0.0, %v3919
      %v3921 = vpop.f32.mrb[0].mxu0
      %3922 = vmatprep.mubr.f32.mxu0 0.0
      %3923 = vmatmul.mubr.f32.gmra.mrb[0].mxu0 %v3752
      %v3924 = vpop.f32.mrb[0].mxu0
      %v3925 = vadd.f32 0.0, %v3924
      %v3926 = vpop.f32.mrb[0].mxu0
      %3927 = vmatprep.mubr.f32.mxu0 0.0
      %3928 = vmatmul.mubr.f32.gmra.mrb[0].mxu0 %v3755
      %v3929 = vpop.f32.mrb[0].mxu0
      %v3930 = vadd.f32 0.0, %v3929
      %v3931 = vpop.f32.mrb[0].mxu0
      %3932 = vmatprep.mubr.f32.mxu0 0.0
      %3933 = vmatmul.mubr.f32.gmra.mrb[0].mxu0 %v3758
      %v3934 = vpop.f32.mrb[0].mxu0
      %v3935 = vadd.f32 0.0, %v3934
      %v3936 = vpop.f32.mrb[0].mxu0
      %3937 = vmatprep.mubr.f32.mxu0 0.0
      %3938 = vmatmul.mubr.f32.gmra.mrb[0].mxu0 %v3761
      %v3939 = vpop.f32.mrb[0].mxu0
      %v3940 = vadd.f32 0.0, %v3939
      %v3941 = vpop.f32.mrb[0].mxu0
      %3942 = vmatprep.mubr.f32.mxu0 0.0
      %3943 = vmatmul.mubr.f32.gmra.mrb[0].mxu0 %v3764
      %v3944 = vpop.f32.mrb[0].mxu0
      %v3945 = vadd.f32 0.0, %v3944
      %v3946 = vpop.f32.mrb[0].mxu0
      %3947 = vmatprep.mubr.f32.mxu0 0.0
      %3948 = vmatmul.mubr.f32.gmra.mrb[0].mxu0 %v3767
      %v3949 = vpop.f32.mrb[0].mxu0
      %v3950 = vadd.f32 0.0, %v3949
      %v3951 = vpop.f32.mrb[0].mxu0
      %3952 = vmatprep.mubr.f32.mxu0 0.0
      %3953 = vmatmul.mubr.f32.gmra.mrb[0].mxu0 %v3770
      %v3954 = vpop.f32.mrb[0].mxu0
      %v3955 = vadd.f32 0.0, %v3954
      %v3956 = vpop.f32.mrb[0].mxu0
      %3957 = vmatprep.mubr.f32.mxu0 0.0
      %3958 = vmatmul.mubr.f32.gmra.mrb[0].mxu0 %v3773
      %v3959 = vpop.f32.mrb[0].mxu0
      %v3960 = vadd.f32 0.0, %v3959
      %v3961 = vpop.f32.mrb[0].mxu0
      %3962 = vmatprep.mubr.f32.mxu0 0.0
      %3963 = vmatmul.mubr.f32.gmra.mrb[0].mxu0 %v3776
      %v3964 = vpop.f32.mrb[0].mxu0
      %v3965 = vadd.f32 0.0, %v3964
      %v3966 = vpop.f32.mrb[0].mxu0
      %3967 = vmatprep.mubr.f32.mxu0 0.0
      %3968 = vmatmul.mubr.f32.gmra.mrb[0].mxu0 %v3779
      %v3969 = vpop.f32.mrb[0].mxu0
      %v3970 = vadd.f32 0.0, %v3969
      %v3971 = vpop.f32.mrb[0].mxu0
      %3972 = vmatprep.mubr.f32.mxu0 0.0
      %3973 = vmatmul.mubr.f32.gmra.mrb[0].mxu0 %v3782
      %v3974 = vpop.f32.mrb[0].mxu0
      %v3975 = vadd.f32 0.0, %v3974
      %v3976 = vpop.f32.mrb[0].mxu0
      %3977 = vmatprep.mubr.f32.mxu0 0.0
      %3978 = vmatmul.mubr.f32.gmra.mrb[0].mxu0 %v3785
      %v3979 = vpop.f32.mrb[0].mxu0
      %v3980 = vadd.f32 0.0, %v3979
      %v3981 = vpop.f32.mrb[0].mxu0
      %3982 = vmatprep.mubr.f32.mxu0 0.0
      %3983 = vmatmul.mubr.f32.gmra.mrb[0].mxu0 %v3788
      %v3984 = vpop.f32.mrb[0].mxu0
      %v3985 = vadd.f32 0.0, %v3984
      %v3986 = vpop.f32.mrb[0].mxu0
      %3987 = vmatprep.mubr.f32.mxu0 0.0
      %3988 = vmatmul.mubr.f32.gmra.mrb[0].mxu0 %v3791
      %v3989 = vpop.f32.mrb[0].mxu0
      %v3990 = vadd.f32 0.0, %v3989
      %v3991 = vpop.f32.mrb[0].mxu0
      %3992 = vmatprep.mubr.f32.mxu0 0.0
      %3993 = vmatmul.mubr.f32.gmra.mrb[0].mxu0 %v3794
      %v3994 = vpop.f32.mrb[0].mxu0
      %v3995 = vadd.f32 0.0, %v3994
      %v3996 = vpop.f32.mrb[0].mxu0
      %3997 = vmatprep.mubr.f32.mxu0 0.0
      %3998 = vmatmul.mubr.f32.gmra.mrb[0].mxu0 %v3797
      %v3999 = vpop.f32.mrb[0].mxu0
      %v4000 = vadd.f32 0.0, %v3999
      %v4001 = vpop.f32.mrb[0].mxu0
      %4002 = vmatprep.mubr.f32.mxu0 0.0
      %4003 = vmatmul.mubr.f32.gmra.mrb[0].mxu0 %v3800
      %v4004 = vpop.f32.mrb[0].mxu0
      %v4005 = vadd.f32 0.0, %v4004
      %v4006 = vpop.f32.mrb[0].mxu0
      %4007 = vmatprep.mubr.f32.mxu0 0.0
      %4008 = vmatmul.mubr.f32.gmra.mrb[0].mxu0 %v3803
      %v4009 = vpop.f32.mrb[0].mxu0
      %v4010 = vadd.f32 0.0, %v4009
      %v4011 = vpop.f32.mrb[0].mxu0
      %4012 = vmatprep.mubr.f32.mxu0 0.0
      %4013 = vmatmul.mubr.f32.gmra.mrb[0].mxu0 %v3806
      %v4014 = vpop.f32.mrb[0].mxu0
      %v4015 = vadd.f32 0.0, %v4014
      %v4016 = vpop.f32.mrb[0].mxu0
      %4017 = vmatprep.mubr.f32.mxu0 0.0
      %4018 = vmatmul.mubr.f32.gmra.mrb[0].mxu0 %v3809
      %v4019 = vpop.f32.mrb[0].mxu0
      %v4020 = vadd.f32 0.0, %v4019
      %v4021 = vpop.f32.mrb[0].mxu0
      %4022 = vmatprep.mubr.f32.mxu0 0.0
      %4023 = vmatmul.mubr.f32.gmra.mrb[0].mxu0 %v3812
      %v4024 = vpop.f32.mrb[0].mxu0
      %v4025 = vadd.f32 0.0, %v4024
      %v4026 = vpop.f32.mrb[0].mxu0
      %4027 = vmatprep.mubr.f32.mxu0 0.0
      %4028 = vmatmul.mubr.f32.gmra.mrb[0].mxu0 %v3815
      %v4029 = vpop.f32.mrb[0].mxu0
      %v4030 = vadd.f32 0.0, %v4029
      %v4031 = vpop.f32.mrb[0].mxu0
      %4032 = vmatprep.mubr.f32.mxu0 0.0
      %4033 = vmatmul.mubr.f32.gmra.mrb[0].mxu0 %v3818
      %v4034 = vpop.f32.mrb[0].mxu0
      %v4035 = vadd.f32 0.0, %v4034
      %v4036 = vpop.f32.mrb[0].mxu0
      %4037 = vmatprep.mubr.f32.mxu0 0.0
      %4038 = vmatmul.mubr.f32.gmra.mrb[0].mxu0 %v3821
      %v4039 = vpop.f32.mrb[0].mxu0
      %v4040 = vadd.f32 0.0, %v4039
      %v4041 = vpop.f32.mrb[0].mxu0
      %4042 = vmatprep.mubr.f32.mxu0 0.0
      %4043 = vmatmul.mubr.f32.gmra.mrb[0].mxu0 %v3824
      %v4044 = vpop.f32.mrb[0].mxu0
      %v4045 = vadd.f32 0.0, %v4044
      %v4046 = vpop.f32.mrb[0].mxu0
      %4047 = vmatprep.mubr.f32.mxu0 0.0
      %4048 = vmatmul.mubr.f32.gmra.mrb[0].mxu0 %v3827
      %v4049 = vpop.f32.mrb[0].mxu0
      %v4050 = vadd.f32 0.0, %v4049
      %v4051 = vpop.f32.mrb[0].mxu0
      %4052 = vmatprep.mubr.f32.mxu0 0.0
      %4053 = vmatmul.mubr.f32.gmra.mrb[0].mxu0 %v3830
      %v4054 = vpop.f32.mrb[0].mxu0
      %v4055 = vadd.f32 0.0, %v4054
      %v4056 = vpop.f32.mrb[0].mxu0
      %4057 = vmatprep.mubr.f32.mxu0 0.0
      %4058 = vmatmul.mubr.f32.gmra.mrb[0].mxu0 %v3833
      %v4059 = vpop.f32.mrb[0].mxu0
      %v4060 = vadd.f32 0.0, %v4059
      %v4061 = vpop.f32.mrb[0].mxu0
      %4062 = vdwg.mxu0
      %v4063 = vadd.f32 %v3705, %v3905
      %v4064 = vadd.f32 %v3706, %v3910
      %v4065 = vadd.f32 %v3707, %v3915
      %v4066 = vadd.f32 %v3708, %v3920
      %v4067 = vadd.f32 %v3709, %v3925
      %v4068 = vadd.f32 %v3710, %v3930
      %v4069 = vadd.f32 %v3711, %v3935
      %v4070 = vadd.f32 %v3712, %v3940
      %v4071 = vadd.f32 %v3713, %v3945
      %v4072 = vadd.f32 %v3714, %v3950
      %v4073 = vadd.f32 %v3715, %v3955
      %v4074 = vadd.f32 %v3716, %v3960
      %v4075 = vadd.f32 %v3717, %v3965
      %v4076 = vadd.f32 %v3718, %v3970
      %v4077 = vadd.f32 %v3719, %v3975
      %v4078 = vadd.f32 %v3720, %v3980
      %v4079 = vadd.f32 %v3721, %v3985
      %v4080 = vadd.f32 %v3722, %v3990
      %v4081 = vadd.f32 %v3723, %v3995
      %v4082 = vadd.f32 %v3724, %v4000
      %v4083 = vadd.f32 %v3725, %v4005
      %v4084 = vadd.f32 %v3726, %v4010
      %v4085 = vadd.f32 %v3727, %v4015
      %v4086 = vadd.f32 %v3728, %v4020
      %v4087 = vadd.f32 %v3729, %v4025
      %v4088 = vadd.f32 %v3730, %v4030
      %v4089 = vadd.f32 %v3731, %v4035
      %v4090 = vadd.f32 %v3732, %v4040
      %v4091 = vadd.f32 %v3733, %v4045
      %v4092 = vadd.f32 %v3734, %v4050
      %v4093 = vadd.f32 %v3735, %v4055
      %v4094 = vadd.f32 %v3736, %v4060
      %v4095 = vld [vmem:[%s4] sm:$0x1]
      %v4097 = vlaneseq
      %v4098 = vshrl.u32 %v4097, 7
      %v4099 = vsub.s32 0, %v4098
      %v4100 = vrot.slane %v4095, %v4099
      %v4102 = vadd.f32 %v4063, %v4100
      %v4103 = vadd.f32 %v4064, %v4100
      %v4104 = vadd.f32 %v4065, %v4100
      %v4105 = vadd.f32 %v4066, %v4100
      %v4106 = vadd.f32 %v4067, %v4100
      %v4107 = vadd.f32 %v4068, %v4100
      %v4108 = vadd.f32 %v4069, %v4100
      %v4109 = vadd.f32 %v4070, %v4100
      %v4110 = vadd.f32 %v4071, %v4100
      %v4111 = vadd.f32 %v4072, %v4100
      %v4112 = vadd.f32 %v4073, %v4100
      %v4113 = vadd.f32 %v4074, %v4100
      %v4114 = vadd.f32 %v4075, %v4100
      %v4115 = vadd.f32 %v4076, %v4100
      %v4116 = vadd.f32 %v4077, %v4100
      %v4117 = vadd.f32 %v4078, %v4100
      %v4118 = vadd.f32 %v4079, %v4100
      %v4119 = vadd.f32 %v4080, %v4100
      %v4120 = vadd.f32 %v4081, %v4100
      %v4121 = vadd.f32 %v4082, %v4100
      %v4122 = vadd.f32 %v4083, %v4100
      %v4123 = vadd.f32 %v4084, %v4100
      %v4124 = vadd.f32 %v4085, %v4100
      %v4125 = vadd.f32 %v4086, %v4100
      %v4126 = vadd.f32 %v4087, %v4100
      %v4127 = vadd.f32 %v4088, %v4100
      %v4128 = vadd.f32 %v4089, %v4100
      %v4129 = vadd.f32 %v4090, %v4100
      %v4130 = vadd.f32 %v4091, %v4100
      %v4131 = vadd.f32 %v4092, %v4100
      %v4132 = vadd.f32 %v4093, %v4100
      %v4133 = vadd.f32 %v4094, %v4100
      %v4134 = vxor.u32 %v4102, 2147483648
      %v4135 = vxor.u32 %v4103, 2147483648
      %v4136 = vxor.u32 %v4104, 2147483648
      %v4137 = vxor.u32 %v4105, 2147483648
      %v4138 = vxor.u32 %v4106, 2147483648
      %v4139 = vxor.u32 %v4107, 2147483648
      %v4140 = vxor.u32 %v4108, 2147483648
      %v4141 = vxor.u32 %v4109, 2147483648
      %v4142 = vxor.u32 %v4110, 2147483648
      %v4143 = vxor.u32 %v4111, 2147483648
      %v4144 = vxor.u32 %v4112, 2147483648
      %v4145 = vxor.u32 %v4113, 2147483648
      %v4146 = vxor.u32 %v4114, 2147483648
      %v4147 = vxor.u32 %v4115, 2147483648
      %v4148 = vxor.u32 %v4116, 2147483648
      %v4149 = vxor.u32 %v4117, 2147483648
      %v4150 = vxor.u32 %v4118, 2147483648
      %v4151 = vxor.u32 %v4119, 2147483648
      %v4152 = vxor.u32 %v4120, 2147483648
      %v4153 = vxor.u32 %v4121, 2147483648
      %v4154 = vxor.u32 %v4122, 2147483648
      %v4155 = vxor.u32 %v4123, 2147483648
      %v4156 = vxor.u32 %v4124, 2147483648
      %v4157 = vxor.u32 %v4125, 2147483648
      %v4158 = vxor.u32 %v4126, 2147483648
      %v4159 = vxor.u32 %v4127, 2147483648
      %v4160 = vxor.u32 %v4128, 2147483648
      %v4161 = vxor.u32 %v4129, 2147483648
      %v4162 = vxor.u32 %v4130, 2147483648
      %v4163 = vxor.u32 %v4131, 2147483648
      %v4164 = vxor.u32 %v4132, 2147483648
      %v4165 = vxor.u32 %v4133, 2147483648
      %v4166 = vmul.f32 %v4134, 1.442695
      %v4167 = vpow.pop %v4166
      %v4168 = vmul.f32 %v4135, 1.442695
      %v4169 = vpow.pop %v4168
      %v4170 = vmul.f32 %v4136, 1.442695
      %v4171 = vpow.pop %v4170
      %v4172 = vmul.f32 %v4137, 1.442695
      %v4173 = vpow.pop %v4172
      %v4174 = vmul.f32 %v4138, 1.442695
      %v4175 = vpow.pop %v4174
      %v4176 = vmul.f32 %v4139, 1.442695
      %v4177 = vpow.pop %v4176
      %v4178 = vmul.f32 %v4140, 1.442695
      %v4179 = vpow.pop %v4178
      %v4180 = vmul.f32 %v4141, 1.442695
      %v4181 = vpow.pop %v4180
      %v4182 = vmul.f32 %v4142, 1.442695
      %v4183 = vpow.pop %v4182
      %v4184 = vmul.f32 %v4143, 1.442695
      %v4185 = vpow.pop %v4184
      %v4186 = vmul.f32 %v4144, 1.442695
      %v4187 = vpow.pop %v4186
      %v4188 = vmul.f32 %v4145, 1.442695
      %v4189 = vpow.pop %v4188
      %v4190 = vmul.f32 %v4146, 1.442695
      %v4191 = vpow.pop %v4190
      %v4192 = vmul.f32 %v4147, 1.442695
      %v4193 = vpow.pop %v4192
      %v4194 = vmul.f32 %v4148, 1.442695
      %v4195 = vpow.pop %v4194
      %v4196 = vmul.f32 %v4149, 1.442695
      %v4197 = vpow.pop %v4196
      %v4198 = vmul.f32 %v4150, 1.442695
      %v4199 = vpow.pop %v4198
      %v4200 = vmul.f32 %v4151, 1.442695
      %v4201 = vpow.pop %v4200
      %v4202 = vmul.f32 %v4152, 1.442695
      %v4203 = vpow.pop %v4202
      %v4204 = vmul.f32 %v4153, 1.442695
      %v4205 = vpow.pop %v4204
      %v4206 = vmul.f32 %v4154, 1.442695
      %v4207 = vpow.pop %v4206
      %v4208 = vmul.f32 %v4155, 1.442695
      %v4209 = vpow.pop %v4208
      %v4210 = vmul.f32 %v4156, 1.442695
      %v4211 = vpow.pop %v4210
      %v4212 = vmul.f32 %v4157, 1.442695
      %v4213 = vpow.pop %v4212
      %v4214 = vmul.f32 %v4158, 1.442695
      %v4215 = vpow.pop %v4214
      %v4216 = vmul.f32 %v4159, 1.442695
      %v4217 = vpow.pop %v4216
      %v4218 = vmul.f32 %v4160, 1.442695
      %v4219 = vpow.pop %v4218
      %v4220 = vmul.f32 %v4161, 1.442695
      %v4221 = vpow.pop %v4220
      %v4222 = vmul.f32 %v4162, 1.442695
      %v4223 = vpow.pop %v4222
      %v4224 = vmul.f32 %v4163, 1.442695
      %v4225 = vpow.pop %v4224
      %v4226 = vmul.f32 %v4164, 1.442695
      %v4227 = vpow.pop %v4226
      %v4228 = vmul.f32 %v4165, 1.442695
      %v4229 = vpow.pop %v4228
      %v4230 = vadd.f32 %v4167, 1.0
      %v4231 = vadd.f32 %v4169, 1.0
      %v4232 = vadd.f32 %v4171, 1.0
      %v4233 = vadd.f32 %v4173, 1.0
      %v4234 = vadd.f32 %v4175, 1.0
      %v4235 = vadd.f32 %v4177, 1.0
      %v4236 = vadd.f32 %v4179, 1.0
      %v4237 = vadd.f32 %v4181, 1.0
      %v4238 = vadd.f32 %v4183, 1.0
      %v4239 = vadd.f32 %v4185, 1.0
      %v4240 = vadd.f32 %v4187, 1.0
      %v4241 = vadd.f32 %v4189, 1.0
      %v4242 = vadd.f32 %v4191, 1.0
      %v4243 = vadd.f32 %v4193, 1.0
      %v4244 = vadd.f32 %v4195, 1.0
      %v4245 = vadd.f32 %v4197, 1.0
      %v4246 = vadd.f32 %v4199, 1.0
      %v4247 = vadd.f32 %v4201, 1.0
      %v4248 = vadd.f32 %v4203, 1.0
      %v4249 = vadd.f32 %v4205, 1.0
      %v4250 = vadd.f32 %v4207, 1.0
      %v4251 = vadd.f32 %v4209, 1.0
      %v4252 = vadd.f32 %v4211, 1.0
      %v4253 = vadd.f32 %v4213, 1.0
      %v4254 = vadd.f32 %v4215, 1.0
      %v4255 = vadd.f32 %v4217, 1.0
      %v4256 = vadd.f32 %v4219, 1.0
      %v4257 = vadd.f32 %v4221, 1.0
      %v4258 = vadd.f32 %v4223, 1.0
      %v4259 = vadd.f32 %v4225, 1.0
      %v4260 = vadd.f32 %v4227, 1.0
      %v4261 = vadd.f32 %v4229, 1.0
      %v4262 = vrcp.pop %v4230
      %v4263 = vmul.f32 1.0, %v4262
      %v4264 = vrcp.pop %v4231
      %v4265 = vmul.f32 1.0, %v4264
      %v4266 = vrcp.pop %v4232
      %v4267 = vmul.f32 1.0, %v4266
      %v4268 = vrcp.pop %v4233
      %v4269 = vmul.f32 1.0, %v4268
      %v4270 = vrcp.pop %v4234
      %v4271 = vmul.f32 1.0, %v4270
      %v4272 = vrcp.pop %v4235
      %v4273 = vmul.f32 1.0, %v4272
      %v4274 = vrcp.pop %v4236
      %v4275 = vmul.f32 1.0, %v4274
      %v4276 = vrcp.pop %v4237
      %v4277 = vmul.f32 1.0, %v4276
      %v4278 = vrcp.pop %v4238
      %v4279 = vmul.f32 1.0, %v4278
      %v4280 = vrcp.pop %v4239
      %v4281 = vmul.f32 1.0, %v4280
      %v4282 = vrcp.pop %v4240
      %v4283 = vmul.f32 1.0, %v4282
      %v4284 = vrcp.pop %v4241
      %v4285 = vmul.f32 1.0, %v4284
      %v4286 = vrcp.pop %v4242
      %v4287 = vmul.f32 1.0, %v4286
      %v4288 = vrcp.pop %v4243
      %v4289 = vmul.f32 1.0, %v4288
      %v4290 = vrcp.pop %v4244
      %v4291 = vmul.f32 1.0, %v4290
      %v4292 = vrcp.pop %v4245
      %v4293 = vmul.f32 1.0, %v4292
      %v4294 = vrcp.pop %v4246
      %v4295 = vmul.f32 1.0, %v4294
      %v4296 = vrcp.pop %v4247
      %v4297 = vmul.f32 1.0, %v4296
      %v4298 = vrcp.pop %v4248
      %v4299 = vmul.f32 1.0, %v4298
      %v4300 = vrcp.pop %v4249
      %v4301 = vmul.f32 1.0, %v4300
      %v4302 = vrcp.pop %v4250
      %v4303 = vmul.f32 1.0, %v4302
      %v4304 = vrcp.pop %v4251
      %v4305 = vmul.f32 1.0, %v4304
      %v4306 = vrcp.pop %v4252
      %v4307 = vmul.f32 1.0, %v4306
      %v4308 = vrcp.pop %v4253
      %v4309 = vmul.f32 1.0, %v4308
      %v4310 = vrcp.pop %v4254
      %v4311 = vmul.f32 1.0, %v4310
      %v4312 = vrcp.pop %v4255
      %v4313 = vmul.f32 1.0, %v4312
      %v4314 = vrcp.pop %v4256
      %v4315 = vmul.f32 1.0, %v4314
      %v4316 = vrcp.pop %v4257
      %v4317 = vmul.f32 1.0, %v4316
      %v4318 = vrcp.pop %v4258
      %v4319 = vmul.f32 1.0, %v4318
      %v4320 = vrcp.pop %v4259
      %v4321 = vmul.f32 1.0, %v4320
      %v4322 = vrcp.pop %v4260
      %v4323 = vmul.f32 1.0, %v4322
      %v4324 = vrcp.pop %v4261
      %v4325 = vmul.f32 1.0, %v4324
      %v4326 = vmul.f32 %v4102, %v4263
      %v4327 = vmul.f32 %v4103, %v4265
      %v4328 = vmul.f32 %v4104, %v4267
      %v4329 = vmul.f32 %v4105, %v4269
      %v4330 = vmul.f32 %v4106, %v4271
      %v4331 = vmul.f32 %v4107, %v4273
      %v4332 = vmul.f32 %v4108, %v4275
      %v4333 = vmul.f32 %v4109, %v4277
      %v4334 = vmul.f32 %v4110, %v4279
      %v4335 = vmul.f32 %v4111, %v4281
      %v4336 = vmul.f32 %v4112, %v4283
      %v4337 = vmul.f32 %v4113, %v4285
      %v4338 = vmul.f32 %v4114, %v4287
      %v4339 = vmul.f32 %v4115, %v4289
      %v4340 = vmul.f32 %v4116, %v4291
      %v4341 = vmul.f32 %v4117, %v4293
      %v4342 = vmul.f32 %v4118, %v4295
      %v4343 = vmul.f32 %v4119, %v4297
      %v4344 = vmul.f32 %v4120, %v4299
      %v4345 = vmul.f32 %v4121, %v4301
      %v4346 = vmul.f32 %v4122, %v4303
      %v4347 = vmul.f32 %v4123, %v4305
      %v4348 = vmul.f32 %v4124, %v4307
      %v4349 = vmul.f32 %v4125, %v4309
      %v4350 = vmul.f32 %v4126, %v4311
      %v4351 = vmul.f32 %v4127, %v4313
      %v4352 = vmul.f32 %v4128, %v4315
      %v4353 = vmul.f32 %v4129, %v4317
      %v4354 = vmul.f32 %v4130, %v4319
      %v4355 = vmul.f32 %v4131, %v4321
      %v4356 = vmul.f32 %v4132, %v4323
      %v4357 = vmul.f32 %v4133, %v4325
      %4358 = vst.msk [vmem:[%s224] sm:$0xff] %vm265, %v4326
      %4359 = vst.msk [vmem:[%s224 + $0x8] sm:$0xff] %vm265, %v4327
      %4360 = vst.msk [vmem:[%s224 + $0x10] sm:$0xff] %vm265, %v4328
      %4361 = vst.msk [vmem:[%s224 + $0x18] sm:$0xff] %vm265, %v4329
      %4362 = vst.msk [vmem:[%s224 + $0x20] sm:$0xff] %vm265, %v4330
      %4363 = vst.msk [vmem:[%s224 + $0x28] sm:$0xff] %vm265, %v4331
      %4364 = vst.msk [vmem:[%s224 + $0x30] sm:$0xff] %vm265, %v4332
      %4365 = vst.msk [vmem:[%s224 + $0x38] sm:$0xff] %vm265, %v4333
      %4366 = vst.msk [vmem:[%s224 + $0x40] sm:$0xff] %vm265, %v4334
      %4367 = vst.msk [vmem:[%s224 + $0x48] sm:$0xff] %vm265, %v4335
      %4368 = vst.msk [vmem:[%s224 + $0x50] sm:$0xff] %vm265, %v4336
      %4369 = vst.msk [vmem:[%s224 + $0x58] sm:$0xff] %vm265, %v4337
      %4370 = vst.msk [vmem:[%s224 + $0x60] sm:$0xff] %vm265, %v4338
      %4371 = vst.msk [vmem:[%s224 + $0x68] sm:$0xff] %vm265, %v4339
      %4372 = vst.msk [vmem:[%s224 + $0x70] sm:$0xff] %vm265, %v4340
      %4373 = vst.msk [vmem:[%s224 + $0x78] sm:$0xff] %vm265, %v4341
      %4374 = vst.msk [vmem:[%s224 + $0x80] sm:$0xff] %vm265, %v4342
      %4375 = vst.msk [vmem:[%s224 + $0x88] sm:$0xff] %vm265, %v4343
      %4376 = vst.msk [vmem:[%s224 + $0x90] sm:$0xff] %vm265, %v4344
      %4377 = vst.msk [vmem:[%s224 + $0x98] sm:$0xff] %vm265, %v4345
      %4378 = vst.msk [vmem:[%s224 + $0xa0] sm:$0xff] %vm265, %v4346
      %4379 = vst.msk [vmem:[%s224 + $0xa8] sm:$0xff] %vm265, %v4347
      %4380 = vst.msk [vmem:[%s224 + $0xb0] sm:$0xff] %vm265, %v4348
      %4381 = vst.msk [vmem:[%s224 + $0xb8] sm:$0xff] %vm265, %v4349
      %4382 = vst.msk [vmem:[%s224 + $0xc0] sm:$0xff] %vm265, %v4350
      %4383 = vst.msk [vmem:[%s224 + $0xc8] sm:$0xff] %vm265, %v4351
      %4384 = vst.msk [vmem:[%s224 + $0xd0] sm:$0xff] %vm265, %v4352
      %4385 = vst.msk [vmem:[%s224 + $0xd8] sm:$0xff] %vm265, %v4353
      %4386 = vst.msk [vmem:[%s224 + $0xe0] sm:$0xff] %vm265, %v4354
      %4387 = vst.msk [vmem:[%s224 + $0xe8] sm:$0xff] %vm265, %v4355
      %4388 = vst.msk [vmem:[%s224 + $0xf0] sm:$0xff] %vm265, %v4356
      %4389 = vst.msk [vmem:[%s224 + $0xf8] sm:$0xff] %vm265, %v4357
      %p4390 = scmp.lt.s32.totalorder %s16, 1
      %s4391 = scalar_select %p4390, %s16, 1
      %s4392 = smul.addr %s4391, 32
      %s4393 = smul.addr %s4392, 8
      %s4394 = scalar_lea.vmem %s5, %s4393
      // Predicated region
      $region41: #{tpu_custom_call.1} parent=39 // pred_check
        %p4395 = pneg %p144
      $region42: #{tpu_custom_call.1} parent=39 // pred_check_branch
        %4397 = sbr.rel (%p4395) target = $region44
      $region43: #{tpu_custom_call.1} parent=39 // pred_region
        _
      $region44: #{tpu_custom_call.1} parent=39 // pred_fallthru
        _
    $region40: #{tpu_custom_call.1} parent=5 // pred_fallthru
      _
    %p4398 = scmp.le.s32.totalorder 2, %s11
    // Predicated region
    $region45: #{tpu_custom_call.1} parent=5 // pred_check
      %p4399 = pneg %p4398
    $region46: #{tpu_custom_call.1} parent=5 // pred_check_branch
      %4401 = sbr.rel (%p4399) target = $region48
    $region47: #{tpu_custom_call.1} parent=5 // pred_region
      %s4402 = ssub.s32 %s11, 2
      // Predicated region
      $region49: #{tpu_custom_call.1} parent=47 // pred_check
        %p4403 = pneg %p150
      $region50: #{tpu_custom_call.1} parent=47 // pred_check_branch
        %4405 = sbr.rel (%p4403) target = $region52
      $region51: #{tpu_custom_call.1} parent=47 // pred_region
        %p4406 = scmp.lt.s32.totalorder %s17, 1
        %s4407 = scalar_select %p4406, %s17, 1
        %s4408 = smul.addr %s4407, 32
        %s4409 = smul.addr %s4408, 8
        %s4410 = scalar_lea.vmem %s5, %s4409
      $region52: #{tpu_custom_call.1} parent=47 // pred_fallthru
        _
    $region48: #{tpu_custom_call.1} parent=5 // pred_fallthru
      _
  $region6: #{tpu_custom_call.1} parent=0 // loop_footer
    %s15 = sadd.s32 1, %s11
  $region7: #{tpu_custom_call.1} parent=0 // loop_footer_branch
    %10 = sbr.rel target = $region3
  $region8: #{tpu_custom_call.1} parent=0 // loop_exit
    _

</llo_original>
